<compile_context>
chip_gen: v7x
topology: tpu7x:2x2x1
jax: 0.10.0
libtpu: 0.0.40
codegen_flags: <defaults>
</compile_context>

<pallas_src>
import functools
import math

import jax
import jax.numpy as jnp
from jax.experimental import pallas as pl
from jax.experimental.pallas import tpu as pltpu

N_EMBED = 32
D_STATE = 16
D_CONV = 4
EXPAND = 1
D_INNER = EXPAND * N_EMBED
DT_RANK = math.ceil(N_EMBED / 16)
LN_EPS = 1e-5
RMS_EPS = 1e-5

BP = 8  # batch rows per block == sublane tile height

# Row layout of the packed small-vector slab (all rows have width 32 = N_EMBED = D_INNER).
_ROW_LN1G = D_CONV + 0
_ROW_LN1B = D_CONV + 1
_ROW_RMSW = D_CONV + 2
_ROW_CONVB = D_CONV + 3
_ROW_DTB = D_CONV + 4
_ROW_DPAR = D_CONV + 5
_ROW_LN2G = D_CONV + 6
_ROW_LN2B = D_CONV + 7
_ROW_B2 = D_CONV + 8
_N_VEC_ROWS = D_CONV + 9


def _block_kernel(x_ref, vec_ref, a_ref, in_w_ref, ssm_w_ref, out_w_ref,
                  w1_ref, b1_ref, w2_ref, o_ref, *, bp, seqlen):
    """One grid step = one 8-row batch block over the full sequence.

    Rows of x_ref / o_ref within the block are TIME-MAJOR: row r = t*bp + b, so a
    causal time shift is a shift by `bp` (=8, tile-aligned) sublane rows.
    """
    ED = D_INNER
    N = D_STATE
    EN = ED * N
    R = bp * seqlen

    x = x_ref[...]                                       # (R, D)
    vec = vec_ref[...]                                   # (_N_VEC_ROWS, 32)

    def vrow(i):
        return vec[i:i + 1, :]                           # (1, 32) broadcast row

    # ---- LayerNorm 1 ----
    mu = jnp.mean(x, axis=-1, keepdims=True)
    var = jnp.mean((x - mu) ** 2, axis=-1, keepdims=True)
    ln1 = (x - mu) * jax.lax.rsqrt(var + LN_EPS) * vrow(_ROW_LN1G) + vrow(_ROW_LN1B)

    # ---- Mamba mixer input: RMSNorm + fused in_proj (x | z) ----
    rms = ln1 * jax.lax.rsqrt(jnp.mean(ln1 * ln1, axis=-1, keepdims=True) + RMS_EPS) * vrow(_ROW_RMSW)
    xz = jnp.dot(rms, in_w_ref[...], preferred_element_type=jnp.float32)     # (R, 2*ED)
    xm = xz[:, :ED]
    z = xz[:, ED:2 * ED]

    # ---- depthwise causal conv1d along time: zero-padded aligned shifted slices ----
    pad = jnp.zeros(((D_CONV - 1) * bp, ED), jnp.float32)
    xm_pad = jnp.concatenate([pad, xm], axis=0)          # (R + (D_CONV-1)*bp, ED)
    conv = jnp.zeros((R, ED), jnp.float32)
    for k in range(D_CONV):
        conv = conv + xm_pad[k * bp:k * bp + R, :] * vec[k:k + 1, :]
    conv = conv + vrow(_ROW_CONVB)
    xs = conv * jax.nn.sigmoid(conv)                     # SiLU, (R, ED)

    # ---- fused SSM projections: [B_rep | C_rep | dt], widths [EN, EN, ED] ----
    bcd = jnp.dot(xs, ssm_w_ref[...], preferred_element_type=jnp.float32)    # (R, 2*EN + ED)
    Bm_rep = bcd[:, 0:EN]                                # col j*ED+i -> B[:, j]
    Cm_rep = bcd[:, EN:2 * EN]                           # col j*ED+i -> C[:, j]
    delta = jax.nn.softplus(bcd[:, 2 * EN:2 * EN + ED] + vrow(_ROW_DTB))     # (R, ED), narrow

    # ---- lane broadcast via MXU: rep_mat[i, c] = (c mod ED == i), A folded in ----
    # (N-major flattening of state columns: col = j*ED + i; ED is a power of two)
    col = jax.lax.broadcasted_iota(jnp.int32, (ED, EN), 1)
    row = jax.lax.broadcasted_iota(jnp.int32, (ED, EN), 0)
    rep_mat = jnp.where((col & (ED - 1)) == row, 1.0, 0.0)                   # (ED, EN)
    deltaA = jnp.exp(jnp.dot(delta, rep_mat * a_ref[...],
                             preferred_element_type=jnp.float32))            # (R, EN)
    BX = jnp.dot(delta * xs, rep_mat,
                 preferred_element_type=jnp.float32) * Bm_rep                # (R, EN)

    # ---- associative (Hillis-Steele) inclusive scan over time, all in registers ----
    # h_t = a_t * h_{t-1} + b_t ; combine((a1,b1),(a2,b2)) = (a1*a2, a2*b1 + b2).
    a_s, b_s = deltaA, BX
    d = 1
    while d < seqlen:
        sh = d * bp                                       # multiple of 8 -> aligned shift
        a_prev = jnp.concatenate([jnp.ones((sh, EN), jnp.float32), a_s], axis=0)[:R, :]
        b_prev = jnp.concatenate([jnp.zeros((sh, EN), jnp.float32), b_s], axis=0)[:R, :]
        b_s = a_s * b_prev + b_s
        a_s = a_s * a_prev
        d *= 2
    # TODO(synk): for long seqlen, chunk this scan with lax.fori_loop carrying (a, b)
    # between chunks instead of the static log2(L) unroll.
    hs = b_s                                              # (R, EN): h at every (t, b) row

    # ---- reduce over the N state blocks with one MXU matmul (s_mat built in-kernel) ----
    rowm = jax.lax.broadcasted_iota(jnp.int32, (EN, ED), 0)
    colm = jax.lax.broadcasted_iota(jnp.int32, (EN, ED), 1)
    s_mat = jnp.where((rowm & (ED - 1)) == colm, 1.0, 0.0)                   # (EN, ED)
    y = jnp.dot(hs * Cm_rep, s_mat, preferred_element_type=jnp.float32)      # (R, ED)
    y = y + vrow(_ROW_DPAR) * xs

    zs = z * jax.nn.sigmoid(z)                            # SiLU gate
    mix = jnp.dot(y * zs, out_w_ref[...], preferred_element_type=jnp.float32)  # (R, D)
    x1 = x + mix + ln1                                    # outer residual + Mamba inner residual

    # ---- LayerNorm 2 + FFN ----
    mu2 = jnp.mean(x1, axis=-1, keepdims=True)
    var2 = jnp.mean((x1 - mu2) ** 2, axis=-1, keepdims=True)
    ln2 = (x1 - mu2) * jax.lax.rsqrt(var2 + LN_EPS) * vrow(_ROW_LN2G) + vrow(_ROW_LN2B)
    hid = jnp.maximum(jnp.dot(ln2, w1_ref[...], preferred_element_type=jnp.float32) + b1_ref[...], 0.0)
    ffn = jnp.dot(hid, w2_ref[...], preferred_element_type=jnp.float32) + vrow(_ROW_B2)
    # TODO(synk): nn.Dropout is identity in eval mode; stochastic dropout not applied.
    # TODO(synk): D = ED = 32 means output stores use 32/128 lanes; if scaled up and
    # store-bound, present a lane-dense packed output wrapper-side.

    o_ref[...] = x1 + ffn


@jax.jit
def block_forward(x, params):
    B, L, D = x.shape
    ED, N = D_INNER, D_STATE
    EN = ED * N
    assert D == N_EMBED and ED == D, "packed vec slab layout assumes expand=1 (ED == D)"

    # ---- wrapper-side parameter preprocessing (pure weight transforms) ----
    vec = jnp.concatenate([
        params["conv_w"],                                             # rows 0..D_CONV-1
        params["ln1_g"], params["ln1_b"], params["rms_w"],
        params["conv_b"], params["dt_b"], params["d_par"],
        params["ln2_g"], params["ln2_b"], params["b2"],
    ], axis=0).astype(jnp.float32)                                    # (_N_VEC_ROWS, 32)

    a_rep = (-jnp.exp(params["a_log"])).T.reshape(1, EN)              # N-major: col j*ED+i = A[i, j]
    in_w = jnp.concatenate([params["in_wx"], params["in_wz"]], axis=1)            # (D, 2*ED)
    dt_proj = params["xp_dt"] @ params["dt_w"]                        # (ED, ED), fused dt projection
    ssm_w = jnp.concatenate([
        jnp.repeat(params["xp_B"], ED, axis=1),                       # (ED, EN)
        jnp.repeat(params["xp_C"], ED, axis=1),                       # (ED, EN)
        dt_proj,                                                      # (ED, ED)
    ], axis=1)                                                        # (ED, 2*EN + ED)

    # ---- pad batch to a multiple of 8 sublanes; lay out (batch_block, t, batch_in_block) ----
    nb = pl.cdiv(B, BP)
    Bp = nb * BP
    xp = jnp.pad(x, ((0, Bp - B), (0, 0), (0, 0)))
    xr = xp.reshape(nb, BP, L, D).transpose(0, 2, 1, 3).reshape(nb * L * BP, D)
    r_blk = L * BP

    def full_spec(shape):
        return pl.BlockSpec(shape, lambda i: (0, 0))

    kernel = functools.partial(_block_kernel, bp=BP, seqlen=L)
    out = pl.pallas_call(
        kernel,
        out_shape=jax.ShapeDtypeStruct((nb * r_blk, D), jnp.float32),
        grid_spec=pltpu.PrefetchScalarGridSpec(
            num_scalar_prefetch=0,
            grid=(nb,),
            in_specs=[
                pl.BlockSpec((r_blk, D), lambda i: (i, 0)),
                full_spec(vec.shape), full_spec(a_rep.shape), full_spec(in_w.shape),
                full_spec(ssm_w.shape), full_spec(params["out_w"].shape),
                full_spec(params["w1"].shape), full_spec(params["b1"].shape),
                full_spec(params["w2"].shape),
            ],
            out_specs=pl.BlockSpec((r_blk, D), lambda i: (i, 0)),
        ),
        compiler_params=pltpu.CompilerParams(
            dimension_semantics=("parallel",),          # shards batch blocks across TCs (v7x)
            vmem_limit_bytes=32 * 1024 * 1024),
    )(xr, vec, a_rep, in_w, ssm_w,
      params["out_w"], params["w1"], params["b1"], params["w2"])

    out = out.reshape(nb, L, BP, D).transpose(0, 2, 1, 3).reshape(Bp, L, D)
    return out[:B]


def init_params(key):
    D, ED, N = N_EMBED, D_INNER, D_STATE
    ks = jax.random.split(key, 16)

    def lin(k, fan_in, shape):
        return jax.random.normal(k, shape, jnp.float32) / math.sqrt(fan_in)

    return dict(
        ln1_g=jnp.ones((1, D), jnp.float32), ln1_b=jnp.zeros((1, D), jnp.float32),
        ln2_g=jnp.ones((1, D), jnp.float32), ln2_b=jnp.zeros((1, D), jnp.float32),
        rms_w=jnp.ones((1, D), jnp.float32),
        in_wx=lin(ks[0], D, (D, ED)),
        in_wz=lin(ks[1], D, (D, ED)),
        conv_w=lin(ks[2], D_CONV, (D_CONV, ED)),
        conv_b=0.1 * jax.random.normal(ks[3], (1, ED), jnp.float32),
        xp_dt=lin(ks[4], ED, (ED, DT_RANK)),
        xp_B=lin(ks[5], ED, (ED, N)),
        xp_C=lin(ks[6], ED, (ED, N)),
        dt_w=lin(ks[7], DT_RANK, (DT_RANK, ED)),
        dt_b=0.1 * jax.random.normal(ks[8], (1, ED), jnp.float32),
        a_log=jnp.log(jnp.tile(jnp.arange(1, N + 1, dtype=jnp.float32)[None, :], (ED, 1))),
        d_par=jnp.ones((1, ED), jnp.float32),
        out_w=lin(ks[9], ED, (ED, D)),
        w1=lin(ks[10], D, (D, 4 * D)),
        b1=0.1 * jax.random.normal(ks[11], (1, 4 * D), jnp.float32),
        w2=lin(ks[12], 4 * D, (4 * D, D)),
        b2=0.1 * jax.random.normal(ks[13], (1, D), jnp.float32),
    )


def block_reference(x, p):
    """Pure-JAX reference matching PyTorch semantics (eval mode)."""
    B, L, D = x.shape
    ED, N = D_INNER, D_STATE

    def ln(v, g, b):
        mu = v.mean(-1, keepdims=True)
        var = ((v - mu) ** 2).mean(-1, keepdims=True)
        return (v - mu) / jnp.sqrt(var + LN_EPS) * g + b

    ln1 = ln(x, p["ln1_g"][0], p["ln1_b"][0])
    rms = ln1 * jax.lax.rsqrt((ln1 ** 2).mean(-1, keepdims=True) + RMS_EPS) * p["rms_w"][0]
    xm = rms @ p["in_wx"]
    z = rms @ p["in_wz"]
    xpad = jnp.pad(xm, ((0, 0), (D_CONV - 1, 0), (0, 0)))
    conv = sum(xpad[:, k:k + L, :] * p["conv_w"][k] for k in range(D_CONV)) + p["conv_b"][0]
    xs = jax.nn.silu(conv)
    delta = jax.nn.softplus(xs @ p["xp_dt"] @ p["dt_w"] + p["dt_b"][0])
    Bm = xs @ p["xp_B"]
    Cm = xs @ p["xp_C"]
    A = -jnp.exp(p["a_log"])
    deltaA = jnp.exp(delta[..., None] * A)                 # (B, L, ED, N)
    BX = (delta * xs)[..., None] * Bm[:, :, None, :]       # (B, L, ED, N)

    def step(h, t):
        h = deltaA[:, t] * h + BX[:, t]
        return h, h

    _, hs = jax.lax.scan(step, jnp.zeros((B, ED, N), jnp.float32), jnp.arange(L))
    hs = jnp.moveaxis(hs, 0, 1)                            # (B, L, ED, N)
    y = (hs * Cm[:, :, None, :]).sum(-1) + p["d_par"][0] * xs
    mix = (y * jax.nn.silu(z)) @ p["out_w"]
    x1 = x + mix + ln1
    ln2 = ln(x1, p["ln2_g"][0], p["ln2_b"][0])
    ffn = jnp.maximum(ln2 @ p["w1"] + p["b1"][0], 0.0) @ p["w2"] + p["b2"][0]
    return x1 + ffn


if __name__ == "__main__":
    key = jax.random.PRNGKey(0)
    kx, kp = jax.random.split(key)
    B, L = 2, 8
    x = jax.random.normal(kx, (B, L, N_EMBED), jnp.float32)
    params = init_params(kp)

    out = jax.block_until_ready(block_forward(x, params))
    ref = block_reference(x, params)

    assert out.shape == (B, L, N_EMBED)
    assert jnp.allclose(out, ref, rtol=2e-3, atol=2e-3), float(jnp.max(jnp.abs(out - ref)))
    print("KERNEL_OK")
</pallas_src>

<mosaic_0001>
module attributes {stable_mosaic.version = 11 : i64} {
  func.func @_block_kernel(%arg0: i32, %arg1: memref<64x32xf32, #tpu.memory_space<vmem>>, %arg2: memref<13x32xf32, #tpu.memory_space<vmem>>, %arg3: memref<1x512xf32, #tpu.memory_space<vmem>>, %arg4: memref<32x64xf32, #tpu.memory_space<vmem>>, %arg5: memref<32x1056xf32, #tpu.memory_space<vmem>>, %arg6: memref<32x32xf32, #tpu.memory_space<vmem>>, %arg7: memref<32x128xf32, #tpu.memory_space<vmem>>, %arg8: memref<1x128xf32, #tpu.memory_space<vmem>>, %arg9: memref<128x32xf32, #tpu.memory_space<vmem>>, %arg10: memref<64x32xf32, #tpu.memory_space<vmem>>) attributes {dimension_semantics = [#tpu.dimension_semantics<parallel>], iteration_bounds = array<i64: 1>, scalar_prefetch = 0 : i64, scratch_operands = 0 : i64, tpu.core_type = #tpu.core_type<tc>, window_params = [{transform_indices = @transform_0, window_bounds = array<i64: 64, 32>}, {pipeline_mode = #tpu.pipeline_mode<synchronous>, transform_indices = @transform_1, window_bounds = array<i64: 13, 32>}, {pipeline_mode = #tpu.pipeline_mode<synchronous>, transform_indices = @transform_2, window_bounds = array<i64: 1, 512>}, {pipeline_mode = #tpu.pipeline_mode<synchronous>, transform_indices = @transform_3, window_bounds = array<i64: 32, 64>}, {pipeline_mode = #tpu.pipeline_mode<synchronous>, transform_indices = @transform_4, window_bounds = array<i64: 32, 1056>}, {pipeline_mode = #tpu.pipeline_mode<synchronous>, transform_indices = @transform_5, window_bounds = array<i64: 32, 32>}, {pipeline_mode = #tpu.pipeline_mode<synchronous>, transform_indices = @transform_6, window_bounds = array<i64: 32, 128>}, {pipeline_mode = #tpu.pipeline_mode<synchronous>, transform_indices = @transform_7, window_bounds = array<i64: 1, 128>}, {pipeline_mode = #tpu.pipeline_mode<synchronous>, transform_indices = @transform_8, window_bounds = array<i64: 128, 32>}, {transform_indices = @transform_9, window_bounds = array<i64: 64, 32>}]} {
    %c0 = arith.constant 0 : index
    %c0_0 = arith.constant 0 : index
    %0 = vector.load %arg1[%c0, %c0_0] : memref<64x32xf32, #tpu.memory_space<vmem>>, vector<64x32xf32>
    %c0_1 = arith.constant 0 : index
    %c0_2 = arith.constant 0 : index
    %1 = vector.load %arg2[%c0_1, %c0_2] : memref<13x32xf32, #tpu.memory_space<vmem>>, vector<13x32xf32>
    %cst = arith.constant dense<0.000000e+00> : vector<64xf32>
    %2 = vector.multi_reduction <add>, %0, %cst [1] : vector<64x32xf32> to vector<64xf32>
    %3 = vector.shape_cast %2 : vector<64xf32> to vector<64x1xf32>
    %cst_3 = arith.constant 3.200000e+01 : f32
    %4 = vector.broadcast %cst_3 : f32 to vector<64x1xf32>
    %5 = arith.divf %3, %4 : vector<64x1xf32>
    %6 = vector.broadcast %5 : vector<64x1xf32> to vector<64x32xf32>
    %7 = arith.subf %0, %6 : vector<64x32xf32>
    %8 = arith.mulf %7, %7 : vector<64x32xf32>
    %cst_4 = arith.constant dense<0.000000e+00> : vector<64xf32>
    %9 = vector.multi_reduction <add>, %8, %cst_4 [1] : vector<64x32xf32> to vector<64xf32>
    %10 = vector.shape_cast %9 : vector<64xf32> to vector<64x1xf32>
    %cst_5 = arith.constant 3.200000e+01 : f32
    %11 = vector.broadcast %cst_5 : f32 to vector<64x1xf32>
    %12 = arith.divf %10, %11 : vector<64x1xf32>
    %13 = vector.broadcast %5 : vector<64x1xf32> to vector<64x32xf32>
    %14 = arith.subf %0, %13 : vector<64x32xf32>
    %cst_6 = arith.constant 9.99999974E-6 : f32
    %15 = vector.broadcast %cst_6 : f32 to vector<64x1xf32>
    %16 = arith.addf %12, %15 : vector<64x1xf32>
    %17 = math.rsqrt %16 : vector<64x1xf32>
    %18 = vector.broadcast %17 : vector<64x1xf32> to vector<64x32xf32>
    %19 = arith.mulf %14, %18 : vector<64x32xf32>
    %20 = vector.extract_strided_slice %1 {offsets = [4, 0], sizes = [1, 32], strides = [1, 1]} : vector<13x32xf32> to vector<1x32xf32>
    %21 = vector.broadcast %20 : vector<1x32xf32> to vector<64x32xf32>
    %22 = arith.mulf %19, %21 : vector<64x32xf32>
    %23 = vector.extract_strided_slice %1 {offsets = [5, 0], sizes = [1, 32], strides = [1, 1]} : vector<13x32xf32> to vector<1x32xf32>
    %24 = vector.broadcast %23 : vector<1x32xf32> to vector<64x32xf32>
    %25 = arith.addf %22, %24 : vector<64x32xf32>
    %26 = arith.mulf %25, %25 : vector<64x32xf32>
    %cst_7 = arith.constant dense<0.000000e+00> : vector<64xf32>
    %27 = vector.multi_reduction <add>, %26, %cst_7 [1] : vector<64x32xf32> to vector<64xf32>
    %28 = vector.shape_cast %27 : vector<64xf32> to vector<64x1xf32>
    %cst_8 = arith.constant 3.200000e+01 : f32
    %29 = vector.broadcast %cst_8 : f32 to vector<64x1xf32>
    %30 = arith.divf %28, %29 : vector<64x1xf32>
    %cst_9 = arith.constant 9.99999974E-6 : f32
    %31 = vector.broadcast %cst_9 : f32 to vector<64x1xf32>
    %32 = arith.addf %30, %31 : vector<64x1xf32>
    %33 = math.rsqrt %32 : vector<64x1xf32>
    %34 = vector.broadcast %33 : vector<64x1xf32> to vector<64x32xf32>
    %35 = arith.mulf %25, %34 : vector<64x32xf32>
    %36 = vector.extract_strided_slice %1 {offsets = [6, 0], sizes = [1, 32], strides = [1, 1]} : vector<13x32xf32> to vector<1x32xf32>
    %37 = vector.broadcast %36 : vector<1x32xf32> to vector<64x32xf32>
    %38 = arith.mulf %35, %37 : vector<64x32xf32>
    %c0_10 = arith.constant 0 : index
    %c0_11 = arith.constant 0 : index
    %39 = vector.load %arg4[%c0_10, %c0_11] : memref<32x64xf32, #tpu.memory_space<vmem>>, vector<32x64xf32>
    %cst_12 = arith.constant dense<0.000000e+00> : vector<64x64xf32>
    %40 = tpu.matmul %38, %39, %cst_12 {dimension_numbers = #tpu.dot_dimension_numbers<[1], [0], [0], [1], [0, 0, 1, 1], [], []>} : vector<64x32xf32>, vector<32x64xf32>, vector<64x64xf32> -> vector<64x64xf32>
    %41 = vector.extract_strided_slice %40 {offsets = [0, 0], sizes = [64, 32], strides = [1, 1]} : vector<64x64xf32> to vector<64x32xf32>
    %42 = vector.extract_strided_slice %40 {offsets = [0, 32], sizes = [64, 32], strides = [1, 1]} : vector<64x64xf32> to vector<64x32xf32>
    %cst_13 = arith.constant 0.000000e+00 : f32
    %43 = vector.broadcast %cst_13 : f32 to vector<24x32xf32>
    %44 = tpu.concatenate %43, %41 in 0 : vector<24x32xf32>, vector<64x32xf32> -> vector<88x32xf32>
    %cst_14 = arith.constant 0.000000e+00 : f32
    %45 = vector.broadcast %cst_14 : f32 to vector<64x32xf32>
    %46 = vector.extract_strided_slice %44 {offsets = [0, 0], sizes = [64, 32], strides = [1, 1]} : vector<88x32xf32> to vector<64x32xf32>
    %47 = vector.extract_strided_slice %1 {offsets = [0, 0], sizes = [1, 32], strides = [1, 1]} : vector<13x32xf32> to vector<1x32xf32>
    %48 = vector.broadcast %47 : vector<1x32xf32> to vector<64x32xf32>
    %49 = arith.mulf %46, %48 : vector<64x32xf32>
    %50 = arith.addf %45, %49 : vector<64x32xf32>
    %51 = vector.extract_strided_slice %44 {offsets = [8, 0], sizes = [64, 32], strides = [1, 1]} : vector<88x32xf32> to vector<64x32xf32>
    %52 = vector.extract_strided_slice %1 {offsets = [1, 0], sizes = [1, 32], strides = [1, 1]} : vector<13x32xf32> to vector<1x32xf32>
    %53 = vector.broadcast %52 : vector<1x32xf32> to vector<64x32xf32>
    %54 = arith.mulf %51, %53 : vector<64x32xf32>
    %55 = arith.addf %50, %54 : vector<64x32xf32>
    %56 = vector.extract_strided_slice %44 {offsets = [16, 0], sizes = [64, 32], strides = [1, 1]} : vector<88x32xf32> to vector<64x32xf32>
    %57 = vector.extract_strided_slice %1 {offsets = [2, 0], sizes = [1, 32], strides = [1, 1]} : vector<13x32xf32> to vector<1x32xf32>
    %58 = vector.broadcast %57 : vector<1x32xf32> to vector<64x32xf32>
    %59 = arith.mulf %56, %58 : vector<64x32xf32>
    %60 = arith.addf %55, %59 : vector<64x32xf32>
    %61 = vector.extract_strided_slice %44 {offsets = [24, 0], sizes = [64, 32], strides = [1, 1]} : vector<88x32xf32> to vector<64x32xf32>
    %62 = vector.extract_strided_slice %1 {offsets = [3, 0], sizes = [1, 32], strides = [1, 1]} : vector<13x32xf32> to vector<1x32xf32>
    %63 = vector.broadcast %62 : vector<1x32xf32> to vector<64x32xf32>
    %64 = arith.mulf %61, %63 : vector<64x32xf32>
    %65 = arith.addf %60, %64 : vector<64x32xf32>
    %66 = vector.extract_strided_slice %1 {offsets = [7, 0], sizes = [1, 32], strides = [1, 1]} : vector<13x32xf32> to vector<1x32xf32>
    %67 = vector.broadcast %66 : vector<1x32xf32> to vector<64x32xf32>
    %68 = arith.addf %65, %67 : vector<64x32xf32>
    %69 = arith.negf %68 : vector<64x32xf32>
    %70 = math.exp %69 : vector<64x32xf32>
    %cst_15 = arith.constant 1.000000e+00 : f32
    %71 = vector.broadcast %cst_15 : f32 to vector<64x32xf32>
    %72 = arith.addf %71, %70 : vector<64x32xf32>
    %73 = arith.divf %71, %72 : vector<64x32xf32>
    %74 = arith.mulf %68, %73 : vector<64x32xf32>
    %c0_16 = arith.constant 0 : index
    %c0_17 = arith.constant 0 : index
    %75 = vector.load %arg5[%c0_16, %c0_17] : memref<32x1056xf32, #tpu.memory_space<vmem>>, vector<32x1056xf32>
    %cst_18 = arith.constant dense<0.000000e+00> : vector<64x1056xf32>
    %76 = tpu.matmul %74, %75, %cst_18 {dimension_numbers = #tpu.dot_dimension_numbers<[1], [0], [0], [1], [0, 0, 1, 1], [], []>} : vector<64x32xf32>, vector<32x1056xf32>, vector<64x1056xf32> -> vector<64x1056xf32>
    %77 = vector.extract_strided_slice %76 {offsets = [0, 0], sizes = [64, 512], strides = [1, 1]} : vector<64x1056xf32> to vector<64x512xf32>
    %78 = vector.extract_strided_slice %76 {offsets = [0, 512], sizes = [64, 512], strides = [1, 1]} : vector<64x1056xf32> to vector<64x512xf32>
    %79 = vector.extract_strided_slice %76 {offsets = [0, 1024], sizes = [64, 32], strides = [1, 1]} : vector<64x1056xf32> to vector<64x32xf32>
    %80 = vector.extract_strided_slice %1 {offsets = [8, 0], sizes = [1, 32], strides = [1, 1]} : vector<13x32xf32> to vector<1x32xf32>
    %81 = vector.broadcast %80 : vector<1x32xf32> to vector<64x32xf32>
    %82 = arith.addf %79, %81 : vector<64x32xf32>
    %cst_19 = arith.constant 0.000000e+00 : f32
    %83 = vector.broadcast %cst_19 : f32 to vector<64x32xf32>
    %84 = arith.maximumf %82, %83 : vector<64x32xf32>
    %85 = vector.broadcast %cst_19 : f32 to vector<64x32xf32>
    %86 = arith.subf %82, %85 : vector<64x32xf32>
    %87 = arith.cmpf one, %86, %86 : vector<64x32xf32>
    %88 = vector.broadcast %cst_19 : f32 to vector<64x32xf32>
    %89 = arith.addf %82, %88 : vector<64x32xf32>
    %90 = math.absf %86 : vector<64x32xf32>
    %cst_20 = arith.constant 0.000000e+00 : f32
    %91 = vector.broadcast %cst_20 : f32 to vector<64x32xf32>
    %92 = arith.subf %91, %90 : vector<64x32xf32>
    %93 = math.exp %92 : vector<64x32xf32>
    %94 = math.log1p %93 : vector<64x32xf32>
    %95 = arith.addf %84, %94 : vector<64x32xf32>
    %96 = arith.select %87, %89, %95 : vector<64x32xi1>, vector<64x32xf32>
    %97 = tpu.iota {dimensions = array<i32: 1>} : vector<32x512xi32>
    %98 = tpu.iota {dimensions = array<i32: 0>} : vector<32x512xi32>
    %c31_i32 = arith.constant 31 : i32
    %99 = vector.broadcast %c31_i32 : i32 to vector<32x512xi32>
    %100 = arith.andi %97, %99 : vector<32x512xi32>
    %101 = arith.cmpi eq, %100, %98 : vector<32x512xi32>
    %cst_21 = arith.constant 1.000000e+00 : f32
    %cst_22 = arith.constant 0.000000e+00 : f32
    %102 = vector.broadcast %cst_21 : f32 to vector<32x512xf32>
    %103 = vector.broadcast %cst_22 : f32 to vector<32x512xf32>
    %104 = arith.select %101, %102, %103 : vector<32x512xi1>, vector<32x512xf32>
    %c0_23 = arith.constant 0 : index
    %c0_24 = arith.constant 0 : index
    %105 = vector.load %arg3[%c0_23, %c0_24] : memref<1x512xf32, #tpu.memory_space<vmem>>, vector<1x512xf32>
    %106 = vector.broadcast %105 : vector<1x512xf32> to vector<32x512xf32>
    %107 = arith.mulf %104, %106 : vector<32x512xf32>
    %cst_25 = arith.constant dense<0.000000e+00> : vector<64x512xf32>
    %108 = tpu.matmul %96, %107, %cst_25 {dimension_numbers = #tpu.dot_dimension_numbers<[1], [0], [0], [1], [0, 0, 1, 1], [], []>} : vector<64x32xf32>, vector<32x512xf32>, vector<64x512xf32> -> vector<64x512xf32>
    %109 = math.exp %108 : vector<64x512xf32>
    %110 = arith.mulf %96, %74 : vector<64x32xf32>
    %cst_26 = arith.constant dense<0.000000e+00> : vector<64x512xf32>
    %111 = tpu.matmul %110, %104, %cst_26 {dimension_numbers = #tpu.dot_dimension_numbers<[1], [0], [0], [1], [0, 0, 1, 1], [], []>} : vector<64x32xf32>, vector<32x512xf32>, vector<64x512xf32> -> vector<64x512xf32>
    %112 = arith.mulf %111, %77 : vector<64x512xf32>
    %cst_27 = arith.constant 1.000000e+00 : f32
    %113 = vector.broadcast %cst_27 : f32 to vector<8x512xf32>
    %114 = tpu.concatenate %113, %109 in 0 : vector<8x512xf32>, vector<64x512xf32> -> vector<72x512xf32>
    %115 = vector.extract_strided_slice %114 {offsets = [0, 0], sizes = [64, 512], strides = [1, 1]} : vector<72x512xf32> to vector<64x512xf32>
    %cst_28 = arith.constant 0.000000e+00 : f32
    %116 = vector.broadcast %cst_28 : f32 to vector<8x512xf32>
    %117 = tpu.concatenate %116, %112 in 0 : vector<8x512xf32>, vector<64x512xf32> -> vector<72x512xf32>
    %118 = vector.extract_strided_slice %117 {offsets = [0, 0], sizes = [64, 512], strides = [1, 1]} : vector<72x512xf32> to vector<64x512xf32>
    %119 = arith.mulf %109, %118 : vector<64x512xf32>
    %120 = arith.addf %119, %112 : vector<64x512xf32>
    %121 = arith.mulf %109, %115 : vector<64x512xf32>
    %cst_29 = arith.constant 1.000000e+00 : f32
    %122 = vector.broadcast %cst_29 : f32 to vector<16x512xf32>
    %123 = tpu.concatenate %122, %121 in 0 : vector<16x512xf32>, vector<64x512xf32> -> vector<80x512xf32>
    %124 = vector.extract_strided_slice %123 {offsets = [0, 0], sizes = [64, 512], strides = [1, 1]} : vector<80x512xf32> to vector<64x512xf32>
    %cst_30 = arith.constant 0.000000e+00 : f32
    %125 = vector.broadcast %cst_30 : f32 to vector<16x512xf32>
    %126 = tpu.concatenate %125, %120 in 0 : vector<16x512xf32>, vector<64x512xf32> -> vector<80x512xf32>
    %127 = vector.extract_strided_slice %126 {offsets = [0, 0], sizes = [64, 512], strides = [1, 1]} : vector<80x512xf32> to vector<64x512xf32>
    %128 = arith.mulf %121, %127 : vector<64x512xf32>
    %129 = arith.addf %128, %120 : vector<64x512xf32>
    %130 = arith.mulf %121, %124 : vector<64x512xf32>
    %cst_31 = arith.constant 0.000000e+00 : f32
    %131 = vector.broadcast %cst_31 : f32 to vector<32x512xf32>
    %132 = tpu.concatenate %131, %129 in 0 : vector<32x512xf32>, vector<64x512xf32> -> vector<96x512xf32>
    %133 = vector.extract_strided_slice %132 {offsets = [0, 0], sizes = [64, 512], strides = [1, 1]} : vector<96x512xf32> to vector<64x512xf32>
    %134 = arith.mulf %130, %133 : vector<64x512xf32>
    %135 = arith.addf %134, %129 : vector<64x512xf32>
    %136 = tpu.iota {dimensions = array<i32: 0>} : vector<512x32xi32>
    %137 = tpu.iota {dimensions = array<i32: 1>} : vector<512x32xi32>
    %c31_i32_32 = arith.constant 31 : i32
    %138 = vector.broadcast %c31_i32_32 : i32 to vector<512x32xi32>
    %139 = arith.andi %136, %138 : vector<512x32xi32>
    %140 = arith.cmpi eq, %139, %137 : vector<512x32xi32>
    %cst_33 = arith.constant 1.000000e+00 : f32
    %cst_34 = arith.constant 0.000000e+00 : f32
    %141 = vector.broadcast %cst_33 : f32 to vector<512x32xf32>
    %142 = vector.broadcast %cst_34 : f32 to vector<512x32xf32>
    %143 = arith.select %140, %141, %142 : vector<512x32xi1>, vector<512x32xf32>
    %144 = arith.mulf %135, %78 : vector<64x512xf32>
    %cst_35 = arith.constant dense<0.000000e+00> : vector<64x32xf32>
    %145 = tpu.matmul %144, %143, %cst_35 {dimension_numbers = #tpu.dot_dimension_numbers<[1], [0], [0], [1], [0, 0, 1, 1], [], []>} : vector<64x512xf32>, vector<512x32xf32>, vector<64x32xf32> -> vector<64x32xf32>
    %146 = vector.extract_strided_slice %1 {offsets = [9, 0], sizes = [1, 32], strides = [1, 1]} : vector<13x32xf32> to vector<1x32xf32>
    %147 = vector.broadcast %146 : vector<1x32xf32> to vector<64x32xf32>
    %148 = arith.mulf %147, %74 : vector<64x32xf32>
    %149 = arith.addf %145, %148 : vector<64x32xf32>
    %150 = arith.negf %42 : vector<64x32xf32>
    %151 = math.exp %150 : vector<64x32xf32>
    %cst_36 = arith.constant 1.000000e+00 : f32
    %152 = vector.broadcast %cst_36 : f32 to vector<64x32xf32>
    %153 = arith.addf %152, %151 : vector<64x32xf32>
    %154 = arith.divf %152, %153 : vector<64x32xf32>
    %155 = arith.mulf %42, %154 : vector<64x32xf32>
    %156 = arith.mulf %149, %155 : vector<64x32xf32>
    %c0_37 = arith.constant 0 : index
    %c0_38 = arith.constant 0 : index
    %157 = vector.load %arg6[%c0_37, %c0_38] : memref<32x32xf32, #tpu.memory_space<vmem>>, vector<32x32xf32>
    %cst_39 = arith.constant dense<0.000000e+00> : vector<64x32xf32>
    %158 = tpu.matmul %156, %157, %cst_39 {dimension_numbers = #tpu.dot_dimension_numbers<[1], [0], [0], [1], [0, 0, 1, 1], [], []>} : vector<64x32xf32>, vector<32x32xf32>, vector<64x32xf32> -> vector<64x32xf32>
    %159 = arith.addf %0, %158 : vector<64x32xf32>
    %160 = arith.addf %159, %25 : vector<64x32xf32>
    %cst_40 = arith.constant dense<0.000000e+00> : vector<64xf32>
    %161 = vector.multi_reduction <add>, %160, %cst_40 [1] : vector<64x32xf32> to vector<64xf32>
    %162 = vector.shape_cast %161 : vector<64xf32> to vector<64x1xf32>
    %cst_41 = arith.constant 3.200000e+01 : f32
    %163 = vector.broadcast %cst_41 : f32 to vector<64x1xf32>
    %164 = arith.divf %162, %163 : vector<64x1xf32>
    %165 = vector.broadcast %164 : vector<64x1xf32> to vector<64x32xf32>
    %166 = arith.subf %160, %165 : vector<64x32xf32>
    %167 = arith.mulf %166, %166 : vector<64x32xf32>
    %cst_42 = arith.constant dense<0.000000e+00> : vector<64xf32>
    %168 = vector.multi_reduction <add>, %167, %cst_42 [1] : vector<64x32xf32> to vector<64xf32>
    %169 = vector.shape_cast %168 : vector<64xf32> to vector<64x1xf32>
    %cst_43 = arith.constant 3.200000e+01 : f32
    %170 = vector.broadcast %cst_43 : f32 to vector<64x1xf32>
    %171 = arith.divf %169, %170 : vector<64x1xf32>
    %172 = vector.broadcast %164 : vector<64x1xf32> to vector<64x32xf32>
    %173 = arith.subf %160, %172 : vector<64x32xf32>
    %cst_44 = arith.constant 9.99999974E-6 : f32
    %174 = vector.broadcast %cst_44 : f32 to vector<64x1xf32>
    %175 = arith.addf %171, %174 : vector<64x1xf32>
    %176 = math.rsqrt %175 : vector<64x1xf32>
    %177 = vector.broadcast %176 : vector<64x1xf32> to vector<64x32xf32>
    %178 = arith.mulf %173, %177 : vector<64x32xf32>
    %179 = vector.extract_strided_slice %1 {offsets = [10, 0], sizes = [1, 32], strides = [1, 1]} : vector<13x32xf32> to vector<1x32xf32>
    %180 = vector.broadcast %179 : vector<1x32xf32> to vector<64x32xf32>
    %181 = arith.mulf %178, %180 : vector<64x32xf32>
    %182 = vector.extract_strided_slice %1 {offsets = [11, 0], sizes = [1, 32], strides = [1, 1]} : vector<13x32xf32> to vector<1x32xf32>
    %183 = vector.broadcast %182 : vector<1x32xf32> to vector<64x32xf32>
    %184 = arith.addf %181, %183 : vector<64x32xf32>
    %c0_45 = arith.constant 0 : index
    %c0_46 = arith.constant 0 : index
    %185 = vector.load %arg7[%c0_45, %c0_46] : memref<32x128xf32, #tpu.memory_space<vmem>>, vector<32x128xf32>
    %cst_47 = arith.constant dense<0.000000e+00> : vector<64x128xf32>
    %186 = tpu.matmul %184, %185, %cst_47 {dimension_numbers = #tpu.dot_dimension_numbers<[1], [0], [0], [1], [0, 0, 1, 1], [], []>} : vector<64x32xf32>, vector<32x128xf32>, vector<64x128xf32> -> vector<64x128xf32>
    %c0_48 = arith.constant 0 : index
    %c0_49 = arith.constant 0 : index
    %187 = vector.load %arg8[%c0_48, %c0_49] : memref<1x128xf32, #tpu.memory_space<vmem>>, vector<1x128xf32>
    %188 = vector.broadcast %187 : vector<1x128xf32> to vector<64x128xf32>
    %189 = arith.addf %186, %188 : vector<64x128xf32>
    %cst_50 = arith.constant 0.000000e+00 : f32
    %190 = vector.broadcast %cst_50 : f32 to vector<64x128xf32>
    %191 = arith.maximumf %189, %190 : vector<64x128xf32>
    %c0_51 = arith.constant 0 : index
    %c0_52 = arith.constant 0 : index
    %192 = vector.load %arg9[%c0_51, %c0_52] : memref<128x32xf32, #tpu.memory_space<vmem>>, vector<128x32xf32>
    %cst_53 = arith.constant dense<0.000000e+00> : vector<64x32xf32>
    %193 = tpu.matmul %191, %192, %cst_53 {dimension_numbers = #tpu.dot_dimension_numbers<[1], [0], [0], [1], [0, 0, 1, 1], [], []>} : vector<64x128xf32>, vector<128x32xf32>, vector<64x32xf32> -> vector<64x32xf32>
    %194 = vector.extract_strided_slice %1 {offsets = [12, 0], sizes = [1, 32], strides = [1, 1]} : vector<13x32xf32> to vector<1x32xf32>
    %195 = vector.broadcast %194 : vector<1x32xf32> to vector<64x32xf32>
    %196 = arith.addf %193, %195 : vector<64x32xf32>
    %197 = arith.addf %160, %196 : vector<64x32xf32>
    %c0_54 = arith.constant 0 : index
    %c0_55 = arith.constant 0 : index
    %198 = vector.load %arg10[%c0_54, %c0_55] : memref<64x32xf32, #tpu.memory_space<vmem>>, vector<64x32xf32>
    tpu.vector_store %arg10[%c0_54, %c0_55], %197 {strides = array<i32>} : memref<64x32xf32, #tpu.memory_space<vmem>>, vector<64x32xf32>,
    return
  }
  func.func @transform_0(%arg0: i32) -> (i32, i32) {
    %c0_i32 = arith.constant 0 : i32
    %c0_i32_0 = arith.constant 0 : i32
    return %arg0, %c0_i32 : i32, i32
  }
  func.func @transform_1(%arg0: i32) -> (i32, i32) {
    %c0_i32 = arith.constant 0 : i32
    %c0_i32_0 = arith.constant 0 : i32
    %c0_i32_1 = arith.constant 0 : i32
    return %c0_i32, %c0_i32_0 : i32, i32
  }
  func.func @transform_2(%arg0: i32) -> (i32, i32) {
    %c0_i32 = arith.constant 0 : i32
    %c0_i32_0 = arith.constant 0 : i32
    %c0_i32_1 = arith.constant 0 : i32
    return %c0_i32, %c0_i32_0 : i32, i32
  }
  func.func @transform_3(%arg0: i32) -> (i32, i32) {
    %c0_i32 = arith.constant 0 : i32
    %c0_i32_0 = arith.constant 0 : i32
    %c0_i32_1 = arith.constant 0 : i32
    return %c0_i32, %c0_i32_0 : i32, i32
  }
  func.func @transform_4(%arg0: i32) -> (i32, i32) {
    %c0_i32 = arith.constant 0 : i32
    %c0_i32_0 = arith.constant 0 : i32
    %c0_i32_1 = arith.constant 0 : i32
    return %c0_i32, %c0_i32_0 : i32, i32
  }
  func.func @transform_5(%arg0: i32) -> (i32, i32) {
    %c0_i32 = arith.constant 0 : i32
    %c0_i32_0 = arith.constant 0 : i32
    %c0_i32_1 = arith.constant 0 : i32
    return %c0_i32, %c0_i32_0 : i32, i32
  }
  func.func @transform_6(%arg0: i32) -> (i32, i32) {
    %c0_i32 = arith.constant 0 : i32
    %c0_i32_0 = arith.constant 0 : i32
    %c0_i32_1 = arith.constant 0 : i32
    return %c0_i32, %c0_i32_0 : i32, i32
  }
  func.func @transform_7(%arg0: i32) -> (i32, i32) {
    %c0_i32 = arith.constant 0 : i32
    %c0_i32_0 = arith.constant 0 : i32
    %c0_i32_1 = arith.constant 0 : i32
    return %c0_i32, %c0_i32_0 : i32, i32
  }
  func.func @transform_8(%arg0: i32) -> (i32, i32) {
    %c0_i32 = arith.constant 0 : i32
    %c0_i32_0 = arith.constant 0 : i32
    %c0_i32_1 = arith.constant 0 : i32
    return %c0_i32, %c0_i32_0 : i32, i32
  }
  func.func @transform_9(%arg0: i32) -> (i32, i32) {
    %c0_i32 = arith.constant 0 : i32
    %c0_i32_0 = arith.constant 0 : i32
    return %arg0, %c0_i32 : i32, i32
  }
}

</mosaic_0001>

<llo_original>
// kernel: block_forward.1
$region0: #{block_forward.1}
  #allocation0 [shape = 'u32[]', space=smem, size = 0x4, offset = 0x4, fixed_abs, tag = 'smem constant byte address 0x4 - core index']
  #allocation1 [shape = 'u32[144,128]{1,0:T(1,128)}', space=vmem, size = 0x12000, scoped, tag = 'internal scratch']
  %s0 = inlined_call_operand.vmem [shape: f32[64,32], index: 0, kind: input, shape index: {}]
  %s1 = inlined_call_operand.vmem [shape: f32[13,32], index: 1, kind: input, shape index: {}]
  %s2 = inlined_call_operand.vmem [shape: f32[1,512], index: 2, kind: input, shape index: {}]
  %s3 = inlined_call_operand.vmem [shape: f32[32,64], index: 3, kind: input, shape index: {}]
  %s4 = inlined_call_operand.vmem [shape: f32[32,1056], index: 4, kind: input, shape index: {}]
  %s5 = inlined_call_operand.vmem [shape: f32[32,32], index: 5, kind: input, shape index: {}]
  %s6 = inlined_call_operand.vmem [shape: f32[32,128], index: 6, kind: input, shape index: {}]
  %s7 = inlined_call_operand.vmem [shape: f32[1,128], index: 7, kind: input, shape index: {}]
  %s8 = inlined_call_operand.vmem [shape: f32[128,32], index: 8, kind: input, shape index: {}]
  %s9 = inlined_call_operand.vmem [shape: f32[64,32], index: 9, kind: output, shape index: {}]
  %s10 = sld [smem:[#allocation0]]
  $region46: #{block_forward.1} parent=0
    _
  %s12 = ssub.s32 1, %s10
  %s13 = scalar_select 0, %s12, %s10
  // Predicated region
  $region2: #{block_forward.1} parent=0 // pred_check
    _
  $region3: #{block_forward.1} parent=0 // pred_check_branch
    %15 = sbr.rel (0) target = $region5
  $region4: #{block_forward.1} parent=0 // pred_region
    _
  $region5: #{block_forward.1} parent=0 // pred_fallthru
    _
  // Predicated region
  $region6: #{block_forward.1} parent=0 // pred_check
    _
  $region7: #{block_forward.1} parent=0 // pred_check_branch
    %17 = sbr.rel (0) target = $region9
  $region8: #{block_forward.1} parent=0 // pred_region
    _
  $region9: #{block_forward.1} parent=0 // pred_fallthru
    _
  // Predicated region
  $region10: #{block_forward.1} parent=0 // pred_check
    _
  $region11: #{block_forward.1} parent=0 // pred_check_branch
    %19 = sbr.rel (0) target = $region13
  $region12: #{block_forward.1} parent=0 // pred_region
    _
  $region13: #{block_forward.1} parent=0 // pred_fallthru
    _
  // Predicated region
  $region14: #{block_forward.1} parent=0 // pred_check
    _
  $region15: #{block_forward.1} parent=0 // pred_check_branch
    %21 = sbr.rel (0) target = $region17
  $region16: #{block_forward.1} parent=0 // pred_region
    _
  $region17: #{block_forward.1} parent=0 // pred_fallthru
    _
  // Predicated region
  $region18: #{block_forward.1} parent=0 // pred_check
    _
  $region19: #{block_forward.1} parent=0 // pred_check_branch
    %23 = sbr.rel (0) target = $region21
  $region20: #{block_forward.1} parent=0 // pred_region
    _
  $region21: #{block_forward.1} parent=0 // pred_fallthru
    _
  // Predicated region
  $region22: #{block_forward.1} parent=0 // pred_check
    _
  $region23: #{block_forward.1} parent=0 // pred_check_branch
    %25 = sbr.rel (0) target = $region25
  $region24: #{block_forward.1} parent=0 // pred_region
    _
  $region25: #{block_forward.1} parent=0 // pred_fallthru
    _
  // Predicated region
  $region26: #{block_forward.1} parent=0 // pred_check
    _
  $region27: #{block_forward.1} parent=0 // pred_check_branch
    %27 = sbr.rel (0) target = $region29
  $region28: #{block_forward.1} parent=0 // pred_region
    _
  $region29: #{block_forward.1} parent=0 // pred_fallthru
    _
  // Predicated region
  $region30: #{block_forward.1} parent=0 // pred_check
    _
  $region31: #{block_forward.1} parent=0 // pred_check_branch
    %29 = sbr.rel (0) target = $region33
  $region32: #{block_forward.1} parent=0 // pred_region
    _
  $region33: #{block_forward.1} parent=0 // pred_fallthru
    _
  // Predicated region
  $region34: #{block_forward.1} parent=0 // pred_check
    _
  $region35: #{block_forward.1} parent=0 // pred_check_branch
    %31 = sbr.rel (0) target = $region37
  $region36: #{block_forward.1} parent=0 // pred_region
    _
  $region37: #{block_forward.1} parent=0 // pred_fallthru
    _
  %v32 = vld [vmem:[%s0] sm:$0xff]
  %v33 = vld [vmem:[%s0 + $0x8] sm:$0xff]
  %v34 = vld [vmem:[%s0 + $0x10] sm:$0xff]
  %v35 = vld [vmem:[%s0 + $0x18] sm:$0xff]
  %v36 = vld [vmem:[%s0 + $0x20] sm:$0xff]
  %v37 = vld [vmem:[%s0 + $0x28] sm:$0xff]
  %v38 = vld [vmem:[%s0 + $0x30] sm:$0xff]
  %v39 = vld [vmem:[%s0 + $0x38] sm:$0xff]
  %v40 = vld [vmem:[%s1] sm:$0xff]
  %v41 = vld [vmem:[%s1 + $0x8] sm:$0x1f]
  %vm42 = vcmask 261120
  %v43 = vsel %vm42, %v32, 0.0
  %44 = vadd.xlane.f32.xlu0 %v43
  %v45 = vpop.xlane.xlu0 %44
  %v46 = vsel %vm42, %v33, 0.0
  %47 = vadd.xlane.f32.xlu0 %v46
  %v48 = vpop.xlane.xlu0 %47
  %v49 = vsel %vm42, %v34, 0.0
  %50 = vadd.xlane.f32.xlu0 %v49
  %v51 = vpop.xlane.xlu0 %50
  %v52 = vsel %vm42, %v35, 0.0
  %53 = vadd.xlane.f32.xlu0 %v52
  %v54 = vpop.xlane.xlu0 %53
  %v55 = vsel %vm42, %v36, 0.0
  %56 = vadd.xlane.f32.xlu0 %v55
  %v57 = vpop.xlane.xlu0 %56
  %v58 = vsel %vm42, %v37, 0.0
  %59 = vadd.xlane.f32.xlu0 %v58
  %v60 = vpop.xlane.xlu0 %59
  %v61 = vsel %vm42, %v38, 0.0
  %62 = vadd.xlane.f32.xlu0 %v61
  %v63 = vpop.xlane.xlu0 %62
  %v64 = vsel %vm42, %v39, 0.0
  %65 = vadd.xlane.f32.xlu0 %v64
  %v66 = vpop.xlane.xlu0 %65
  %v67 = vrcp.pop 32.0
  %v68 = vmul.f32 %v45, %v67
  %v69 = vmul.f32 %v48, %v67
  %v70 = vmul.f32 %v51, %v67
  %v71 = vmul.f32 %v54, %v67
  %v72 = vmul.f32 %v57, %v67
  %v73 = vmul.f32 %v60, %v67
  %v74 = vmul.f32 %v63, %v67
  %v75 = vmul.f32 %v66, %v67
  %v76 = vsub.f32 %v32, %v68
  %v77 = vsub.f32 %v33, %v69
  %v78 = vsub.f32 %v34, %v70
  %v79 = vsub.f32 %v35, %v71
  %v80 = vsub.f32 %v36, %v72
  %v81 = vsub.f32 %v37, %v73
  %v82 = vsub.f32 %v38, %v74
  %v83 = vsub.f32 %v39, %v75
  %v84 = vmul.f32 %v76, %v76
  %v85 = vmul.f32 %v77, %v77
  %v86 = vmul.f32 %v78, %v78
  %v87 = vmul.f32 %v79, %v79
  %v88 = vmul.f32 %v80, %v80
  %v89 = vmul.f32 %v81, %v81
  %v90 = vmul.f32 %v82, %v82
  %v91 = vmul.f32 %v83, %v83
  %v92 = vsel %vm42, %v84, 0.0
  %93 = vadd.xlane.f32.xlu0 %v92
  %v94 = vpop.xlane.xlu0 %93
  %v95 = vsel %vm42, %v85, 0.0
  %96 = vadd.xlane.f32.xlu0 %v95
  %v97 = vpop.xlane.xlu0 %96
  %v98 = vsel %vm42, %v86, 0.0
  %99 = vadd.xlane.f32.xlu0 %v98
  %v100 = vpop.xlane.xlu0 %99
  %v101 = vsel %vm42, %v87, 0.0
  %102 = vadd.xlane.f32.xlu0 %v101
  %v103 = vpop.xlane.xlu0 %102
  %v104 = vsel %vm42, %v88, 0.0
  %105 = vadd.xlane.f32.xlu0 %v104
  %v106 = vpop.xlane.xlu0 %105
  %v107 = vsel %vm42, %v89, 0.0
  %108 = vadd.xlane.f32.xlu0 %v107
  %v109 = vpop.xlane.xlu0 %108
  %v110 = vsel %vm42, %v90, 0.0
  %111 = vadd.xlane.f32.xlu0 %v110
  %v112 = vpop.xlane.xlu0 %111
  %v113 = vsel %vm42, %v91, 0.0
  %114 = vadd.xlane.f32.xlu0 %v113
  %v115 = vpop.xlane.xlu0 %114
  %v116 = vmul.f32 %v94, %v67
  %v117 = vmul.f32 %v97, %v67
  %v118 = vmul.f32 %v100, %v67
  %v119 = vmul.f32 %v103, %v67
  %v120 = vmul.f32 %v106, %v67
  %v121 = vmul.f32 %v109, %v67
  %v122 = vmul.f32 %v112, %v67
  %v123 = vmul.f32 %v115, %v67
  %v124 = vadd.f32 %v116, 1e-05
  %v125 = vadd.f32 %v117, 1e-05
  %v126 = vadd.f32 %v118, 1e-05
  %v127 = vadd.f32 %v119, 1e-05
  %v128 = vadd.f32 %v120, 1e-05
  %v129 = vadd.f32 %v121, 1e-05
  %v130 = vadd.f32 %v122, 1e-05
  %v131 = vadd.f32 %v123, 1e-05
  %v132 = vrsqrt.pop %v124
  %v133 = vrsqrt.pop %v125
  %v134 = vrsqrt.pop %v126
  %v135 = vrsqrt.pop %v127
  %v136 = vrsqrt.pop %v128
  %v137 = vrsqrt.pop %v129
  %v138 = vrsqrt.pop %v130
  %v139 = vrsqrt.pop %v131
  %v140 = vmul.f32 %v76, %v132
  %v141 = vmul.f32 %v77, %v133
  %v142 = vmul.f32 %v78, %v134
  %v143 = vmul.f32 %v79, %v135
  %v144 = vmul.f32 %v80, %v136
  %v145 = vmul.f32 %v81, %v137
  %v146 = vmul.f32 %v82, %v138
  %v147 = vmul.f32 %v83, %v139
  %v148 = vlaneseq
  %v149 = vshrl.u32 %v148, 7
  %v150 = vsub.s32 4, %v149
  %v151 = vrot.slane %v40, %v150
  %v152 = vmul.f32 %v140, %v151
  %v153 = vmul.f32 %v141, %v151
  %v154 = vmul.f32 %v142, %v151
  %v155 = vmul.f32 %v143, %v151
  %v156 = vmul.f32 %v144, %v151
  %v157 = vmul.f32 %v145, %v151
  %v158 = vmul.f32 %v146, %v151
  %v159 = vmul.f32 %v147, %v151
  %v160 = vlaneseq
  %v161 = vshrl.u32 %v160, 7
  %v162 = vsub.s32 5, %v161
  %v163 = vrot.slane %v40, %v162
  %v164 = vadd.f32 %v152, %v163
  %v165 = vadd.f32 %v153, %v163
  %v166 = vadd.f32 %v154, %v163
  %v167 = vadd.f32 %v155, %v163
  %v168 = vadd.f32 %v156, %v163
  %v169 = vadd.f32 %v157, %v163
  %v170 = vadd.f32 %v158, %v163
  %v171 = vadd.f32 %v159, %v163
  %v172 = vmul.f32 %v164, %v164
  %v173 = vmul.f32 %v165, %v165
  %v174 = vmul.f32 %v166, %v166
  %v175 = vmul.f32 %v167, %v167
  %v176 = vmul.f32 %v168, %v168
  %v177 = vmul.f32 %v169, %v169
  %v178 = vmul.f32 %v170, %v170
  %v179 = vmul.f32 %v171, %v171
  %v180 = vsel %vm42, %v172, 0.0
  %181 = vadd.xlane.f32.xlu0 %v180
  %v182 = vpop.xlane.xlu0 %181
  %v183 = vsel %vm42, %v173, 0.0
  %184 = vadd.xlane.f32.xlu0 %v183
  %v185 = vpop.xlane.xlu0 %184
  %v186 = vsel %vm42, %v174, 0.0
  %187 = vadd.xlane.f32.xlu0 %v186
  %v188 = vpop.xlane.xlu0 %187
  %v189 = vsel %vm42, %v175, 0.0
  %190 = vadd.xlane.f32.xlu0 %v189
  %v191 = vpop.xlane.xlu0 %190
  %v192 = vsel %vm42, %v176, 0.0
  %193 = vadd.xlane.f32.xlu0 %v192
  %v194 = vpop.xlane.xlu0 %193
  %v195 = vsel %vm42, %v177, 0.0
  %196 = vadd.xlane.f32.xlu0 %v195
  %v197 = vpop.xlane.xlu0 %196
  %v198 = vsel %vm42, %v178, 0.0
  %199 = vadd.xlane.f32.xlu0 %v198
  %v200 = vpop.xlane.xlu0 %199
  %v201 = vsel %vm42, %v179, 0.0
  %202 = vadd.xlane.f32.xlu0 %v201
  %v203 = vpop.xlane.xlu0 %202
  %v204 = vmul.f32 %v182, %v67
  %v205 = vmul.f32 %v185, %v67
  %v206 = vmul.f32 %v188, %v67
  %v207 = vmul.f32 %v191, %v67
  %v208 = vmul.f32 %v194, %v67
  %v209 = vmul.f32 %v197, %v67
  %v210 = vmul.f32 %v200, %v67
  %v211 = vmul.f32 %v203, %v67
  %v212 = vadd.f32 %v204, 1e-05
  %v213 = vadd.f32 %v205, 1e-05
  %v214 = vadd.f32 %v206, 1e-05
  %v215 = vadd.f32 %v207, 1e-05
  %v216 = vadd.f32 %v208, 1e-05
  %v217 = vadd.f32 %v209, 1e-05
  %v218 = vadd.f32 %v210, 1e-05
  %v219 = vadd.f32 %v211, 1e-05
  %v220 = vrsqrt.pop %v212
  %v221 = vrsqrt.pop %v213
  %v222 = vrsqrt.pop %v214
  %v223 = vrsqrt.pop %v215
  %v224 = vrsqrt.pop %v216
  %v225 = vrsqrt.pop %v217
  %v226 = vrsqrt.pop %v218
  %v227 = vrsqrt.pop %v219
  %v228 = vmul.f32 %v164, %v220
  %v229 = vmul.f32 %v165, %v221
  %v230 = vmul.f32 %v166, %v222
  %v231 = vmul.f32 %v167, %v223
  %v232 = vmul.f32 %v168, %v224
  %v233 = vmul.f32 %v169, %v225
  %v234 = vmul.f32 %v170, %v226
  %v235 = vmul.f32 %v171, %v227
  %v236 = vlaneseq
  %v237 = vshrl.u32 %v236, 7
  %v238 = vsub.s32 6, %v237
  %v239 = vrot.slane %v40, %v238
  %v240 = vmul.f32 %v228, %v239
  %v241 = vmul.f32 %v229, %v239
  %v242 = vmul.f32 %v230, %v239
  %v243 = vmul.f32 %v231, %v239
  %v244 = vmul.f32 %v232, %v239
  %v245 = vmul.f32 %v233, %v239
  %v246 = vmul.f32 %v234, %v239
  %v247 = vmul.f32 %v235, %v239
  %v248 = vld [vmem:[%s3] sm:$0xff]
  %v249 = vld [vmem:[%s3 + $0x8] sm:$0xff]
  %v250 = vld [vmem:[%s3 + $0x10] sm:$0xff]
  %v251 = vld [vmem:[%s3 + $0x18] sm:$0xff]
  %v253 = vsel %vm42, %v240, 0
  %v256 = vsel %vm42, %v241, 0
  %v259 = vsel %vm42, %v242, 0
  %v262 = vsel %vm42, %v243, 0
  %v265 = vsel %vm42, %v244, 0
  %v268 = vsel %vm42, %v245, 0
  %v271 = vsel %vm42, %v246, 0
  %v274 = vsel %vm42, %v247, 0
  %276 = vmatprep.subr.mxu0 0.0
  %277 = vmatpush1.msra.mxu0 %v248
  %278 = vmatprep.subr.mxu0 0.0
  %279 = vmatpush1.msra.mxu0 %v249
  %280 = vmatprep.subr.mxu0 0.0
  %281 = vmatpush1.msra.mxu0 %v250
  %282 = vmatprep.subr.mxu0 0.0
  %283 = vmatpush1.msra.mxu0 %v251
  %284 = vmatprep.subr.mxu0 0.0
  %285 = vmatpush1.msra.mxu0 0.0
  %286 = vmatprep.subr.mxu0 0.0
  %287 = vmatpush1.msra.mxu0 0.0
  %288 = vmatprep.subr.mxu0 0.0
  %289 = vmatpush1.msra.mxu0 0.0
  %290 = vmatprep.subr.mxu0 0.0
  %291 = vmatpush1.msra.mxu0 0.0
  %292 = vmatprep.subr.mxu0 0.0
  %293 = vmatpush1.msra.mxu0 0.0
  %294 = vmatprep.subr.mxu0 0.0
  %295 = vmatpush1.msra.mxu0 0.0
  %296 = vmatprep.subr.mxu0 0.0
  %297 = vmatpush1.msra.mxu0 0.0
  %298 = vmatprep.subr.mxu0 0.0
  %299 = vmatpush1.msra.mxu0 0.0
  %300 = vmatprep.subr.mxu0 0.0
  %301 = vmatpush1.msra.mxu0 0.0
  %302 = vmatprep.subr.mxu0 0.0
  %303 = vmatpush1.msra.mxu0 0.0
  %304 = vmatprep.subr.mxu0 0.0
  %305 = vmatpush1.msra.mxu0 0.0
  %306 = vmatprep.subr.mxu0 0.0
  %307 = vmatpush1.msra.mxu0 0.0
  %308 = vmatprep.subr.mxu0 0.0
  %309 = vmatpush1.msra.mxu0 0.0
  %310 = vmatprep.subr.mxu0 0.0
  %311 = vmatpush1.msra.mxu0 0.0
  %312 = vmatprep.subr.mxu0 0.0
  %313 = vmatpush1.msra.mxu0 0.0
  %314 = vmatprep.subr.mxu0 0.0
  %315 = vmatpush1.msra.mxu0 0.0
  %316 = vmatprep.subr.mxu0 0.0
  %317 = vmatpush1.msra.mxu0 0.0
  %318 = vmatprep.subr.mxu0 0.0
  %319 = vmatpush1.msra.mxu0 0.0
  %320 = vmatprep.subr.mxu0 0.0
  %321 = vmatpush1.msra.mxu0 0.0
  %322 = vmatprep.subr.mxu0 0.0
  %323 = vmatpush1.msra.mxu0 0.0
  %324 = vmatprep.subr.mxu0 0.0
  %325 = vmatpush1.msra.mxu0 0.0
  %326 = vmatprep.subr.mxu0 0.0
  %327 = vmatpush1.msra.mxu0 0.0
  %328 = vmatprep.subr.mxu0 0.0
  %329 = vmatpush1.msra.mxu0 0.0
  %330 = vmatprep.subr.mxu0 0.0
  %331 = vmatpush1.msra.mxu0 0.0
  %332 = vmatprep.subr.mxu0 0.0
  %333 = vmatpush1.msra.mxu0 0.0
  %334 = vmatprep.subr.mxu0 0.0
  %335 = vmatpush1.msra.mxu0 0.0
  %336 = vmatprep.subr.mxu0 0.0
  %337 = vmatpush1.msra.mxu0 0.0
  %338 = vmatprep.subr.mxu0 0.0
  %339 = vmatpush1.msra.mxu0 0.0
  %340 = vmatprep.mubr.f32.mxu0 0.0
  %341 = vmatmul.mubr.f32.gmra.mrb[0].mxu0 %v253
  %v342 = vpop.f32.mrb[0].mxu0
  %v343 = vadd.f32 0.0, %v342
  %v344 = vpop.f32.mrb[0].mxu0
  %345 = vmatprep.mubr.f32.mxu0 0.0
  %346 = vmatmul.mubr.f32.gmra.mrb[0].mxu0 %v256
  %v347 = vpop.f32.mrb[0].mxu0
  %v348 = vadd.f32 0.0, %v347
  %v349 = vpop.f32.mrb[0].mxu0
  %350 = vmatprep.mubr.f32.mxu0 0.0
  %351 = vmatmul.mubr.f32.gmra.mrb[0].mxu0 %v259
  %v352 = vpop.f32.mrb[0].mxu0
  %v353 = vadd.f32 0.0, %v352
  %v354 = vpop.f32.mrb[0].mxu0
  %355 = vmatprep.mubr.f32.mxu0 0.0
  %356 = vmatmul.mubr.f32.gmra.mrb[0].mxu0 %v262
  %v357 = vpop.f32.mrb[0].mxu0
  %v358 = vadd.f32 0.0, %v357
  %v359 = vpop.f32.mrb[0].mxu0
  %360 = vmatprep.mubr.f32.mxu0 0.0
  %361 = vmatmul.mubr.f32.gmra.mrb[0].mxu0 %v265
  %v362 = vpop.f32.mrb[0].mxu0
  %v363 = vadd.f32 0.0, %v362
  %v364 = vpop.f32.mrb[0].mxu0
  %365 = vmatprep.mubr.f32.mxu0 0.0
  %366 = vmatmul.mubr.f32.gmra.mrb[0].mxu0 %v268
  %v367 = vpop.f32.mrb[0].mxu0
  %v368 = vadd.f32 0.0, %v367
  %v369 = vpop.f32.mrb[0].mxu0
  %370 = vmatprep.mubr.f32.mxu0 0.0
  %371 = vmatmul.mubr.f32.gmra.mrb[0].mxu0 %v271
  %v372 = vpop.f32.mrb[0].mxu0
  %v373 = vadd.f32 0.0, %v372
  %v374 = vpop.f32.mrb[0].mxu0
  %375 = vmatprep.mubr.f32.mxu0 0.0
  %376 = vmatmul.mubr.f32.gmra.mrb[0].mxu0 %v274
  %v377 = vpop.f32.mrb[0].mxu0
  %v378 = vadd.f32 0.0, %v377
  %v379 = vpop.f32.mrb[0].mxu0
  %380 = vdwg.mxu0
  %v381 = vlaneseq
  %v382 = vshrl.u32 %v381, 7
  %v383 = vsub.s32 0, %v382
  %v384 = vrot.slane %v40, %v383
  %v385 = vmul.f32 %v384, 0.0
  %v386 = vmul.f32 %v343, %v384
  %v387 = vmul.f32 %v348, %v384
  %v388 = vmul.f32 %v353, %v384
  %v389 = vmul.f32 %v358, %v384
  %v390 = vmul.f32 %v363, %v384
  %v391 = vadd.f32 %v385, 0.0
  %v392 = vadd.f32 %v386, 0.0
  %v393 = vadd.f32 %v387, 0.0
  %v394 = vadd.f32 %v388, 0.0
  %v395 = vadd.f32 %v389, 0.0
  %v396 = vadd.f32 %v390, 0.0
  %v397 = vlaneseq
  %v398 = vshrl.u32 %v397, 7
  %v399 = vsub.s32 1, %v398
  %v400 = vrot.slane %v40, %v399
  %v401 = vmul.f32 %v400, 0.0
  %v402 = vmul.f32 %v343, %v400
  %v403 = vmul.f32 %v348, %v400
  %v404 = vmul.f32 %v353, %v400
  %v405 = vmul.f32 %v358, %v400
  %v406 = vmul.f32 %v363, %v400
  %v407 = vmul.f32 %v368, %v400
  %v408 = vadd.f32 %v391, %v401
  %v409 = vadd.f32 %v391, %v402
  %v410 = vadd.f32 %v392, %v403
  %v411 = vadd.f32 %v393, %v404
  %v412 = vadd.f32 %v394, %v405
  %v413 = vadd.f32 %v395, %v406
  %v414 = vadd.f32 %v396, %v407
  %v415 = vlaneseq
  %v416 = vshrl.u32 %v415, 7
  %v417 = vsub.s32 2, %v416
  %v418 = vrot.slane %v40, %v417
  %v419 = vmul.f32 %v418, 0.0
  %v420 = vmul.f32 %v343, %v418
  %v421 = vmul.f32 %v348, %v418
  %v422 = vmul.f32 %v353, %v418
  %v423 = vmul.f32 %v358, %v418
  %v424 = vmul.f32 %v363, %v418
  %v425 = vmul.f32 %v368, %v418
  %v426 = vmul.f32 %v373, %v418
  %v427 = vadd.f32 %v408, %v419
  %v428 = vadd.f32 %v408, %v420
  %v429 = vadd.f32 %v409, %v421
  %v430 = vadd.f32 %v410, %v422
  %v431 = vadd.f32 %v411, %v423
  %v432 = vadd.f32 %v412, %v424
  %v433 = vadd.f32 %v413, %v425
  %v434 = vadd.f32 %v414, %v426
  %v435 = vlaneseq
  %v436 = vshrl.u32 %v435, 7
  %v437 = vsub.s32 3, %v436
  %v438 = vrot.slane %v40, %v437
  %v439 = vmul.f32 %v343, %v438
  %v440 = vmul.f32 %v348, %v438
  %v441 = vmul.f32 %v353, %v438
  %v442 = vmul.f32 %v358, %v438
  %v443 = vmul.f32 %v363, %v438
  %v444 = vmul.f32 %v368, %v438
  %v445 = vmul.f32 %v373, %v438
  %v446 = vmul.f32 %v378, %v438
  %v447 = vadd.f32 %v427, %v439
  %v448 = vadd.f32 %v428, %v440
  %v449 = vadd.f32 %v429, %v441
  %v450 = vadd.f32 %v430, %v442
  %v451 = vadd.f32 %v431, %v443
  %v452 = vadd.f32 %v432, %v444
  %v453 = vadd.f32 %v433, %v445
  %v454 = vadd.f32 %v434, %v446
  %v455 = vlaneseq
  %v456 = vshrl.u32 %v455, 7
  %v457 = vsub.s32 7, %v456
  %v458 = vrot.slane %v40, %v457
  %v459 = vadd.f32 %v447, %v458
  %v460 = vadd.f32 %v448, %v458
  %v461 = vadd.f32 %v449, %v458
  %v462 = vadd.f32 %v450, %v458
  %v463 = vadd.f32 %v451, %v458
  %v464 = vadd.f32 %v452, %v458
  %v465 = vadd.f32 %v453, %v458
  %v466 = vadd.f32 %v454, %v458
  %v467 = vxor.u32 %v459, 2147483648
  %v468 = vxor.u32 %v460, 2147483648
  %v469 = vxor.u32 %v461, 2147483648
  %v470 = vxor.u32 %v462, 2147483648
  %v471 = vxor.u32 %v463, 2147483648
  %v472 = vxor.u32 %v464, 2147483648
  %v473 = vxor.u32 %v465, 2147483648
  %v474 = vxor.u32 %v466, 2147483648
  %v475 = vmul.f32 %v467, 1.442695
  %v476 = vpow.pop %v475
  %v477 = vmul.f32 %v468, 1.442695
  %v478 = vpow.pop %v477
  %v479 = vmul.f32 %v469, 1.442695
  %v480 = vpow.pop %v479
  %v481 = vmul.f32 %v470, 1.442695
  %v482 = vpow.pop %v481
  %v483 = vmul.f32 %v471, 1.442695
  %v484 = vpow.pop %v483
  %v485 = vmul.f32 %v472, 1.442695
  %v486 = vpow.pop %v485
  %v487 = vmul.f32 %v473, 1.442695
  %v488 = vpow.pop %v487
  %v489 = vmul.f32 %v474, 1.442695
  %v490 = vpow.pop %v489
  %v491 = vadd.f32 %v476, 1.0
  %v492 = vadd.f32 %v478, 1.0
  %v493 = vadd.f32 %v480, 1.0
  %v494 = vadd.f32 %v482, 1.0
  %v495 = vadd.f32 %v484, 1.0
  %v496 = vadd.f32 %v486, 1.0
  %v497 = vadd.f32 %v488, 1.0
  %v498 = vadd.f32 %v490, 1.0
  %v499 = vrcp.pop %v491
  %v500 = vmul.f32 1.0, %v499
  %v501 = vrcp.pop %v492
  %v502 = vmul.f32 1.0, %v501
  %v503 = vrcp.pop %v493
  %v504 = vmul.f32 1.0, %v503
  %v505 = vrcp.pop %v494
  %v506 = vmul.f32 1.0, %v505
  %v507 = vrcp.pop %v495
  %v508 = vmul.f32 1.0, %v507
  %v509 = vrcp.pop %v496
  %v510 = vmul.f32 1.0, %v509
  %v511 = vrcp.pop %v497
  %v512 = vmul.f32 1.0, %v511
  %v513 = vrcp.pop %v498
  %v514 = vmul.f32 1.0, %v513
  %v515 = vmul.f32 %v459, %v500
  %v516 = vmul.f32 %v460, %v502
  %v517 = vmul.f32 %v461, %v504
  %v518 = vmul.f32 %v462, %v506
  %v519 = vmul.f32 %v463, %v508
  %v520 = vmul.f32 %v464, %v510
  %v521 = vmul.f32 %v465, %v512
  %v522 = vmul.f32 %v466, %v514
  %v523 = vld [vmem:[%s4] sm:$0xff]
  %v524 = vld [vmem:[%s4 + $0x8] sm:$0xff]
  %v525 = vld [vmem:[%s4 + $0x10] sm:$0xff]
  %v526 = vld [vmem:[%s4 + $0x18] sm:$0xff]
  %v527 = vld [vmem:[%s4 + $0x20] sm:$0xff]
  %v528 = vld [vmem:[%s4 + $0x28] sm:$0xff]
  %v529 = vld [vmem:[%s4 + $0x30] sm:$0xff]
  %v530 = vld [vmem:[%s4 + $0x38] sm:$0xff]
  %v531 = vld [vmem:[%s4 + $0x40] sm:$0xff]
  %v532 = vld [vmem:[%s4 + $0x48] sm:$0xff]
  %v533 = vld [vmem:[%s4 + $0x50] sm:$0xff]
  %v534 = vld [vmem:[%s4 + $0x58] sm:$0xff]
  %v535 = vld [vmem:[%s4 + $0x60] sm:$0xff]
  %v536 = vld [vmem:[%s4 + $0x68] sm:$0xff]
  %v537 = vld [vmem:[%s4 + $0x70] sm:$0xff]
  %v538 = vld [vmem:[%s4 + $0x78] sm:$0xff]
  %v539 = vld [vmem:[%s4 + $0x80] sm:$0xff]
  %v540 = vld [vmem:[%s4 + $0x88] sm:$0xff]
  %v541 = vld [vmem:[%s4 + $0x90] sm:$0xff]
  %v542 = vld [vmem:[%s4 + $0x98] sm:$0xff]
  %v543 = vld [vmem:[%s4 + $0xa0] sm:$0xff]
  %v544 = vld [vmem:[%s4 + $0xa8] sm:$0xff]
  %v545 = vld [vmem:[%s4 + $0xb0] sm:$0xff]
  %v546 = vld [vmem:[%s4 + $0xb8] sm:$0xff]
  %v547 = vld [vmem:[%s4 + $0xc0] sm:$0xff]
  %v548 = vld [vmem:[%s4 + $0xc8] sm:$0xff]
  %v549 = vld [vmem:[%s4 + $0xd0] sm:$0xff]
  %v550 = vld [vmem:[%s4 + $0xd8] sm:$0xff]
  %v551 = vld [vmem:[%s4 + $0xe0] sm:$0xff]
  %v552 = vld [vmem:[%s4 + $0xe8] sm:$0xff]
  %v553 = vld [vmem:[%s4 + $0xf0] sm:$0xff]
  %v554 = vld [vmem:[%s4 + $0xf8] sm:$0xff]
  %v555 = vld [vmem:[%s4 + $0x100] sm:$0xff]
  %v556 = vld [vmem:[%s4 + $0x108] sm:$0xff]
  %v557 = vld [vmem:[%s4 + $0x110] sm:$0xff]
  %v558 = vld [vmem:[%s4 + $0x118] sm:$0xff]
  %v560 = vsel %vm42, %v515, 0
  %v563 = vsel %vm42, %v516, 0
  %v566 = vsel %vm42, %v517, 0
  %v569 = vsel %vm42, %v518, 0
  %v572 = vsel %vm42, %v519, 0
  %v575 = vsel %vm42, %v520, 0
  %v578 = vsel %vm42, %v521, 0
  %v581 = vsel %vm42, %v522, 0
  %583 = vmatprep.subr.mxu0 %v524
  %584 = vmatpush1.msra.mxu0 %v523
  %585 = vmatprep.subr.mxu0 %v533
  %586 = vmatpush1.msra.mxu0 %v532
  %587 = vmatprep.subr.mxu0 %v542
  %588 = vmatpush1.msra.mxu0 %v541
  %589 = vmatprep.subr.mxu0 %v551
  %590 = vmatpush1.msra.mxu0 %v550
  %591 = vmatprep.subr.mxu0 0.0
  %592 = vmatpush1.msra.mxu0 0.0
  %593 = vmatprep.subr.mxu0 0.0
  %594 = vmatpush1.msra.mxu0 0.0
  %595 = vmatprep.subr.mxu0 0.0
  %596 = vmatpush1.msra.mxu0 0.0
  %597 = vmatprep.subr.mxu0 0.0
  %598 = vmatpush1.msra.mxu0 0.0
  %599 = vmatprep.subr.mxu0 0.0
  %600 = vmatpush1.msra.mxu0 0.0
  %601 = vmatprep.subr.mxu0 0.0
  %602 = vmatpush1.msra.mxu0 0.0
  %603 = vmatprep.subr.mxu0 0.0
  %604 = vmatpush1.msra.mxu0 0.0
  %605 = vmatprep.subr.mxu0 0.0
  %606 = vmatpush1.msra.mxu0 0.0
  %607 = vmatprep.subr.mxu0 0.0
  %608 = vmatpush1.msra.mxu0 0.0
  %609 = vmatprep.subr.mxu0 0.0
  %610 = vmatpush1.msra.mxu0 0.0
  %611 = vmatprep.subr.mxu0 0.0
  %612 = vmatpush1.msra.mxu0 0.0
  %613 = vmatprep.subr.mxu0 0.0
  %614 = vmatpush1.msra.mxu0 0.0
  %615 = vmatprep.subr.mxu0 0.0
  %616 = vmatpush1.msra.mxu0 0.0
  %617 = vmatprep.subr.mxu0 0.0
  %618 = vmatpush1.msra.mxu0 0.0
  %619 = vmatprep.subr.mxu0 0.0
  %620 = vmatpush1.msra.mxu0 0.0
  %621 = vmatprep.subr.mxu0 0.0
  %622 = vmatpush1.msra.mxu0 0.0
  %623 = vmatprep.subr.mxu0 0.0
  %624 = vmatpush1.msra.mxu0 0.0
  %625 = vmatprep.subr.mxu0 0.0
  %626 = vmatpush1.msra.mxu0 0.0
  %627 = vmatprep.subr.mxu0 0.0
  %628 = vmatpush1.msra.mxu0 0.0
  %629 = vmatprep.subr.mxu0 0.0
  %630 = vmatpush1.msra.mxu0 0.0
  %631 = vmatprep.subr.mxu0 0.0
  %632 = vmatpush1.msra.mxu0 0.0
  %633 = vmatprep.subr.mxu0 0.0
  %634 = vmatpush1.msra.mxu0 0.0
  %635 = vmatprep.subr.mxu0 0.0
  %636 = vmatpush1.msra.mxu0 0.0
  %637 = vmatprep.subr.mxu0 0.0
  %638 = vmatpush1.msra.mxu0 0.0
  %639 = vmatprep.subr.mxu0 0.0
  %640 = vmatpush1.msra.mxu0 0.0
  %641 = vmatprep.subr.mxu0 0.0
  %642 = vmatpush1.msra.mxu0 0.0
  %643 = vmatprep.subr.mxu0 0.0
  %644 = vmatpush1.msra.mxu0 0.0
  %645 = vmatprep.subr.mxu0 0.0
  %646 = vmatpush1.msra.mxu0 0.0
  %647 = vmatprep.mubr.f32.mxu0 0.0
  %648 = vmatmul.mubr.f32.gmra.mrb[0].mxu0 %v560
  %v649 = vpop.f32.mrb[0].mxu0
  %v650 = vadd.f32 0.0, %v649
  %v651 = vpop.f32.mrb[0].mxu0
  %v652 = vadd.f32 0.0, %v651
  %653 = vmatprep.mubr.f32.mxu0 0.0
  %654 = vmatmul.mubr.f32.gmra.mrb[0].mxu0 %v563
  %v655 = vpop.f32.mrb[0].mxu0
  %v656 = vadd.f32 0.0, %v655
  %v657 = vpop.f32.mrb[0].mxu0
  %v658 = vadd.f32 0.0, %v657
  %659 = vmatprep.mubr.f32.mxu0 0.0
  %660 = vmatmul.mubr.f32.gmra.mrb[0].mxu0 %v566
  %v661 = vpop.f32.mrb[0].mxu0
  %v662 = vadd.f32 0.0, %v661
  %v663 = vpop.f32.mrb[0].mxu0
  %v664 = vadd.f32 0.0, %v663
  %665 = vmatprep.mubr.f32.mxu0 0.0
  %666 = vmatmul.mubr.f32.gmra.mrb[0].mxu0 %v569
  %v667 = vpop.f32.mrb[0].mxu0
  %v668 = vadd.f32 0.0, %v667
  %v669 = vpop.f32.mrb[0].mxu0
  %v670 = vadd.f32 0.0, %v669
  %671 = vmatprep.mubr.f32.mxu0 0.0
  %672 = vmatmul.mubr.f32.gmra.mrb[0].mxu0 %v572
  %v673 = vpop.f32.mrb[0].mxu0
  %v674 = vadd.f32 0.0, %v673
  %v675 = vpop.f32.mrb[0].mxu0
  %v676 = vadd.f32 0.0, %v675
  %677 = vmatprep.mubr.f32.mxu0 0.0
  %678 = vmatmul.mubr.f32.gmra.mrb[0].mxu0 %v575
  %v679 = vpop.f32.mrb[0].mxu0
  %v680 = vadd.f32 0.0, %v679
  %v681 = vpop.f32.mrb[0].mxu0
  %v682 = vadd.f32 0.0, %v681
  %683 = vmatprep.mubr.f32.mxu0 0.0
  %684 = vmatmul.mubr.f32.gmra.mrb[0].mxu0 %v578
  %v685 = vpop.f32.mrb[0].mxu0
  %v686 = vadd.f32 0.0, %v685
  %v687 = vpop.f32.mrb[0].mxu0
  %v688 = vadd.f32 0.0, %v687
  %689 = vmatprep.mubr.f32.mxu0 0.0
  %690 = vmatmul.mubr.f32.gmra.mrb[0].mxu0 %v581
  %v691 = vpop.f32.mrb[0].mxu0
  %v692 = vadd.f32 0.0, %v691
  %v693 = vpop.f32.mrb[0].mxu0
  %v694 = vadd.f32 0.0, %v693
  %695 = vdwg.mxu0
  %696 = vmatprep.subr.mxu0 %v526
  %697 = vmatpush1.msra.mxu0 %v525
  %698 = vmatprep.subr.mxu0 %v535
  %699 = vmatpush1.msra.mxu0 %v534
  %700 = vmatprep.subr.mxu0 %v544
  %701 = vmatpush1.msra.mxu0 %v543
  %702 = vmatprep.subr.mxu0 %v553
  %703 = vmatpush1.msra.mxu0 %v552
  %704 = vmatprep.subr.mxu0 0.0
  %705 = vmatpush1.msra.mxu0 0.0
  %706 = vmatprep.subr.mxu0 0.0
  %707 = vmatpush1.msra.mxu0 0.0
  %708 = vmatprep.subr.mxu0 0.0
  %709 = vmatpush1.msra.mxu0 0.0
  %710 = vmatprep.subr.mxu0 0.0
  %711 = vmatpush1.msra.mxu0 0.0
  %712 = vmatprep.subr.mxu0 0.0
  %713 = vmatpush1.msra.mxu0 0.0
  %714 = vmatprep.subr.mxu0 0.0
  %715 = vmatpush1.msra.mxu0 0.0
  %716 = vmatprep.subr.mxu0 0.0
  %717 = vmatpush1.msra.mxu0 0.0
  %718 = vmatprep.subr.mxu0 0.0
  %719 = vmatpush1.msra.mxu0 0.0
  %720 = vmatprep.subr.mxu0 0.0
  %721 = vmatpush1.msra.mxu0 0.0
  %722 = vmatprep.subr.mxu0 0.0
  %723 = vmatpush1.msra.mxu0 0.0
  %724 = vmatprep.subr.mxu0 0.0
  %725 = vmatpush1.msra.mxu0 0.0
  %726 = vmatprep.subr.mxu0 0.0
  %727 = vmatpush1.msra.mxu0 0.0
  %728 = vmatprep.subr.mxu0 0.0
  %729 = vmatpush1.msra.mxu0 0.0
  %730 = vmatprep.subr.mxu0 0.0
  %731 = vmatpush1.msra.mxu0 0.0
  %732 = vmatprep.subr.mxu0 0.0
  %733 = vmatpush1.msra.mxu0 0.0
  %734 = vmatprep.subr.mxu0 0.0
  %735 = vmatpush1.msra.mxu0 0.0
  %736 = vmatprep.subr.mxu0 0.0
  %737 = vmatpush1.msra.mxu0 0.0
  %738 = vmatprep.subr.mxu0 0.0
  %739 = vmatpush1.msra.mxu0 0.0
  %740 = vmatprep.subr.mxu0 0.0
  %741 = vmatpush1.msra.mxu0 0.0
  %742 = vmatprep.subr.mxu0 0.0
  %743 = vmatpush1.msra.mxu0 0.0
  %744 = vmatprep.subr.mxu0 0.0
  %745 = vmatpush1.msra.mxu0 0.0
  %746 = vmatprep.subr.mxu0 0.0
  %747 = vmatpush1.msra.mxu0 0.0
  %748 = vmatprep.subr.mxu0 0.0
  %749 = vmatpush1.msra.mxu0 0.0
  %750 = vmatprep.subr.mxu0 0.0
  %751 = vmatpush1.msra.mxu0 0.0
  %752 = vmatprep.subr.mxu0 0.0
  %753 = vmatpush1.msra.mxu0 0.0
  %754 = vmatprep.subr.mxu0 0.0
  %755 = vmatpush1.msra.mxu0 0.0
  %756 = vmatprep.subr.mxu0 0.0
  %757 = vmatpush1.msra.mxu0 0.0
  %758 = vmatprep.subr.mxu0 0.0
  %759 = vmatpush1.msra.mxu0 0.0
  %760 = vmatprep.mubr.f32.mxu0 0.0
  %761 = vmatmul.mubr.f32.gmra.mrb[0].mxu0 %v560
  %v762 = vpop.f32.mrb[0].mxu0
  %v763 = vadd.f32 0.0, %v762
  %v764 = vpop.f32.mrb[0].mxu0
  %v765 = vadd.f32 0.0, %v764
  %766 = vmatprep.mubr.f32.mxu0 0.0
  %767 = vmatmul.mubr.f32.gmra.mrb[0].mxu0 %v563
  %v768 = vpop.f32.mrb[0].mxu0
  %v769 = vadd.f32 0.0, %v768
  %v770 = vpop.f32.mrb[0].mxu0
  %v771 = vadd.f32 0.0, %v770
  %772 = vmatprep.mubr.f32.mxu0 0.0
  %773 = vmatmul.mubr.f32.gmra.mrb[0].mxu0 %v566
  %v774 = vpop.f32.mrb[0].mxu0
  %v775 = vadd.f32 0.0, %v774
  %v776 = vpop.f32.mrb[0].mxu0
  %v777 = vadd.f32 0.0, %v776
  %778 = vmatprep.mubr.f32.mxu0 0.0
  %779 = vmatmul.mubr.f32.gmra.mrb[0].mxu0 %v569
  %v780 = vpop.f32.mrb[0].mxu0
  %v781 = vadd.f32 0.0, %v780
  %v782 = vpop.f32.mrb[0].mxu0
  %v783 = vadd.f32 0.0, %v782
  %784 = vmatprep.mubr.f32.mxu0 0.0
  %785 = vmatmul.mubr.f32.gmra.mrb[0].mxu0 %v572
  %v786 = vpop.f32.mrb[0].mxu0
  %v787 = vadd.f32 0.0, %v786
  %v788 = vpop.f32.mrb[0].mxu0
  %v789 = vadd.f32 0.0, %v788
  %790 = vmatprep.mubr.f32.mxu0 0.0
  %791 = vmatmul.mubr.f32.gmra.mrb[0].mxu0 %v575
  %v792 = vpop.f32.mrb[0].mxu0
  %v793 = vadd.f32 0.0, %v792
  %v794 = vpop.f32.mrb[0].mxu0
  %v795 = vadd.f32 0.0, %v794
  %796 = vmatprep.mubr.f32.mxu0 0.0
  %797 = vmatmul.mubr.f32.gmra.mrb[0].mxu0 %v578
  %v798 = vpop.f32.mrb[0].mxu0
  %v799 = vadd.f32 0.0, %v798
  %v800 = vpop.f32.mrb[0].mxu0
  %v801 = vadd.f32 0.0, %v800
  %802 = vmatprep.mubr.f32.mxu0 0.0
  %803 = vmatmul.mubr.f32.gmra.mrb[0].mxu0 %v581
  %v804 = vpop.f32.mrb[0].mxu0
  %v805 = vadd.f32 0.0, %v804
  %v806 = vpop.f32.mrb[0].mxu0
  %v807 = vadd.f32 0.0, %v806
  %808 = vdwg.mxu0
  %809 = vmatprep.subr.mxu0 %v528
  %810 = vmatpush1.msra.mxu0 %v527
  %811 = vmatprep.subr.mxu0 %v537
  %812 = vmatpush1.msra.mxu0 %v536
  %813 = vmatprep.subr.mxu0 %v546
  %814 = vmatpush1.msra.mxu0 %v545
  %815 = vmatprep.subr.mxu0 %v555
  %816 = vmatpush1.msra.mxu0 %v554
  %817 = vmatprep.subr.mxu0 0.0
  %818 = vmatpush1.msra.mxu0 0.0
  %819 = vmatprep.subr.mxu0 0.0
  %820 = vmatpush1.msra.mxu0 0.0
  %821 = vmatprep.subr.mxu0 0.0
  %822 = vmatpush1.msra.mxu0 0.0
  %823 = vmatprep.subr.mxu0 0.0
  %824 = vmatpush1.msra.mxu0 0.0
  %825 = vmatprep.subr.mxu0 0.0
  %826 = vmatpush1.msra.mxu0 0.0
  %827 = vmatprep.subr.mxu0 0.0
  %828 = vmatpush1.msra.mxu0 0.0
  %829 = vmatprep.subr.mxu0 0.0
  %830 = vmatpush1.msra.mxu0 0.0
  %831 = vmatprep.subr.mxu0 0.0
  %832 = vmatpush1.msra.mxu0 0.0
  %833 = vmatprep.subr.mxu0 0.0
  %834 = vmatpush1.msra.mxu0 0.0
  %835 = vmatprep.subr.mxu0 0.0
  %836 = vmatpush1.msra.mxu0 0.0
  %837 = vmatprep.subr.mxu0 0.0
  %838 = vmatpush1.msra.mxu0 0.0
  %839 = vmatprep.subr.mxu0 0.0
  %840 = vmatpush1.msra.mxu0 0.0
  %841 = vmatprep.subr.mxu0 0.0
  %842 = vmatpush1.msra.mxu0 0.0
  %843 = vmatprep.subr.mxu0 0.0
  %844 = vmatpush1.msra.mxu0 0.0
  %845 = vmatprep.subr.mxu0 0.0
  %846 = vmatpush1.msra.mxu0 0.0
  %847 = vmatprep.subr.mxu0 0.0
  %848 = vmatpush1.msra.mxu0 0.0
  %849 = vmatprep.subr.mxu0 0.0
  %850 = vmatpush1.msra.mxu0 0.0
  %851 = vmatprep.subr.mxu0 0.0
  %852 = vmatpush1.msra.mxu0 0.0
  %853 = vmatprep.subr.mxu0 0.0
  %854 = vmatpush1.msra.mxu0 0.0
  %855 = vmatprep.subr.mxu0 0.0
  %856 = vmatpush1.msra.mxu0 0.0
  %857 = vmatprep.subr.mxu0 0.0
  %858 = vmatpush1.msra.mxu0 0.0
  %859 = vmatprep.subr.mxu0 0.0
  %860 = vmatpush1.msra.mxu0 0.0
  %861 = vmatprep.subr.mxu0 0.0
  %862 = vmatpush1.msra.mxu0 0.0
  %863 = vmatprep.subr.mxu0 0.0
  %864 = vmatpush1.msra.mxu0 0.0
  %865 = vmatprep.subr.mxu0 0.0
  %866 = vmatpush1.msra.mxu0 0.0
  %867 = vmatprep.subr.mxu0 0.0
  %868 = vmatpush1.msra.mxu0 0.0
  %869 = vmatprep.subr.mxu0 0.0
  %870 = vmatpush1.msra.mxu0 0.0
  %871 = vmatprep.subr.mxu0 0.0
  %872 = vmatpush1.msra.mxu0 0.0
  %873 = vmatprep.mubr.f32.mxu0 0.0
  %874 = vmatmul.mubr.f32.gmra.mrb[0].mxu0 %v560
  %v875 = vpop.f32.mrb[0].mxu0
  %v876 = vadd.f32 0.0, %v875
  %v877 = vpop.f32.mrb[0].mxu0
  %v878 = vadd.f32 0.0, %v877
  %879 = vmatprep.mubr.f32.mxu0 0.0
  %880 = vmatmul.mubr.f32.gmra.mrb[0].mxu0 %v563
  %v881 = vpop.f32.mrb[0].mxu0
  %v882 = vadd.f32 0.0, %v881
  %v883 = vpop.f32.mrb[0].mxu0
  %v884 = vadd.f32 0.0, %v883
  %885 = vmatprep.mubr.f32.mxu0 0.0
  %886 = vmatmul.mubr.f32.gmra.mrb[0].mxu0 %v566
  %v887 = vpop.f32.mrb[0].mxu0
  %v888 = vadd.f32 0.0, %v887
  %v889 = vpop.f32.mrb[0].mxu0
  %v890 = vadd.f32 0.0, %v889
  %891 = vmatprep.mubr.f32.mxu0 0.0
  %892 = vmatmul.mubr.f32.gmra.mrb[0].mxu0 %v569
  %v893 = vpop.f32.mrb[0].mxu0
  %v894 = vadd.f32 0.0, %v893
  %v895 = vpop.f32.mrb[0].mxu0
  %v896 = vadd.f32 0.0, %v895
  %897 = vmatprep.mubr.f32.mxu0 0.0
  %898 = vmatmul.mubr.f32.gmra.mrb[0].mxu0 %v572
  %v899 = vpop.f32.mrb[0].mxu0
  %v900 = vadd.f32 0.0, %v899
  %v901 = vpop.f32.mrb[0].mxu0
  %v902 = vadd.f32 0.0, %v901
  %903 = vmatprep.mubr.f32.mxu0 0.0
  %904 = vmatmul.mubr.f32.gmra.mrb[0].mxu0 %v575
  %v905 = vpop.f32.mrb[0].mxu0
  %v906 = vadd.f32 0.0, %v905
  %v907 = vpop.f32.mrb[0].mxu0
  %v908 = vadd.f32 0.0, %v907
  %909 = vmatprep.mubr.f32.mxu0 0.0
  %910 = vmatmul.mubr.f32.gmra.mrb[0].mxu0 %v578
  %v911 = vpop.f32.mrb[0].mxu0
  %v912 = vadd.f32 0.0, %v911
  %v913 = vpop.f32.mrb[0].mxu0
  %v914 = vadd.f32 0.0, %v913
  %915 = vmatprep.mubr.f32.mxu0 0.0
  %916 = vmatmul.mubr.f32.gmra.mrb[0].mxu0 %v581
  %v917 = vpop.f32.mrb[0].mxu0
  %v918 = vadd.f32 0.0, %v917
  %v919 = vpop.f32.mrb[0].mxu0
  %v920 = vadd.f32 0.0, %v919
  %921 = vdwg.mxu0
  %922 = vmatprep.subr.mxu0 %v530
  %923 = vmatpush1.msra.mxu0 %v529
  %924 = vmatprep.subr.mxu0 %v539
  %925 = vmatpush1.msra.mxu0 %v538
  %926 = vmatprep.subr.mxu0 %v548
  %927 = vmatpush1.msra.mxu0 %v547
  %928 = vmatprep.subr.mxu0 %v557
  %929 = vmatpush1.msra.mxu0 %v556
  %930 = vmatprep.subr.mxu0 0.0
  %931 = vmatpush1.msra.mxu0 0.0
  %932 = vmatprep.subr.mxu0 0.0
  %933 = vmatpush1.msra.mxu0 0.0
  %934 = vmatprep.subr.mxu0 0.0
  %935 = vmatpush1.msra.mxu0 0.0
  %936 = vmatprep.subr.mxu0 0.0
  %937 = vmatpush1.msra.mxu0 0.0
  %938 = vmatprep.subr.mxu0 0.0
  %939 = vmatpush1.msra.mxu0 0.0
  %940 = vmatprep.subr.mxu0 0.0
  %941 = vmatpush1.msra.mxu0 0.0
  %942 = vmatprep.subr.mxu0 0.0
  %943 = vmatpush1.msra.mxu0 0.0
  %944 = vmatprep.subr.mxu0 0.0
  %945 = vmatpush1.msra.mxu0 0.0
  %946 = vmatprep.subr.mxu0 0.0
  %947 = vmatpush1.msra.mxu0 0.0
  %948 = vmatprep.subr.mxu0 0.0
  %949 = vmatpush1.msra.mxu0 0.0
  %950 = vmatprep.subr.mxu0 0.0
  %951 = vmatpush1.msra.mxu0 0.0
  %952 = vmatprep.subr.mxu0 0.0
  %953 = vmatpush1.msra.mxu0 0.0
  %954 = vmatprep.subr.mxu0 0.0
  %955 = vmatpush1.msra.mxu0 0.0
  %956 = vmatprep.subr.mxu0 0.0
  %957 = vmatpush1.msra.mxu0 0.0
  %958 = vmatprep.subr.mxu0 0.0
  %959 = vmatpush1.msra.mxu0 0.0
  %960 = vmatprep.subr.mxu0 0.0
  %961 = vmatpush1.msra.mxu0 0.0
  %962 = vmatprep.subr.mxu0 0.0
  %963 = vmatpush1.msra.mxu0 0.0
  %964 = vmatprep.subr.mxu0 0.0
  %965 = vmatpush1.msra.mxu0 0.0
  %966 = vmatprep.subr.mxu0 0.0
  %967 = vmatpush1.msra.mxu0 0.0
  %968 = vmatprep.subr.mxu0 0.0
  %969 = vmatpush1.msra.mxu0 0.0
  %970 = vmatprep.subr.mxu0 0.0
  %971 = vmatpush1.msra.mxu0 0.0
  %972 = vmatprep.subr.mxu0 0.0
  %973 = vmatpush1.msra.mxu0 0.0
  %974 = vmatprep.subr.mxu0 0.0
  %975 = vmatpush1.msra.mxu0 0.0
  %976 = vmatprep.subr.mxu0 0.0
  %977 = vmatpush1.msra.mxu0 0.0
  %978 = vmatprep.subr.mxu0 0.0
  %979 = vmatpush1.msra.mxu0 0.0
  %980 = vmatprep.subr.mxu0 0.0
  %981 = vmatpush1.msra.mxu0 0.0
  %982 = vmatprep.subr.mxu0 0.0
  %983 = vmatpush1.msra.mxu0 0.0
  %984 = vmatprep.subr.mxu0 0.0
  %985 = vmatpush1.msra.mxu0 0.0
  %986 = vmatprep.mubr.f32.mxu0 0.0
  %987 = vmatmul.mubr.f32.gmra.mrb[0].mxu0 %v560
  %v988 = vpop.f32.mrb[0].mxu0
  %v989 = vadd.f32 0.0, %v988
  %v990 = vpop.f32.mrb[0].mxu0
  %v991 = vadd.f32 0.0, %v990
  %992 = vmatprep.mubr.f32.mxu0 0.0
  %993 = vmatmul.mubr.f32.gmra.mrb[0].mxu0 %v563
  %v994 = vpop.f32.mrb[0].mxu0
  %v995 = vadd.f32 0.0, %v994
  %v996 = vpop.f32.mrb[0].mxu0
  %v997 = vadd.f32 0.0, %v996
  %998 = vmatprep.mubr.f32.mxu0 0.0
  %999 = vmatmul.mubr.f32.gmra.mrb[0].mxu0 %v566
  %v1000 = vpop.f32.mrb[0].mxu0
  %v1001 = vadd.f32 0.0, %v1000
  %v1002 = vpop.f32.mrb[0].mxu0
  %v1003 = vadd.f32 0.0, %v1002
  %1004 = vmatprep.mubr.f32.mxu0 0.0
  %1005 = vmatmul.mubr.f32.gmra.mrb[0].mxu0 %v569
  %v1006 = vpop.f32.mrb[0].mxu0
  %v1007 = vadd.f32 0.0, %v1006
  %v1008 = vpop.f32.mrb[0].mxu0
  %v1009 = vadd.f32 0.0, %v1008
  %1010 = vmatprep.mubr.f32.mxu0 0.0
  %1011 = vmatmul.mubr.f32.gmra.mrb[0].mxu0 %v572
  %v1012 = vpop.f32.mrb[0].mxu0
  %v1013 = vadd.f32 0.0, %v1012
  %v1014 = vpop.f32.mrb[0].mxu0
  %v1015 = vadd.f32 0.0, %v1014
  %1016 = vmatprep.mubr.f32.mxu0 0.0
  %1017 = vmatmul.mubr.f32.gmra.mrb[0].mxu0 %v575
  %v1018 = vpop.f32.mrb[0].mxu0
  %v1019 = vadd.f32 0.0, %v1018
  %v1020 = vpop.f32.mrb[0].mxu0
  %v1021 = vadd.f32 0.0, %v1020
  %1022 = vmatprep.mubr.f32.mxu0 0.0
  %1023 = vmatmul.mubr.f32.gmra.mrb[0].mxu0 %v578
  %v1024 = vpop.f32.mrb[0].mxu0
  %v1025 = vadd.f32 0.0, %v1024
  %v1026 = vpop.f32.mrb[0].mxu0
  %v1027 = vadd.f32 0.0, %v1026
  %1028 = vmatprep.mubr.f32.mxu0 0.0
  %1029 = vmatmul.mubr.f32.gmra.mrb[0].mxu0 %v581
  %v1030 = vpop.f32.mrb[0].mxu0
  %v1031 = vadd.f32 0.0, %v1030
  %v1032 = vpop.f32.mrb[0].mxu0
  %v1033 = vadd.f32 0.0, %v1032
  %1034 = vdwg.mxu0
  %1035 = vmatprep.subr.mxu0 0.0
  %1036 = vmatpush1.msra.mxu0 %v531
  %1037 = vmatprep.subr.mxu0 0.0
  %1038 = vmatpush1.msra.mxu0 %v540
  %1039 = vmatprep.subr.mxu0 0.0
  %1040 = vmatpush1.msra.mxu0 %v549
  %1041 = vmatprep.subr.mxu0 0.0
  %1042 = vmatpush1.msra.mxu0 %v558
  %1043 = vmatprep.subr.mxu0 0.0
  %1044 = vmatpush1.msra.mxu0 0.0
  %1045 = vmatprep.subr.mxu0 0.0
  %1046 = vmatpush1.msra.mxu0 0.0
  %1047 = vmatprep.subr.mxu0 0.0
  %1048 = vmatpush1.msra.mxu0 0.0
  %1049 = vmatprep.subr.mxu0 0.0
  %1050 = vmatpush1.msra.mxu0 0.0
  %1051 = vmatprep.subr.mxu0 0.0
  %1052 = vmatpush1.msra.mxu0 0.0
  %1053 = vmatprep.subr.mxu0 0.0
  %1054 = vmatpush1.msra.mxu0 0.0
  %1055 = vmatprep.subr.mxu0 0.0
  %1056 = vmatpush1.msra.mxu0 0.0
  %1057 = vmatprep.subr.mxu0 0.0
  %1058 = vmatpush1.msra.mxu0 0.0
  %1059 = vmatprep.subr.mxu0 0.0
  %1060 = vmatpush1.msra.mxu0 0.0
  %1061 = vmatprep.subr.mxu0 0.0
  %1062 = vmatpush1.msra.mxu0 0.0
  %1063 = vmatprep.subr.mxu0 0.0
  %1064 = vmatpush1.msra.mxu0 0.0
  %1065 = vmatprep.subr.mxu0 0.0
  %1066 = vmatpush1.msra.mxu0 0.0
  %1067 = vmatprep.subr.mxu0 0.0
  %1068 = vmatpush1.msra.mxu0 0.0
  %1069 = vmatprep.subr.mxu0 0.0
  %1070 = vmatpush1.msra.mxu0 0.0
  %1071 = vmatprep.subr.mxu0 0.0
  %1072 = vmatpush1.msra.mxu0 0.0
  %1073 = vmatprep.subr.mxu0 0.0
  %1074 = vmatpush1.msra.mxu0 0.0
  %1075 = vmatprep.subr.mxu0 0.0
  %1076 = vmatpush1.msra.mxu0 0.0
  %1077 = vmatprep.subr.mxu0 0.0
  %1078 = vmatpush1.msra.mxu0 0.0
  %1079 = vmatprep.subr.mxu0 0.0
  %1080 = vmatpush1.msra.mxu0 0.0
  %1081 = vmatprep.subr.mxu0 0.0
  %1082 = vmatpush1.msra.mxu0 0.0
  %1083 = vmatprep.subr.mxu0 0.0
  %1084 = vmatpush1.msra.mxu0 0.0
  %1085 = vmatprep.subr.mxu0 0.0
  %1086 = vmatpush1.msra.mxu0 0.0
  %1087 = vmatprep.subr.mxu0 0.0
  %1088 = vmatpush1.msra.mxu0 0.0
  %1089 = vmatprep.subr.mxu0 0.0
  %1090 = vmatpush1.msra.mxu0 0.0
  %1091 = vmatprep.subr.mxu0 0.0
  %1092 = vmatpush1.msra.mxu0 0.0
  %1093 = vmatprep.subr.mxu0 0.0
  %1094 = vmatpush1.msra.mxu0 0.0
  %1095 = vmatprep.subr.mxu0 0.0
  %1096 = vmatpush1.msra.mxu0 0.0
  %1097 = vmatprep.subr.mxu0 0.0
  %1098 = vmatpush1.msra.mxu0 0.0
  %1099 = vmatprep.mubr.f32.mxu0 0.0
  %1100 = vmatmul.mubr.f32.gmra.mrb[0].mxu0 %v560
  %v1101 = vpop.f32.mrb[0].mxu0
  %v1102 = vadd.f32 0.0, %v1101
  %v1103 = vpop.f32.mrb[0].mxu0
  %1104 = vmatprep.mubr.f32.mxu0 0.0
  %1105 = vmatmul.mubr.f32.gmra.mrb[0].mxu0 %v563
  %v1106 = vpop.f32.mrb[0].mxu0
  %v1107 = vadd.f32 0.0, %v1106
  %v1108 = vpop.f32.mrb[0].mxu0
  %1109 = vmatprep.mubr.f32.mxu0 0.0
  %1110 = vmatmul.mubr.f32.gmra.mrb[0].mxu0 %v566
  %v1111 = vpop.f32.mrb[0].mxu0
  %v1112 = vadd.f32 0.0, %v1111
  %v1113 = vpop.f32.mrb[0].mxu0
  %1114 = vmatprep.mubr.f32.mxu0 0.0
  %1115 = vmatmul.mubr.f32.gmra.mrb[0].mxu0 %v569
  %v1116 = vpop.f32.mrb[0].mxu0
  %v1117 = vadd.f32 0.0, %v1116
  %v1118 = vpop.f32.mrb[0].mxu0
  %1119 = vmatprep.mubr.f32.mxu0 0.0
  %1120 = vmatmul.mubr.f32.gmra.mrb[0].mxu0 %v572
  %v1121 = vpop.f32.mrb[0].mxu0
  %v1122 = vadd.f32 0.0, %v1121
  %v1123 = vpop.f32.mrb[0].mxu0
  %1124 = vmatprep.mubr.f32.mxu0 0.0
  %1125 = vmatmul.mubr.f32.gmra.mrb[0].mxu0 %v575
  %v1126 = vpop.f32.mrb[0].mxu0
  %v1127 = vadd.f32 0.0, %v1126
  %v1128 = vpop.f32.mrb[0].mxu0
  %1129 = vmatprep.mubr.f32.mxu0 0.0
  %1130 = vmatmul.mubr.f32.gmra.mrb[0].mxu0 %v578
  %v1131 = vpop.f32.mrb[0].mxu0
  %v1132 = vadd.f32 0.0, %v1131
  %v1133 = vpop.f32.mrb[0].mxu0
  %1134 = vmatprep.mubr.f32.mxu0 0.0
  %1135 = vmatmul.mubr.f32.gmra.mrb[0].mxu0 %v581
  %v1136 = vpop.f32.mrb[0].mxu0
  %v1137 = vadd.f32 0.0, %v1136
  %v1138 = vpop.f32.mrb[0].mxu0
  %1139 = vdwg.mxu0
  %v1140 = vlaneseq
  %v1141 = vshrl.u32 %v1140, 7
  %v1142 = vsub.s32 0, %v1141
  %v1143 = vrot.slane %v41, %v1142
  %v1144 = vadd.f32 %v1102, %v1143
  %v1145 = vadd.f32 %v1107, %v1143
  %v1146 = vadd.f32 %v1112, %v1143
  %v1147 = vadd.f32 %v1117, %v1143
  %v1148 = vadd.f32 %v1122, %v1143
  %v1149 = vadd.f32 %v1127, %v1143
  %v1150 = vadd.f32 %v1132, %v1143
  %v1151 = vadd.f32 %v1137, %v1143
  %v1152 = vmax.f32 %v1144, 0.0
  %v1153 = vmax.f32 %v1145, 0.0
  %v1154 = vmax.f32 %v1146, 0.0
  %v1155 = vmax.f32 %v1147, 0.0
  %v1156 = vmax.f32 %v1148, 0.0
  %v1157 = vmax.f32 %v1149, 0.0
  %v1158 = vmax.f32 %v1150, 0.0
  %v1159 = vmax.f32 %v1151, 0.0
  %vm1160 = vcmp.ne.f32.partialorder %v1144, %v1144
  %vm1161 = vcmp.ne.f32.partialorder %v1145, %v1145
  %vm1162 = vcmp.ne.f32.partialorder %v1146, %v1146
  %vm1163 = vcmp.ne.f32.partialorder %v1147, %v1147
  %vm1164 = vcmp.ne.f32.partialorder %v1148, %v1148
  %vm1165 = vcmp.ne.f32.partialorder %v1149, %v1149
  %vm1166 = vcmp.ne.f32.partialorder %v1150, %v1150
  %vm1167 = vcmp.ne.f32.partialorder %v1151, %v1151
  %v1168 = vadd.f32 %v1144, 0.0
  %v1169 = vadd.f32 %v1145, 0.0
  %v1170 = vadd.f32 %v1146, 0.0
  %v1171 = vadd.f32 %v1147, 0.0
  %v1172 = vadd.f32 %v1148, 0.0
  %v1173 = vadd.f32 %v1149, 0.0
  %v1174 = vadd.f32 %v1150, 0.0
  %v1175 = vadd.f32 %v1151, 0.0
  %v1176 = vand.u32 2147483647, %v1144
  %v1177 = vand.u32 2147483647, %v1145
  %v1178 = vand.u32 2147483647, %v1146
  %v1179 = vand.u32 2147483647, %v1147
  %v1180 = vand.u32 2147483647, %v1148
  %v1181 = vand.u32 2147483647, %v1149
  %v1182 = vand.u32 2147483647, %v1150
  %v1183 = vand.u32 2147483647, %v1151
  %v1184 = vsub.f32 0.0, %v1176
  %v1185 = vsub.f32 0.0, %v1177
  %v1186 = vsub.f32 0.0, %v1178
  %v1187 = vsub.f32 0.0, %v1179
  %v1188 = vsub.f32 0.0, %v1180
  %v1189 = vsub.f32 0.0, %v1181
  %v1190 = vsub.f32 0.0, %v1182
  %v1191 = vsub.f32 0.0, %v1183
  %v1192 = vmul.f32 %v1184, 1.442695
  %v1193 = vpow.pop %v1192
  %v1194 = vmul.f32 %v1185, 1.442695
  %v1195 = vpow.pop %v1194
  %v1196 = vmul.f32 %v1186, 1.442695
  %v1197 = vpow.pop %v1196
  %v1198 = vmul.f32 %v1187, 1.442695
  %v1199 = vpow.pop %v1198
  %v1200 = vmul.f32 %v1188, 1.442695
  %v1201 = vpow.pop %v1200
  %v1202 = vmul.f32 %v1189, 1.442695
  %v1203 = vpow.pop %v1202
  %v1204 = vmul.f32 %v1190, 1.442695
  %v1205 = vpow.pop %v1204
  %v1206 = vmul.f32 %v1191, 1.442695
  %v1207 = vpow.pop %v1206
  %v1208 = vadd.f32 %v1193, 1.0
  %v1209 = vlog2.pop %v1208
  %v1210 = vmul.f32 %v1209, 0.6931472
  %v1211 = vmul.f32 -0.5, %v1193
  %v1212 = vadd.f32 %v1211, 1.0
  %v1213 = vmul.f32 %v1212, %v1193
  %v1214 = vand.u32 2147483647, %v1193
  %vm1215 = vcmp.lt.f32.partialorder %v1214, 0.0004427343
  %v1216 = vsel %vm1215, %v1213, %v1210
  %v1217 = vadd.f32 %v1195, 1.0
  %v1218 = vlog2.pop %v1217
  %v1219 = vmul.f32 %v1218, 0.6931472
  %v1220 = vmul.f32 -0.5, %v1195
  %v1221 = vadd.f32 %v1220, 1.0
  %v1222 = vmul.f32 %v1221, %v1195
  %v1223 = vand.u32 2147483647, %v1195
  %vm1224 = vcmp.lt.f32.partialorder %v1223, 0.0004427343
  %v1225 = vsel %vm1224, %v1222, %v1219
  %v1226 = vadd.f32 %v1197, 1.0
  %v1227 = vlog2.pop %v1226
  %v1228 = vmul.f32 %v1227, 0.6931472
  %v1229 = vmul.f32 -0.5, %v1197
  %v1230 = vadd.f32 %v1229, 1.0
  %v1231 = vmul.f32 %v1230, %v1197
  %v1232 = vand.u32 2147483647, %v1197
  %vm1233 = vcmp.lt.f32.partialorder %v1232, 0.0004427343
  %v1234 = vsel %vm1233, %v1231, %v1228
  %v1235 = vadd.f32 %v1199, 1.0
  %v1236 = vlog2.pop %v1235
  %v1237 = vmul.f32 %v1236, 0.6931472
  %v1238 = vmul.f32 -0.5, %v1199
  %v1239 = vadd.f32 %v1238, 1.0
  %v1240 = vmul.f32 %v1239, %v1199
  %v1241 = vand.u32 2147483647, %v1199
  %vm1242 = vcmp.lt.f32.partialorder %v1241, 0.0004427343
  %v1243 = vsel %vm1242, %v1240, %v1237
  %v1244 = vadd.f32 %v1201, 1.0
  %v1245 = vlog2.pop %v1244
  %v1246 = vmul.f32 %v1245, 0.6931472
  %v1247 = vmul.f32 -0.5, %v1201
  %v1248 = vadd.f32 %v1247, 1.0
  %v1249 = vmul.f32 %v1248, %v1201
  %v1250 = vand.u32 2147483647, %v1201
  %vm1251 = vcmp.lt.f32.partialorder %v1250, 0.0004427343
  %v1252 = vsel %vm1251, %v1249, %v1246
  %v1253 = vadd.f32 %v1203, 1.0
  %v1254 = vlog2.pop %v1253
  %v1255 = vmul.f32 %v1254, 0.6931472
  %v1256 = vmul.f32 -0.5, %v1203
  %v1257 = vadd.f32 %v1256, 1.0
  %v1258 = vmul.f32 %v1257, %v1203
  %v1259 = vand.u32 2147483647, %v1203
  %vm1260 = vcmp.lt.f32.partialorder %v1259, 0.0004427343
  %v1261 = vsel %vm1260, %v1258, %v1255
  %v1262 = vadd.f32 %v1205, 1.0
  %v1263 = vlog2.pop %v1262
  %v1264 = vmul.f32 %v1263, 0.6931472
  %v1265 = vmul.f32 -0.5, %v1205
  %v1266 = vadd.f32 %v1265, 1.0
  %v1267 = vmul.f32 %v1266, %v1205
  %v1268 = vand.u32 2147483647, %v1205
  %vm1269 = vcmp.lt.f32.partialorder %v1268, 0.0004427343
  %v1270 = vsel %vm1269, %v1267, %v1264
  %v1271 = vadd.f32 %v1207, 1.0
  %v1272 = vlog2.pop %v1271
  %v1273 = vmul.f32 %v1272, 0.6931472
  %v1274 = vmul.f32 -0.5, %v1207
  %v1275 = vadd.f32 %v1274, 1.0
  %v1276 = vmul.f32 %v1275, %v1207
  %v1277 = vand.u32 2147483647, %v1207
  %vm1278 = vcmp.lt.f32.partialorder %v1277, 0.0004427343
  %v1279 = vsel %vm1278, %v1276, %v1273
  %v1280 = vadd.f32 %v1152, %v1216
  %v1281 = vadd.f32 %v1153, %v1225
  %v1282 = vadd.f32 %v1154, %v1234
  %v1283 = vadd.f32 %v1155, %v1243
  %v1284 = vadd.f32 %v1156, %v1252
  %v1285 = vadd.f32 %v1157, %v1261
  %v1286 = vadd.f32 %v1158, %v1270
  %v1287 = vadd.f32 %v1159, %v1279
  %v1288 = vsel %vm1160, %v1168, %v1280
  %v1289 = vsel %vm1161, %v1169, %v1281
  %v1290 = vsel %vm1162, %v1170, %v1282
  %v1291 = vsel %vm1163, %v1171, %v1283
  %v1292 = vsel %vm1164, %v1172, %v1284
  %v1293 = vsel %vm1165, %v1173, %v1285
  %v1294 = vsel %vm1166, %v1174, %v1286
  %v1295 = vsel %vm1167, %v1175, %v1287
  %v1296 = vlaneseq
  %v1297 = vand.u32 %v1296, 127
  %v1298 = vadd.s32 %v1297, 128
  %v1299 = vadd.s32 %v1297, 256
  %v1300 = vadd.s32 %v1297, 384
  %v1301 = vlaneseq
  %v1302 = vshrl.u32 %v1301, 7
  %v1303 = vadd.s32 %v1302, 8
  %v1304 = vadd.s32 %v1302, 16
  %v1305 = vadd.s32 %v1302, 24
  %v1306 = vand.u32 %v1297, 31
  %v1307 = vand.u32 %v1298, 31
  %v1308 = vand.u32 %v1299, 31
  %v1309 = vand.u32 %v1300, 31
  %vm1310 = vcmp.eq.s32.totalorder %v1306, %v1302
  %vm1311 = vcmp.eq.s32.totalorder %v1307, %v1302
  %vm1312 = vcmp.eq.s32.totalorder %v1308, %v1302
  %vm1313 = vcmp.eq.s32.totalorder %v1309, %v1302
  %vm1314 = vcmp.eq.s32.totalorder %v1306, %v1303
  %vm1315 = vcmp.eq.s32.totalorder %v1307, %v1303
  %vm1316 = vcmp.eq.s32.totalorder %v1308, %v1303
  %vm1317 = vcmp.eq.s32.totalorder %v1309, %v1303
  %vm1318 = vcmp.eq.s32.totalorder %v1306, %v1304
  %vm1319 = vcmp.eq.s32.totalorder %v1307, %v1304
  %vm1320 = vcmp.eq.s32.totalorder %v1308, %v1304
  %vm1321 = vcmp.eq.s32.totalorder %v1309, %v1304
  %vm1322 = vcmp.eq.s32.totalorder %v1306, %v1305
  %vm1323 = vcmp.eq.s32.totalorder %v1307, %v1305
  %vm1324 = vcmp.eq.s32.totalorder %v1308, %v1305
  %vm1325 = vcmp.eq.s32.totalorder %v1309, %v1305
  %v1326 = vsel %vm1310, 1.0, 0.0
  %v1327 = vsel %vm1311, 1.0, 0.0
  %v1328 = vsel %vm1312, 1.0, 0.0
  %v1329 = vsel %vm1313, 1.0, 0.0
  %v1330 = vsel %vm1314, 1.0, 0.0
  %v1331 = vsel %vm1315, 1.0, 0.0
  %v1332 = vsel %vm1316, 1.0, 0.0
  %v1333 = vsel %vm1317, 1.0, 0.0
  %v1334 = vsel %vm1318, 1.0, 0.0
  %v1335 = vsel %vm1319, 1.0, 0.0
  %v1336 = vsel %vm1320, 1.0, 0.0
  %v1337 = vsel %vm1321, 1.0, 0.0
  %v1338 = vsel %vm1322, 1.0, 0.0
  %v1339 = vsel %vm1323, 1.0, 0.0
  %v1340 = vsel %vm1324, 1.0, 0.0
  %v1341 = vsel %vm1325, 1.0, 0.0
  %v1342 = vld [vmem:[%s2] sm:$0xf]
  %v1344 = vlaneseq
  %v1345 = vshrl.u32 %v1344, 7
  %v1346 = vsub.s32 0, %v1345
  %v1347 = vrot.slane %v1342, %v1346
  %v1348 = vlaneseq
  %v1349 = vshrl.u32 %v1348, 7
  %v1350 = vsub.s32 1, %v1349
  %v1351 = vrot.slane %v1342, %v1350
  %v1352 = vlaneseq
  %v1353 = vshrl.u32 %v1352, 7
  %v1354 = vsub.s32 2, %v1353
  %v1355 = vrot.slane %v1342, %v1354
  %v1356 = vlaneseq
  %v1357 = vshrl.u32 %v1356, 7
  %v1358 = vsub.s32 3, %v1357
  %v1359 = vrot.slane %v1342, %v1358
  %v1364 = vmul.f32 %v1326, %v1347
  %v1365 = vmul.f32 %v1327, %v1351
  %v1366 = vmul.f32 %v1328, %v1355
  %v1367 = vmul.f32 %v1329, %v1359
  %v1368 = vmul.f32 %v1330, %v1347
  %v1369 = vmul.f32 %v1331, %v1351
  %v1370 = vmul.f32 %v1332, %v1355
  %v1371 = vmul.f32 %v1333, %v1359
  %v1372 = vmul.f32 %v1334, %v1347
  %v1373 = vmul.f32 %v1335, %v1351
  %v1374 = vmul.f32 %v1336, %v1355
  %v1375 = vmul.f32 %v1337, %v1359
  %v1376 = vmul.f32 %v1338, %v1347
  %v1377 = vmul.f32 %v1339, %v1351
  %v1378 = vmul.f32 %v1340, %v1355
  %v1379 = vmul.f32 %v1341, %v1359
  %v1381 = vsel %vm42, %v1288, 0
  %v1384 = vsel %vm42, %v1289, 0
  %v1387 = vsel %vm42, %v1290, 0
  %v1390 = vsel %vm42, %v1291, 0
  %v1393 = vsel %vm42, %v1292, 0
  %v1396 = vsel %vm42, %v1293, 0
  %v1399 = vsel %vm42, %v1294, 0
  %v1402 = vsel %vm42, %v1295, 0
  %1404 = vmatprep.subr.mxu0 %v1365
  %1405 = vmatpush1.msra.mxu0 %v1364
  %1406 = vmatprep.subr.mxu0 %v1369
  %1407 = vmatpush1.msra.mxu0 %v1368
  %1408 = vmatprep.subr.mxu0 %v1373
  %1409 = vmatpush1.msra.mxu0 %v1372
  %1410 = vmatprep.subr.mxu0 %v1377
  %1411 = vmatpush1.msra.mxu0 %v1376
  %1412 = vmatprep.subr.mxu0 0.0
  %1413 = vmatpush1.msra.mxu0 0.0
  %1414 = vmatprep.subr.mxu0 0.0
  %1415 = vmatpush1.msra.mxu0 0.0
  %1416 = vmatprep.subr.mxu0 0.0
  %1417 = vmatpush1.msra.mxu0 0.0
  %1418 = vmatprep.subr.mxu0 0.0
  %1419 = vmatpush1.msra.mxu0 0.0
  %1420 = vmatprep.subr.mxu0 0.0
  %1421 = vmatpush1.msra.mxu0 0.0
  %1422 = vmatprep.subr.mxu0 0.0
  %1423 = vmatpush1.msra.mxu0 0.0
  %1424 = vmatprep.subr.mxu0 0.0
  %1425 = vmatpush1.msra.mxu0 0.0
  %1426 = vmatprep.subr.mxu0 0.0
  %1427 = vmatpush1.msra.mxu0 0.0
  %1428 = vmatprep.subr.mxu0 0.0
  %1429 = vmatpush1.msra.mxu0 0.0
  %1430 = vmatprep.subr.mxu0 0.0
  %1431 = vmatpush1.msra.mxu0 0.0
  %1432 = vmatprep.subr.mxu0 0.0
  %1433 = vmatpush1.msra.mxu0 0.0
  %1434 = vmatprep.subr.mxu0 0.0
  %1435 = vmatpush1.msra.mxu0 0.0
  %1436 = vmatprep.subr.mxu0 0.0
  %1437 = vmatpush1.msra.mxu0 0.0
  %1438 = vmatprep.subr.mxu0 0.0
  %1439 = vmatpush1.msra.mxu0 0.0
  %1440 = vmatprep.subr.mxu0 0.0
  %1441 = vmatpush1.msra.mxu0 0.0
  %1442 = vmatprep.subr.mxu0 0.0
  %1443 = vmatpush1.msra.mxu0 0.0
  %1444 = vmatprep.subr.mxu0 0.0
  %1445 = vmatpush1.msra.mxu0 0.0
  %1446 = vmatprep.subr.mxu0 0.0
  %1447 = vmatpush1.msra.mxu0 0.0
  %1448 = vmatprep.subr.mxu0 0.0
  %1449 = vmatpush1.msra.mxu0 0.0
  %1450 = vmatprep.subr.mxu0 0.0
  %1451 = vmatpush1.msra.mxu0 0.0
  %1452 = vmatprep.subr.mxu0 0.0
  %1453 = vmatpush1.msra.mxu0 0.0
  %1454 = vmatprep.subr.mxu0 0.0
  %1455 = vmatpush1.msra.mxu0 0.0
  %1456 = vmatprep.subr.mxu0 0.0
  %1457 = vmatpush1.msra.mxu0 0.0
  %1458 = vmatprep.subr.mxu0 0.0
  %1459 = vmatpush1.msra.mxu0 0.0
  %1460 = vmatprep.subr.mxu0 0.0
  %1461 = vmatpush1.msra.mxu0 0.0
  %1462 = vmatprep.subr.mxu0 0.0
  %1463 = vmatpush1.msra.mxu0 0.0
  %1464 = vmatprep.subr.mxu0 0.0
  %1465 = vmatpush1.msra.mxu0 0.0
  %1466 = vmatprep.subr.mxu0 0.0
  %1467 = vmatpush1.msra.mxu0 0.0
  %1468 = vmatprep.mubr.f32.mxu0 0.0
  %1469 = vmatmul.mubr.f32.gmra.mrb[0].mxu0 %v1381
  %v1470 = vpop.f32.mrb[0].mxu0
  %v1471 = vadd.f32 0.0, %v1470
  %v1472 = vpop.f32.mrb[0].mxu0
  %v1473 = vadd.f32 0.0, %v1472
  %1474 = vmatprep.mubr.f32.mxu0 0.0
  %1475 = vmatmul.mubr.f32.gmra.mrb[0].mxu0 %v1384
  %v1476 = vpop.f32.mrb[0].mxu0
  %v1477 = vadd.f32 0.0, %v1476
  %v1478 = vpop.f32.mrb[0].mxu0
  %v1479 = vadd.f32 0.0, %v1478
  %1480 = vmatprep.mubr.f32.mxu0 0.0
  %1481 = vmatmul.mubr.f32.gmra.mrb[0].mxu0 %v1387
  %v1482 = vpop.f32.mrb[0].mxu0
  %v1483 = vadd.f32 0.0, %v1482
  %v1484 = vpop.f32.mrb[0].mxu0
  %v1485 = vadd.f32 0.0, %v1484
  %1486 = vmatprep.mubr.f32.mxu0 0.0
  %1487 = vmatmul.mubr.f32.gmra.mrb[0].mxu0 %v1390
  %v1488 = vpop.f32.mrb[0].mxu0
  %v1489 = vadd.f32 0.0, %v1488
  %v1490 = vpop.f32.mrb[0].mxu0
  %v1491 = vadd.f32 0.0, %v1490
  %1492 = vmatprep.mubr.f32.mxu0 0.0
  %1493 = vmatmul.mubr.f32.gmra.mrb[0].mxu0 %v1393
  %v1494 = vpop.f32.mrb[0].mxu0
  %v1495 = vadd.f32 0.0, %v1494
  %v1496 = vpop.f32.mrb[0].mxu0
  %v1497 = vadd.f32 0.0, %v1496
  %1498 = vmatprep.mubr.f32.mxu0 0.0
  %1499 = vmatmul.mubr.f32.gmra.mrb[0].mxu0 %v1396
  %v1500 = vpop.f32.mrb[0].mxu0
  %v1501 = vadd.f32 0.0, %v1500
  %v1502 = vpop.f32.mrb[0].mxu0
  %v1503 = vadd.f32 0.0, %v1502
  %1504 = vmatprep.mubr.f32.mxu0 0.0
  %1505 = vmatmul.mubr.f32.gmra.mrb[0].mxu0 %v1399
  %v1506 = vpop.f32.mrb[0].mxu0
  %v1507 = vadd.f32 0.0, %v1506
  %v1508 = vpop.f32.mrb[0].mxu0
  %v1509 = vadd.f32 0.0, %v1508
  %1510 = vmatprep.mubr.f32.mxu0 0.0
  %1511 = vmatmul.mubr.f32.gmra.mrb[0].mxu0 %v1402
  %v1512 = vpop.f32.mrb[0].mxu0
  %v1513 = vadd.f32 0.0, %v1512
  %v1514 = vpop.f32.mrb[0].mxu0
  %v1515 = vadd.f32 0.0, %v1514
  %1516 = vdwg.mxu0
  %1517 = vmatprep.subr.mxu0 %v1367
  %1518 = vmatpush1.msra.mxu0 %v1366
  %1519 = vmatprep.subr.mxu0 %v1371
  %1520 = vmatpush1.msra.mxu0 %v1370
  %1521 = vmatprep.subr.mxu0 %v1375
  %1522 = vmatpush1.msra.mxu0 %v1374
  %1523 = vmatprep.subr.mxu0 %v1379
  %1524 = vmatpush1.msra.mxu0 %v1378
  %1525 = vmatprep.subr.mxu0 0.0
  %1526 = vmatpush1.msra.mxu0 0.0
  %1527 = vmatprep.subr.mxu0 0.0
  %1528 = vmatpush1.msra.mxu0 0.0
  %1529 = vmatprep.subr.mxu0 0.0
  %1530 = vmatpush1.msra.mxu0 0.0
  %1531 = vmatprep.subr.mxu0 0.0
  %1532 = vmatpush1.msra.mxu0 0.0
  %1533 = vmatprep.subr.mxu0 0.0
  %1534 = vmatpush1.msra.mxu0 0.0
  %1535 = vmatprep.subr.mxu0 0.0
  %1536 = vmatpush1.msra.mxu0 0.0
  %1537 = vmatprep.subr.mxu0 0.0
  %1538 = vmatpush1.msra.mxu0 0.0
  %1539 = vmatprep.subr.mxu0 0.0
  %1540 = vmatpush1.msra.mxu0 0.0
  %1541 = vmatprep.subr.mxu0 0.0
  %1542 = vmatpush1.msra.mxu0 0.0
  %1543 = vmatprep.subr.mxu0 0.0
  %1544 = vmatpush1.msra.mxu0 0.0
  %1545 = vmatprep.subr.mxu0 0.0
  %1546 = vmatpush1.msra.mxu0 0.0
  %1547 = vmatprep.subr.mxu0 0.0
  %1548 = vmatpush1.msra.mxu0 0.0
  %1549 = vmatprep.subr.mxu0 0.0
  %1550 = vmatpush1.msra.mxu0 0.0
  %1551 = vmatprep.subr.mxu0 0.0
  %1552 = vmatpush1.msra.mxu0 0.0
  %1553 = vmatprep.subr.mxu0 0.0
  %1554 = vmatpush1.msra.mxu0 0.0
  %1555 = vmatprep.subr.mxu0 0.0
  %1556 = vmatpush1.msra.mxu0 0.0
  %1557 = vmatprep.subr.mxu0 0.0
  %1558 = vmatpush1.msra.mxu0 0.0
  %1559 = vmatprep.subr.mxu0 0.0
  %1560 = vmatpush1.msra.mxu0 0.0
  %1561 = vmatprep.subr.mxu0 0.0
  %1562 = vmatpush1.msra.mxu0 0.0
  %1563 = vmatprep.subr.mxu0 0.0
  %1564 = vmatpush1.msra.mxu0 0.0
  %1565 = vmatprep.subr.mxu0 0.0
  %1566 = vmatpush1.msra.mxu0 0.0
  %1567 = vmatprep.subr.mxu0 0.0
  %1568 = vmatpush1.msra.mxu0 0.0
  %1569 = vmatprep.subr.mxu0 0.0
  %1570 = vmatpush1.msra.mxu0 0.0
  %1571 = vmatprep.subr.mxu0 0.0
  %1572 = vmatpush1.msra.mxu0 0.0
  %1573 = vmatprep.subr.mxu0 0.0
  %1574 = vmatpush1.msra.mxu0 0.0
  %1575 = vmatprep.subr.mxu0 0.0
  %1576 = vmatpush1.msra.mxu0 0.0
  %1577 = vmatprep.subr.mxu0 0.0
  %1578 = vmatpush1.msra.mxu0 0.0
  %1579 = vmatprep.subr.mxu0 0.0
  %1580 = vmatpush1.msra.mxu0 0.0
  %1581 = vmatprep.mubr.f32.mxu0 0.0
  %1582 = vmatmul.mubr.f32.gmra.mrb[0].mxu0 %v1381
  %v1583 = vpop.f32.mrb[0].mxu0
  %v1584 = vadd.f32 0.0, %v1583
  %v1585 = vpop.f32.mrb[0].mxu0
  %v1586 = vadd.f32 0.0, %v1585
  %1587 = vmatprep.mubr.f32.mxu0 0.0
  %1588 = vmatmul.mubr.f32.gmra.mrb[0].mxu0 %v1384
  %v1589 = vpop.f32.mrb[0].mxu0
  %v1590 = vadd.f32 0.0, %v1589
  %v1591 = vpop.f32.mrb[0].mxu0
  %v1592 = vadd.f32 0.0, %v1591
  %1593 = vmatprep.mubr.f32.mxu0 0.0
  %1594 = vmatmul.mubr.f32.gmra.mrb[0].mxu0 %v1387
  %v1595 = vpop.f32.mrb[0].mxu0
  %v1596 = vadd.f32 0.0, %v1595
  %v1597 = vpop.f32.mrb[0].mxu0
  %v1598 = vadd.f32 0.0, %v1597
  %1599 = vmatprep.mubr.f32.mxu0 0.0
  %1600 = vmatmul.mubr.f32.gmra.mrb[0].mxu0 %v1390
  %v1601 = vpop.f32.mrb[0].mxu0
  %v1602 = vadd.f32 0.0, %v1601
  %v1603 = vpop.f32.mrb[0].mxu0
  %v1604 = vadd.f32 0.0, %v1603
  %1605 = vmatprep.mubr.f32.mxu0 0.0
  %1606 = vmatmul.mubr.f32.gmra.mrb[0].mxu0 %v1393
  %v1607 = vpop.f32.mrb[0].mxu0
  %v1608 = vadd.f32 0.0, %v1607
  %v1609 = vpop.f32.mrb[0].mxu0
  %v1610 = vadd.f32 0.0, %v1609
  %1611 = vmatprep.mubr.f32.mxu0 0.0
  %1612 = vmatmul.mubr.f32.gmra.mrb[0].mxu0 %v1396
  %v1613 = vpop.f32.mrb[0].mxu0
  %v1614 = vadd.f32 0.0, %v1613
  %v1615 = vpop.f32.mrb[0].mxu0
  %v1616 = vadd.f32 0.0, %v1615
  %1617 = vmatprep.mubr.f32.mxu0 0.0
  %1618 = vmatmul.mubr.f32.gmra.mrb[0].mxu0 %v1399
  %v1619 = vpop.f32.mrb[0].mxu0
  %v1620 = vadd.f32 0.0, %v1619
  %v1621 = vpop.f32.mrb[0].mxu0
  %v1622 = vadd.f32 0.0, %v1621
  %1623 = vmatprep.mubr.f32.mxu0 0.0
  %1624 = vmatmul.mubr.f32.gmra.mrb[0].mxu0 %v1402
  %v1625 = vpop.f32.mrb[0].mxu0
  %v1626 = vadd.f32 0.0, %v1625
  %v1627 = vpop.f32.mrb[0].mxu0
  %v1628 = vadd.f32 0.0, %v1627
  %1629 = vdwg.mxu0
  %v1630 = vmul.f32 %v1471, 1.442695
  %v1631 = vpow.pop %v1630
  %v1632 = vmul.f32 %v1473, 1.442695
  %v1633 = vpow.pop %v1632
  %v1634 = vmul.f32 %v1584, 1.442695
  %v1635 = vpow.pop %v1634
  %v1636 = vmul.f32 %v1586, 1.442695
  %v1637 = vpow.pop %v1636
  %v1638 = vmul.f32 %v1477, 1.442695
  %v1639 = vpow.pop %v1638
  %v1640 = vmul.f32 %v1479, 1.442695
  %v1641 = vpow.pop %v1640
  %v1642 = vmul.f32 %v1590, 1.442695
  %v1643 = vpow.pop %v1642
  %v1644 = vmul.f32 %v1592, 1.442695
  %v1645 = vpow.pop %v1644
  %v1646 = vmul.f32 %v1483, 1.442695
  %v1647 = vpow.pop %v1646
  %v1648 = vmul.f32 %v1485, 1.442695
  %v1649 = vpow.pop %v1648
  %v1650 = vmul.f32 %v1596, 1.442695
  %v1651 = vpow.pop %v1650
  %v1652 = vmul.f32 %v1598, 1.442695
  %v1653 = vpow.pop %v1652
  %v1654 = vmul.f32 %v1489, 1.442695
  %v1655 = vpow.pop %v1654
  %v1656 = vmul.f32 %v1491, 1.442695
  %v1657 = vpow.pop %v1656
  %v1658 = vmul.f32 %v1602, 1.442695
  %v1659 = vpow.pop %v1658
  %v1660 = vmul.f32 %v1604, 1.442695
  %v1661 = vpow.pop %v1660
  %v1662 = vmul.f32 %v1495, 1.442695
  %v1663 = vpow.pop %v1662
  %v1664 = vmul.f32 %v1497, 1.442695
  %v1665 = vpow.pop %v1664
  %v1666 = vmul.f32 %v1608, 1.442695
  %v1667 = vpow.pop %v1666
  %v1668 = vmul.f32 %v1610, 1.442695
  %v1669 = vpow.pop %v1668
  %v1670 = vmul.f32 %v1501, 1.442695
  %v1671 = vpow.pop %v1670
  %v1672 = vmul.f32 %v1503, 1.442695
  %v1673 = vpow.pop %v1672
  %v1674 = vmul.f32 %v1614, 1.442695
  %v1675 = vpow.pop %v1674
  %v1676 = vmul.f32 %v1616, 1.442695
  %v1677 = vpow.pop %v1676
  %v1678 = vmul.f32 %v1507, 1.442695
  %v1679 = vpow.pop %v1678
  %v1680 = vmul.f32 %v1509, 1.442695
  %v1681 = vpow.pop %v1680
  %v1682 = vmul.f32 %v1620, 1.442695
  %v1683 = vpow.pop %v1682
  %v1684 = vmul.f32 %v1622, 1.442695
  %v1685 = vpow.pop %v1684
  %v1686 = vmul.f32 %v1513, 1.442695
  %v1687 = vpow.pop %v1686
  %v1688 = vmul.f32 %v1515, 1.442695
  %v1689 = vpow.pop %v1688
  %v1690 = vmul.f32 %v1626, 1.442695
  %v1691 = vpow.pop %v1690
  %v1692 = vmul.f32 %v1628, 1.442695
  %v1693 = vpow.pop %v1692
  %v1694 = vmul.f32 %v1288, %v515
  %v1695 = vmul.f32 %v1289, %v516
  %v1696 = vmul.f32 %v1290, %v517
  %v1697 = vmul.f32 %v1291, %v518
  %v1698 = vmul.f32 %v1292, %v519
  %v1699 = vmul.f32 %v1293, %v520
  %v1700 = vmul.f32 %v1294, %v521
  %v1701 = vmul.f32 %v1295, %v522
  %v1703 = vsel %vm42, %v1694, 0
  %v1706 = vsel %vm42, %v1695, 0
  %v1709 = vsel %vm42, %v1696, 0
  %v1712 = vsel %vm42, %v1697, 0
  %v1715 = vsel %vm42, %v1698, 0
  %v1718 = vsel %vm42, %v1699, 0
  %v1721 = vsel %vm42, %v1700, 0
  %v1724 = vsel %vm42, %v1701, 0
  %1726 = vmatprep.subr.mxu0 %v1327
  %1727 = vmatpush1.msra.mxu0 %v1326
  %1728 = vmatprep.subr.mxu0 %v1331
  %1729 = vmatpush1.msra.mxu0 %v1330
  %1730 = vmatprep.subr.mxu0 %v1335
  %1731 = vmatpush1.msra.mxu0 %v1334
  %1732 = vmatprep.subr.mxu0 %v1339
  %1733 = vmatpush1.msra.mxu0 %v1338
  %1734 = vmatprep.subr.mxu0 0.0
  %1735 = vmatpush1.msra.mxu0 0.0
  %1736 = vmatprep.subr.mxu0 0.0
  %1737 = vmatpush1.msra.mxu0 0.0
  %1738 = vmatprep.subr.mxu0 0.0
  %1739 = vmatpush1.msra.mxu0 0.0
  %1740 = vmatprep.subr.mxu0 0.0
  %1741 = vmatpush1.msra.mxu0 0.0
  %1742 = vmatprep.subr.mxu0 0.0
  %1743 = vmatpush1.msra.mxu0 0.0
  %1744 = vmatprep.subr.mxu0 0.0
  %1745 = vmatpush1.msra.mxu0 0.0
  %1746 = vmatprep.subr.mxu0 0.0
  %1747 = vmatpush1.msra.mxu0 0.0
  %1748 = vmatprep.subr.mxu0 0.0
  %1749 = vmatpush1.msra.mxu0 0.0
  %1750 = vmatprep.subr.mxu0 0.0
  %1751 = vmatpush1.msra.mxu0 0.0
  %1752 = vmatprep.subr.mxu0 0.0
  %1753 = vmatpush1.msra.mxu0 0.0
  %1754 = vmatprep.subr.mxu0 0.0
  %1755 = vmatpush1.msra.mxu0 0.0
  %1756 = vmatprep.subr.mxu0 0.0
  %1757 = vmatpush1.msra.mxu0 0.0
  %1758 = vmatprep.subr.mxu0 0.0
  %1759 = vmatpush1.msra.mxu0 0.0
  %1760 = vmatprep.subr.mxu0 0.0
  %1761 = vmatpush1.msra.mxu0 0.0
  %1762 = vmatprep.subr.mxu0 0.0
  %1763 = vmatpush1.msra.mxu0 0.0
  %1764 = vmatprep.subr.mxu0 0.0
  %1765 = vmatpush1.msra.mxu0 0.0
  %1766 = vmatprep.subr.mxu0 0.0
  %1767 = vmatpush1.msra.mxu0 0.0
  %1768 = vmatprep.subr.mxu0 0.0
  %1769 = vmatpush1.msra.mxu0 0.0
  %1770 = vmatprep.subr.mxu0 0.0
  %1771 = vmatpush1.msra.mxu0 0.0
  %1772 = vmatprep.subr.mxu0 0.0
  %1773 = vmatpush1.msra.mxu0 0.0
  %1774 = vmatprep.subr.mxu0 0.0
  %1775 = vmatpush1.msra.mxu0 0.0
  %1776 = vmatprep.subr.mxu0 0.0
  %1777 = vmatpush1.msra.mxu0 0.0
  %1778 = vmatprep.subr.mxu0 0.0
  %1779 = vmatpush1.msra.mxu0 0.0
  %1780 = vmatprep.subr.mxu0 0.0
  %1781 = vmatpush1.msra.mxu0 0.0
  %1782 = vmatprep.subr.mxu0 0.0
  %1783 = vmatpush1.msra.mxu0 0.0
  %1784 = vmatprep.subr.mxu0 0.0
  %1785 = vmatpush1.msra.mxu0 0.0
  %1786 = vmatprep.subr.mxu0 0.0
  %1787 = vmatpush1.msra.mxu0 0.0
  %1788 = vmatprep.subr.mxu0 0.0
  %1789 = vmatpush1.msra.mxu0 0.0
  %1790 = vmatprep.mubr.f32.mxu0 0.0
  %1791 = vmatmul.mubr.f32.gmra.mrb[0].mxu0 %v1703
  %v1792 = vpop.f32.mrb[0].mxu0
  %v1793 = vadd.f32 0.0, %v1792
  %v1794 = vpop.f32.mrb[0].mxu0
  %v1795 = vadd.f32 0.0, %v1794
  %1796 = vmatprep.mubr.f32.mxu0 0.0
  %1797 = vmatmul.mubr.f32.gmra.mrb[0].mxu0 %v1706
  %v1798 = vpop.f32.mrb[0].mxu0
  %v1799 = vadd.f32 0.0, %v1798
  %v1800 = vpop.f32.mrb[0].mxu0
  %v1801 = vadd.f32 0.0, %v1800
  %1802 = vmatprep.mubr.f32.mxu0 0.0
  %1803 = vmatmul.mubr.f32.gmra.mrb[0].mxu0 %v1709
  %v1804 = vpop.f32.mrb[0].mxu0
  %v1805 = vadd.f32 0.0, %v1804
  %v1806 = vpop.f32.mrb[0].mxu0
  %v1807 = vadd.f32 0.0, %v1806
  %1808 = vmatprep.mubr.f32.mxu0 0.0
  %1809 = vmatmul.mubr.f32.gmra.mrb[0].mxu0 %v1712
  %v1810 = vpop.f32.mrb[0].mxu0
  %v1811 = vadd.f32 0.0, %v1810
  %v1812 = vpop.f32.mrb[0].mxu0
  %v1813 = vadd.f32 0.0, %v1812
  %1814 = vmatprep.mubr.f32.mxu0 0.0
  %1815 = vmatmul.mubr.f32.gmra.mrb[0].mxu0 %v1715
  %v1816 = vpop.f32.mrb[0].mxu0
  %v1817 = vadd.f32 0.0, %v1816
  %v1818 = vpop.f32.mrb[0].mxu0
  %v1819 = vadd.f32 0.0, %v1818
  %1820 = vmatprep.mubr.f32.mxu0 0.0
  %1821 = vmatmul.mubr.f32.gmra.mrb[0].mxu0 %v1718
  %v1822 = vpop.f32.mrb[0].mxu0
  %v1823 = vadd.f32 0.0, %v1822
  %v1824 = vpop.f32.mrb[0].mxu0
  %v1825 = vadd.f32 0.0, %v1824
  %1826 = vmatprep.mubr.f32.mxu0 0.0
  %1827 = vmatmul.mubr.f32.gmra.mrb[0].mxu0 %v1721
  %v1828 = vpop.f32.mrb[0].mxu0
  %v1829 = vadd.f32 0.0, %v1828
  %v1830 = vpop.f32.mrb[0].mxu0
  %v1831 = vadd.f32 0.0, %v1830
  %1832 = vmatprep.mubr.f32.mxu0 0.0
  %1833 = vmatmul.mubr.f32.gmra.mrb[0].mxu0 %v1724
  %v1834 = vpop.f32.mrb[0].mxu0
  %v1835 = vadd.f32 0.0, %v1834
  %v1836 = vpop.f32.mrb[0].mxu0
  %v1837 = vadd.f32 0.0, %v1836
  %1838 = vdwg.mxu0
  %1839 = vmatprep.subr.mxu0 %v1329
  %1840 = vmatpush1.msra.mxu0 %v1328
  %1841 = vmatprep.subr.mxu0 %v1333
  %1842 = vmatpush1.msra.mxu0 %v1332
  %1843 = vmatprep.subr.mxu0 %v1337
  %1844 = vmatpush1.msra.mxu0 %v1336
  %1845 = vmatprep.subr.mxu0 %v1341
  %1846 = vmatpush1.msra.mxu0 %v1340
  %1847 = vmatprep.subr.mxu0 0.0
  %1848 = vmatpush1.msra.mxu0 0.0
  %1849 = vmatprep.subr.mxu0 0.0
  %1850 = vmatpush1.msra.mxu0 0.0
  %1851 = vmatprep.subr.mxu0 0.0
  %1852 = vmatpush1.msra.mxu0 0.0
  %1853 = vmatprep.subr.mxu0 0.0
  %1854 = vmatpush1.msra.mxu0 0.0
  %1855 = vmatprep.subr.mxu0 0.0
  %1856 = vmatpush1.msra.mxu0 0.0
  %1857 = vmatprep.subr.mxu0 0.0
  %1858 = vmatpush1.msra.mxu0 0.0
  %1859 = vmatprep.subr.mxu0 0.0
  %1860 = vmatpush1.msra.mxu0 0.0
  %1861 = vmatprep.subr.mxu0 0.0
  %1862 = vmatpush1.msra.mxu0 0.0
  %1863 = vmatprep.subr.mxu0 0.0
  %1864 = vmatpush1.msra.mxu0 0.0
  %1865 = vmatprep.subr.mxu0 0.0
  %1866 = vmatpush1.msra.mxu0 0.0
  %1867 = vmatprep.subr.mxu0 0.0
  %1868 = vmatpush1.msra.mxu0 0.0
  %1869 = vmatprep.subr.mxu0 0.0
  %1870 = vmatpush1.msra.mxu0 0.0
  %1871 = vmatprep.subr.mxu0 0.0
  %1872 = vmatpush1.msra.mxu0 0.0
  %1873 = vmatprep.subr.mxu0 0.0
  %1874 = vmatpush1.msra.mxu0 0.0
  %1875 = vmatprep.subr.mxu0 0.0
  %1876 = vmatpush1.msra.mxu0 0.0
  %1877 = vmatprep.subr.mxu0 0.0
  %1878 = vmatpush1.msra.mxu0 0.0
  %1879 = vmatprep.subr.mxu0 0.0
  %1880 = vmatpush1.msra.mxu0 0.0
  %1881 = vmatprep.subr.mxu0 0.0
  %1882 = vmatpush1.msra.mxu0 0.0
  %1883 = vmatprep.subr.mxu0 0.0
  %1884 = vmatpush1.msra.mxu0 0.0
  %1885 = vmatprep.subr.mxu0 0.0
  %1886 = vmatpush1.msra.mxu0 0.0
  %1887 = vmatprep.subr.mxu0 0.0
  %1888 = vmatpush1.msra.mxu0 0.0
  %1889 = vmatprep.subr.mxu0 0.0
  %1890 = vmatpush1.msra.mxu0 0.0
  %1891 = vmatprep.subr.mxu0 0.0
  %1892 = vmatpush1.msra.mxu0 0.0
  %1893 = vmatprep.subr.mxu0 0.0
  %1894 = vmatpush1.msra.mxu0 0.0
  %1895 = vmatprep.subr.mxu0 0.0
  %1896 = vmatpush1.msra.mxu0 0.0
  %1897 = vmatprep.subr.mxu0 0.0
  %1898 = vmatpush1.msra.mxu0 0.0
  %1899 = vmatprep.subr.mxu0 0.0
  %1900 = vmatpush1.msra.mxu0 0.0
  %1901 = vmatprep.subr.mxu0 0.0
  %1902 = vmatpush1.msra.mxu0 0.0
  %1903 = vmatprep.mubr.f32.mxu0 0.0
  %1904 = vmatmul.mubr.f32.gmra.mrb[0].mxu0 %v1703
  %v1905 = vpop.f32.mrb[0].mxu0
  %v1906 = vadd.f32 0.0, %v1905
  %v1907 = vpop.f32.mrb[0].mxu0
  %v1908 = vadd.f32 0.0, %v1907
  %1909 = vmatprep.mubr.f32.mxu0 0.0
  %1910 = vmatmul.mubr.f32.gmra.mrb[0].mxu0 %v1706
  %v1911 = vpop.f32.mrb[0].mxu0
  %v1912 = vadd.f32 0.0, %v1911
  %v1913 = vpop.f32.mrb[0].mxu0
  %v1914 = vadd.f32 0.0, %v1913
  %1915 = vmatprep.mubr.f32.mxu0 0.0
  %1916 = vmatmul.mubr.f32.gmra.mrb[0].mxu0 %v1709
  %v1917 = vpop.f32.mrb[0].mxu0
  %v1918 = vadd.f32 0.0, %v1917
  %v1919 = vpop.f32.mrb[0].mxu0
  %v1920 = vadd.f32 0.0, %v1919
  %1921 = vmatprep.mubr.f32.mxu0 0.0
  %1922 = vmatmul.mubr.f32.gmra.mrb[0].mxu0 %v1712
  %v1923 = vpop.f32.mrb[0].mxu0
  %v1924 = vadd.f32 0.0, %v1923
  %v1925 = vpop.f32.mrb[0].mxu0
  %v1926 = vadd.f32 0.0, %v1925
  %1927 = vmatprep.mubr.f32.mxu0 0.0
  %1928 = vmatmul.mubr.f32.gmra.mrb[0].mxu0 %v1715
  %v1929 = vpop.f32.mrb[0].mxu0
  %v1930 = vadd.f32 0.0, %v1929
  %v1931 = vpop.f32.mrb[0].mxu0
  %v1932 = vadd.f32 0.0, %v1931
  %1933 = vmatprep.mubr.f32.mxu0 0.0
  %1934 = vmatmul.mubr.f32.gmra.mrb[0].mxu0 %v1718
  %v1935 = vpop.f32.mrb[0].mxu0
  %v1936 = vadd.f32 0.0, %v1935
  %v1937 = vpop.f32.mrb[0].mxu0
  %v1938 = vadd.f32 0.0, %v1937
  %1939 = vmatprep.mubr.f32.mxu0 0.0
  %1940 = vmatmul.mubr.f32.gmra.mrb[0].mxu0 %v1721
  %v1941 = vpop.f32.mrb[0].mxu0
  %v1942 = vadd.f32 0.0, %v1941
  %v1943 = vpop.f32.mrb[0].mxu0
  %v1944 = vadd.f32 0.0, %v1943
  %1945 = vmatprep.mubr.f32.mxu0 0.0
  %1946 = vmatmul.mubr.f32.gmra.mrb[0].mxu0 %v1724
  %v1947 = vpop.f32.mrb[0].mxu0
  %v1948 = vadd.f32 0.0, %v1947
  %v1949 = vpop.f32.mrb[0].mxu0
  %v1950 = vadd.f32 0.0, %v1949
  %1951 = vdwg.mxu0
  %v1952 = vmul.f32 %v1793, %v650
  %v1953 = vmul.f32 %v1795, %v652
  %v1954 = vmul.f32 %v1906, %v763
  %v1955 = vmul.f32 %v1908, %v765
  %v1956 = vmul.f32 %v1799, %v656
  %v1957 = vmul.f32 %v1801, %v658
  %v1958 = vmul.f32 %v1912, %v769
  %v1959 = vmul.f32 %v1914, %v771
  %v1960 = vmul.f32 %v1805, %v662
  %v1961 = vmul.f32 %v1807, %v664
  %v1962 = vmul.f32 %v1918, %v775
  %v1963 = vmul.f32 %v1920, %v777
  %v1964 = vmul.f32 %v1811, %v668
  %v1965 = vmul.f32 %v1813, %v670
  %v1966 = vmul.f32 %v1924, %v781
  %v1967 = vmul.f32 %v1926, %v783
  %v1968 = vmul.f32 %v1817, %v674
  %v1969 = vmul.f32 %v1819, %v676
  %v1970 = vmul.f32 %v1930, %v787
  %v1971 = vmul.f32 %v1932, %v789
  %v1972 = vmul.f32 %v1823, %v680
  %v1973 = vmul.f32 %v1825, %v682
  %v1974 = vmul.f32 %v1936, %v793
  %v1975 = vmul.f32 %v1938, %v795
  %v1976 = vmul.f32 %v1829, %v686
  %v1977 = vmul.f32 %v1831, %v688
  %v1978 = vmul.f32 %v1942, %v799
  %v1979 = vmul.f32 %v1944, %v801
  %v1980 = vmul.f32 %v1835, %v692
  %v1981 = vmul.f32 %v1837, %v694
  %v1982 = vmul.f32 %v1948, %v805
  %v1983 = vmul.f32 %v1950, %v807
  %v1984 = vmul.f32 %v1631, 0.0
  %v1985 = vmul.f32 %v1633, 0.0
  %v1986 = vmul.f32 %v1635, 0.0
  %v1987 = vmul.f32 %v1637, 0.0
  %v1988 = vmul.f32 %v1639, %v1952
  %v1989 = vmul.f32 %v1641, %v1953
  %v1990 = vmul.f32 %v1643, %v1954
  %v1991 = vmul.f32 %v1645, %v1955
  %v1992 = vmul.f32 %v1647, %v1956
  %v1993 = vmul.f32 %v1649, %v1957
  %v1994 = vmul.f32 %v1651, %v1958
  %v1995 = vmul.f32 %v1653, %v1959
  %v1996 = vmul.f32 %v1655, %v1960
  %v1997 = vmul.f32 %v1657, %v1961
  %v1998 = vmul.f32 %v1659, %v1962
  %v1999 = vmul.f32 %v1661, %v1963
  %v2000 = vmul.f32 %v1663, %v1964
  %v2001 = vmul.f32 %v1665, %v1965
  %v2002 = vmul.f32 %v1667, %v1966
  %v2003 = vmul.f32 %v1669, %v1967
  %v2004 = vmul.f32 %v1671, %v1968
  %v2005 = vmul.f32 %v1673, %v1969
  %v2006 = vmul.f32 %v1675, %v1970
  %v2007 = vmul.f32 %v1677, %v1971
  %v2008 = vmul.f32 %v1679, %v1972
  %v2009 = vmul.f32 %v1681, %v1973
  %v2010 = vmul.f32 %v1683, %v1974
  %v2011 = vmul.f32 %v1685, %v1975
  %v2012 = vmul.f32 %v1687, %v1976
  %v2013 = vmul.f32 %v1689, %v1977
  %v2014 = vmul.f32 %v1691, %v1978
  %v2015 = vmul.f32 %v1693, %v1979
  %v2016 = vadd.f32 %v1984, %v1952
  %v2017 = vadd.f32 %v1985, %v1953
  %v2018 = vadd.f32 %v1986, %v1954
  %v2019 = vadd.f32 %v1987, %v1955
  %v2020 = vadd.f32 %v1988, %v1956
  %v2021 = vadd.f32 %v1989, %v1957
  %v2022 = vadd.f32 %v1990, %v1958
  %v2023 = vadd.f32 %v1991, %v1959
  %v2024 = vadd.f32 %v1992, %v1960
  %v2025 = vadd.f32 %v1993, %v1961
  %v2026 = vadd.f32 %v1994, %v1962
  %v2027 = vadd.f32 %v1995, %v1963
  %v2028 = vadd.f32 %v1996, %v1964
  %v2029 = vadd.f32 %v1997, %v1965
  %v2030 = vadd.f32 %v1998, %v1966
  %v2031 = vadd.f32 %v1999, %v1967
  %v2032 = vadd.f32 %v2000, %v1968
  %v2033 = vadd.f32 %v2001, %v1969
  %v2034 = vadd.f32 %v2002, %v1970
  %v2035 = vadd.f32 %v2003, %v1971
  %v2036 = vadd.f32 %v2004, %v1972
  %v2037 = vadd.f32 %v2005, %v1973
  %v2038 = vadd.f32 %v2006, %v1974
  %v2039 = vadd.f32 %v2007, %v1975
  %v2040 = vadd.f32 %v2008, %v1976
  %v2041 = vadd.f32 %v2009, %v1977
  %v2042 = vadd.f32 %v2010, %v1978
  %v2043 = vadd.f32 %v2011, %v1979
  %v2044 = vadd.f32 %v2012, %v1980
  %v2045 = vadd.f32 %v2013, %v1981
  %v2046 = vadd.f32 %v2014, %v1982
  %v2047 = vadd.f32 %v2015, %v1983
  %v2048 = vmul.f32 %v1639, %v1631
  %v2049 = vmul.f32 %v1641, %v1633
  %v2050 = vmul.f32 %v1643, %v1635
  %v2051 = vmul.f32 %v1645, %v1637
  %v2052 = vmul.f32 %v1647, %v1639
  %v2053 = vmul.f32 %v1649, %v1641
  %v2054 = vmul.f32 %v1651, %v1643
  %v2055 = vmul.f32 %v1653, %v1645
  %v2056 = vmul.f32 %v1655, %v1647
  %v2057 = vmul.f32 %v1657, %v1649
  %v2058 = vmul.f32 %v1659, %v1651
  %v2059 = vmul.f32 %v1661, %v1653
  %v2060 = vmul.f32 %v1663, %v1655
  %v2061 = vmul.f32 %v1665, %v1657
  %v2062 = vmul.f32 %v1667, %v1659
  %v2063 = vmul.f32 %v1669, %v1661
  %v2064 = vmul.f32 %v1671, %v1663
  %v2065 = vmul.f32 %v1673, %v1665
  %v2066 = vmul.f32 %v1675, %v1667
  %v2067 = vmul.f32 %v1677, %v1669
  %v2068 = vmul.f32 %v1679, %v1671
  %v2069 = vmul.f32 %v1681, %v1673
  %v2070 = vmul.f32 %v1683, %v1675
  %v2071 = vmul.f32 %v1685, %v1677
  %v2072 = vmul.f32 %v1687, %v1679
  %v2073 = vmul.f32 %v1689, %v1681
  %v2074 = vmul.f32 %v1691, %v1683
  %v2075 = vmul.f32 %v1693, %v1685
  %v2076 = vmul.f32 %v2048, 0.0
  %v2077 = vmul.f32 %v2049, 0.0
  %v2078 = vmul.f32 %v2050, 0.0
  %v2079 = vmul.f32 %v2051, 0.0
  %v2080 = vmul.f32 %v2052, %v2016
  %v2081 = vmul.f32 %v2053, %v2017
  %v2082 = vmul.f32 %v2054, %v2018
  %v2083 = vmul.f32 %v2055, %v2019
  %v2084 = vmul.f32 %v2056, %v2020
  %v2085 = vmul.f32 %v2057, %v2021
  %v2086 = vmul.f32 %v2058, %v2022
  %v2087 = vmul.f32 %v2059, %v2023
  %v2088 = vmul.f32 %v2060, %v2024
  %v2089 = vmul.f32 %v2061, %v2025
  %v2090 = vmul.f32 %v2062, %v2026
  %v2091 = vmul.f32 %v2063, %v2027
  %v2092 = vmul.f32 %v2064, %v2028
  %v2093 = vmul.f32 %v2065, %v2029
  %v2094 = vmul.f32 %v2066, %v2030
  %v2095 = vmul.f32 %v2067, %v2031
  %v2096 = vmul.f32 %v2068, %v2032
  %v2097 = vmul.f32 %v2069, %v2033
  %v2098 = vmul.f32 %v2070, %v2034
  %v2099 = vmul.f32 %v2071, %v2035
  %v2100 = vmul.f32 %v2072, %v2036
  %v2101 = vmul.f32 %v2073, %v2037
  %v2102 = vmul.f32 %v2074, %v2038
  %v2103 = vmul.f32 %v2075, %v2039
  %v2104 = vadd.f32 %v1984, %v2016
  %v2105 = vadd.f32 %v1985, %v2017
  %v2106 = vadd.f32 %v1986, %v2018
  %v2107 = vadd.f32 %v1987, %v2019
  %v2108 = vadd.f32 %v2076, %v2020
  %v2109 = vadd.f32 %v2077, %v2021
  %v2110 = vadd.f32 %v2078, %v2022
  %v2111 = vadd.f32 %v2079, %v2023
  %v2112 = vadd.f32 %v2080, %v2024
  %v2113 = vadd.f32 %v2081, %v2025
  %v2114 = vadd.f32 %v2082, %v2026
  %v2115 = vadd.f32 %v2083, %v2027
  %v2116 = vadd.f32 %v2084, %v2028
  %v2117 = vadd.f32 %v2085, %v2029
  %v2118 = vadd.f32 %v2086, %v2030
  %v2119 = vadd.f32 %v2087, %v2031
  %v2120 = vadd.f32 %v2088, %v2032
  %v2121 = vadd.f32 %v2089, %v2033
  %v2122 = vadd.f32 %v2090, %v2034
  %v2123 = vadd.f32 %v2091, %v2035
  %v2124 = vadd.f32 %v2092, %v2036
  %v2125 = vadd.f32 %v2093, %v2037
  %v2126 = vadd.f32 %v2094, %v2038
  %v2127 = vadd.f32 %v2095, %v2039
  %v2128 = vadd.f32 %v2096, %v2040
  %v2129 = vadd.f32 %v2097, %v2041
  %v2130 = vadd.f32 %v2098, %v2042
  %v2131 = vadd.f32 %v2099, %v2043
  %v2132 = vadd.f32 %v2100, %v2044
  %v2133 = vadd.f32 %v2101, %v2045
  %v2134 = vadd.f32 %v2102, %v2046
  %v2135 = vadd.f32 %v2103, %v2047
  %v2136 = vmul.f32 %v2052, %v1631
  %v2137 = vmul.f32 %v2053, %v1633
  %v2138 = vmul.f32 %v2054, %v1635
  %v2139 = vmul.f32 %v2055, %v1637
  %v2140 = vmul.f32 %v2056, %v2048
  %v2141 = vmul.f32 %v2057, %v2049
  %v2142 = vmul.f32 %v2058, %v2050
  %v2143 = vmul.f32 %v2059, %v2051
  %v2144 = vmul.f32 %v2060, %v2052
  %v2145 = vmul.f32 %v2061, %v2053
  %v2146 = vmul.f32 %v2062, %v2054
  %v2147 = vmul.f32 %v2063, %v2055
  %v2148 = vmul.f32 %v2064, %v2056
  %v2149 = vmul.f32 %v2065, %v2057
  %v2150 = vmul.f32 %v2066, %v2058
  %v2151 = vmul.f32 %v2067, %v2059
  %v2152 = vmul.f32 %v2068, %v2060
  %v2153 = vmul.f32 %v2069, %v2061
  %v2154 = vmul.f32 %v2070, %v2062
  %v2155 = vmul.f32 %v2071, %v2063
  %v2156 = vmul.f32 %v2072, %v2064
  %v2157 = vmul.f32 %v2073, %v2065
  %v2158 = vmul.f32 %v2074, %v2066
  %v2159 = vmul.f32 %v2075, %v2067
  %v2160 = vmul.f32 %v2136, 0.0
  %v2161 = vmul.f32 %v2137, 0.0
  %v2162 = vmul.f32 %v2138, 0.0
  %v2163 = vmul.f32 %v2139, 0.0
  %v2164 = vmul.f32 %v2140, 0.0
  %v2165 = vmul.f32 %v2141, 0.0
  %v2166 = vmul.f32 %v2142, 0.0
  %v2167 = vmul.f32 %v2143, 0.0
  %v2168 = vmul.f32 %v2144, %v2104
  %v2169 = vmul.f32 %v2145, %v2105
  %v2170 = vmul.f32 %v2146, %v2106
  %v2171 = vmul.f32 %v2147, %v2107
  %v2172 = vmul.f32 %v2148, %v2108
  %v2173 = vmul.f32 %v2149, %v2109
  %v2174 = vmul.f32 %v2150, %v2110
  %v2175 = vmul.f32 %v2151, %v2111
  %v2176 = vmul.f32 %v2152, %v2112
  %v2177 = vmul.f32 %v2153, %v2113
  %v2178 = vmul.f32 %v2154, %v2114
  %v2179 = vmul.f32 %v2155, %v2115
  %v2180 = vmul.f32 %v2156, %v2116
  %v2181 = vmul.f32 %v2157, %v2117
  %v2182 = vmul.f32 %v2158, %v2118
  %v2183 = vmul.f32 %v2159, %v2119
  %v2184 = vadd.f32 %v1984, %v2104
  %v2185 = vadd.f32 %v1985, %v2105
  %v2186 = vadd.f32 %v1986, %v2106
  %v2187 = vadd.f32 %v1987, %v2107
  %v2188 = vadd.f32 %v2076, %v2108
  %v2189 = vadd.f32 %v2077, %v2109
  %v2190 = vadd.f32 %v2078, %v2110
  %v2191 = vadd.f32 %v2079, %v2111
  %v2192 = vadd.f32 %v2160, %v2112
  %v2193 = vadd.f32 %v2161, %v2113
  %v2194 = vadd.f32 %v2162, %v2114
  %v2195 = vadd.f32 %v2163, %v2115
  %v2196 = vadd.f32 %v2164, %v2116
  %v2197 = vadd.f32 %v2165, %v2117
  %v2198 = vadd.f32 %v2166, %v2118
  %v2199 = vadd.f32 %v2167, %v2119
  %v2200 = vadd.f32 %v2168, %v2120
  %v2201 = vadd.f32 %v2169, %v2121
  %v2202 = vadd.f32 %v2170, %v2122
  %v2203 = vadd.f32 %v2171, %v2123
  %v2204 = vadd.f32 %v2172, %v2124
  %v2205 = vadd.f32 %v2173, %v2125
  %v2206 = vadd.f32 %v2174, %v2126
  %v2207 = vadd.f32 %v2175, %v2127
  %v2208 = vadd.f32 %v2176, %v2128
  %v2209 = vadd.f32 %v2177, %v2129
  %v2210 = vadd.f32 %v2178, %v2130
  %v2211 = vadd.f32 %v2179, %v2131
  %v2212 = vadd.f32 %v2180, %v2132
  %v2213 = vadd.f32 %v2181, %v2133
  %v2214 = vadd.f32 %v2182, %v2134
  %v2215 = vadd.f32 %v2183, %v2135
  %v2216 = vadd.s32 %v1302, 32
  %v2217 = vadd.s32 %v1302, 40
  %v2218 = vadd.s32 %v1302, 48
  %v2219 = vadd.s32 %v1302, 56
  %v2220 = vadd.s32 %v1302, 64
  %v2221 = vadd.s32 %v1302, 72
  %v2222 = vadd.s32 %v1302, 80
  %v2223 = vadd.s32 %v1302, 88
  %v2224 = vadd.s32 %v1302, 96
  %v2225 = vadd.s32 %v1302, 104
  %v2226 = vadd.s32 %v1302, 112
  %v2227 = vadd.s32 %v1302, 120
  %v2228 = vadd.s32 %v1302, 128
  %v2229 = vadd.s32 %v1302, 136
  %v2230 = vadd.s32 %v1302, 144
  %v2231 = vadd.s32 %v1302, 152
  %v2232 = vadd.s32 %v1302, 160
  %v2233 = vadd.s32 %v1302, 168
  %v2234 = vadd.s32 %v1302, 176
  %v2235 = vadd.s32 %v1302, 184
  %v2236 = vadd.s32 %v1302, 192
  %v2237 = vadd.s32 %v1302, 200
  %v2238 = vadd.s32 %v1302, 208
  %v2239 = vadd.s32 %v1302, 216
  %v2240 = vadd.s32 %v1302, 224
  %v2241 = vadd.s32 %v1302, 232
  %v2242 = vadd.s32 %v1302, 240
  %v2243 = vadd.s32 %v1302, 248
  %v2244 = vadd.s32 %v1302, 256
  %v2245 = vadd.s32 %v1302, 264
  %v2246 = vadd.s32 %v1302, 272
  %v2247 = vadd.s32 %v1302, 280
  %v2248 = vadd.s32 %v1302, 288
  %v2249 = vadd.s32 %v1302, 296
  %v2250 = vadd.s32 %v1302, 304
  %v2251 = vadd.s32 %v1302, 312
  %v2252 = vadd.s32 %v1302, 320
  %v2253 = vadd.s32 %v1302, 328
  %v2254 = vadd.s32 %v1302, 336
  %v2255 = vadd.s32 %v1302, 344
  %v2256 = vadd.s32 %v1302, 352
  %v2257 = vadd.s32 %v1302, 360
  %v2258 = vadd.s32 %v1302, 368
  %v2259 = vadd.s32 %v1302, 376
  %v2260 = vadd.s32 %v1302, 384
  %v2261 = vadd.s32 %v1302, 392
  %v2262 = vadd.s32 %v1302, 400
  %v2263 = vadd.s32 %v1302, 408
  %v2264 = vadd.s32 %v1302, 416
  %v2265 = vadd.s32 %v1302, 424
  %v2266 = vadd.s32 %v1302, 432
  %v2267 = vadd.s32 %v1302, 440
  %v2268 = vadd.s32 %v1302, 448
  %v2269 = vadd.s32 %v1302, 456
  %v2270 = vadd.s32 %v1302, 464
  %v2271 = vadd.s32 %v1302, 472
  %v2272 = vadd.s32 %v1302, 480
  %v2273 = vadd.s32 %v1302, 488
  %v2274 = vadd.s32 %v1302, 496
  %v2275 = vadd.s32 %v1302, 504
  %v2276 = vand.u32 %v1302, 31
  %v2277 = vand.u32 %v1303, 31
  %v2278 = vand.u32 %v1304, 31
  %v2279 = vand.u32 %v1305, 31
  %v2280 = vand.u32 %v2216, 31
  %v2281 = vand.u32 %v2217, 31
  %v2282 = vand.u32 %v2218, 31
  %v2283 = vand.u32 %v2219, 31
  %v2284 = vand.u32 %v2220, 31
  %v2285 = vand.u32 %v2221, 31
  %v2286 = vand.u32 %v2222, 31
  %v2287 = vand.u32 %v2223, 31
  %v2288 = vand.u32 %v2224, 31
  %v2289 = vand.u32 %v2225, 31
  %v2290 = vand.u32 %v2226, 31
  %v2291 = vand.u32 %v2227, 31
  %v2292 = vand.u32 %v2228, 31
  %v2293 = vand.u32 %v2229, 31
  %v2294 = vand.u32 %v2230, 31
  %v2295 = vand.u32 %v2231, 31
  %v2296 = vand.u32 %v2232, 31
  %v2297 = vand.u32 %v2233, 31
  %v2298 = vand.u32 %v2234, 31
  %v2299 = vand.u32 %v2235, 31
  %v2300 = vand.u32 %v2236, 31
  %v2301 = vand.u32 %v2237, 31
  %v2302 = vand.u32 %v2238, 31
  %v2303 = vand.u32 %v2239, 31
  %v2304 = vand.u32 %v2240, 31
  %v2305 = vand.u32 %v2241, 31
  %v2306 = vand.u32 %v2242, 31
  %v2307 = vand.u32 %v2243, 31
  %v2308 = vand.u32 %v2244, 31
  %v2309 = vand.u32 %v2245, 31
  %v2310 = vand.u32 %v2246, 31
  %v2311 = vand.u32 %v2247, 31
  %v2312 = vand.u32 %v2248, 31
  %v2313 = vand.u32 %v2249, 31
  %v2314 = vand.u32 %v2250, 31
  %v2315 = vand.u32 %v2251, 31
  %v2316 = vand.u32 %v2252, 31
  %v2317 = vand.u32 %v2253, 31
  %v2318 = vand.u32 %v2254, 31
  %v2319 = vand.u32 %v2255, 31
  %v2320 = vand.u32 %v2256, 31
  %v2321 = vand.u32 %v2257, 31
  %v2322 = vand.u32 %v2258, 31
  %v2323 = vand.u32 %v2259, 31
  %v2324 = vand.u32 %v2260, 31
  %v2325 = vand.u32 %v2261, 31
  %v2326 = vand.u32 %v2262, 31
  %v2327 = vand.u32 %v2263, 31
  %v2328 = vand.u32 %v2264, 31
  %v2329 = vand.u32 %v2265, 31
  %v2330 = vand.u32 %v2266, 31
  %v2331 = vand.u32 %v2267, 31
  %v2332 = vand.u32 %v2268, 31
  %v2333 = vand.u32 %v2269, 31
  %v2334 = vand.u32 %v2270, 31
  %v2335 = vand.u32 %v2271, 31
  %v2336 = vand.u32 %v2272, 31
  %v2337 = vand.u32 %v2273, 31
  %v2338 = vand.u32 %v2274, 31
  %v2339 = vand.u32 %v2275, 31
  %vm2340 = vcmp.eq.s32.totalorder %v2276, %v1297
  %vm2341 = vcmp.eq.s32.totalorder %v2277, %v1297
  %vm2342 = vcmp.eq.s32.totalorder %v2278, %v1297
  %vm2343 = vcmp.eq.s32.totalorder %v2279, %v1297
  %vm2344 = vcmp.eq.s32.totalorder %v2280, %v1297
  %vm2345 = vcmp.eq.s32.totalorder %v2281, %v1297
  %vm2346 = vcmp.eq.s32.totalorder %v2282, %v1297
  %vm2347 = vcmp.eq.s32.totalorder %v2283, %v1297
  %vm2348 = vcmp.eq.s32.totalorder %v2284, %v1297
  %vm2349 = vcmp.eq.s32.totalorder %v2285, %v1297
  %vm2350 = vcmp.eq.s32.totalorder %v2286, %v1297
  %vm2351 = vcmp.eq.s32.totalorder %v2287, %v1297
  %vm2352 = vcmp.eq.s32.totalorder %v2288, %v1297
  %vm2353 = vcmp.eq.s32.totalorder %v2289, %v1297
  %vm2354 = vcmp.eq.s32.totalorder %v2290, %v1297
  %vm2355 = vcmp.eq.s32.totalorder %v2291, %v1297
  %vm2356 = vcmp.eq.s32.totalorder %v2292, %v1297
  %vm2357 = vcmp.eq.s32.totalorder %v2293, %v1297
  %vm2358 = vcmp.eq.s32.totalorder %v2294, %v1297
  %vm2359 = vcmp.eq.s32.totalorder %v2295, %v1297
  %vm2360 = vcmp.eq.s32.totalorder %v2296, %v1297
  %vm2361 = vcmp.eq.s32.totalorder %v2297, %v1297
  %vm2362 = vcmp.eq.s32.totalorder %v2298, %v1297
  %vm2363 = vcmp.eq.s32.totalorder %v2299, %v1297
  %vm2364 = vcmp.eq.s32.totalorder %v2300, %v1297
  %vm2365 = vcmp.eq.s32.totalorder %v2301, %v1297
  %vm2366 = vcmp.eq.s32.totalorder %v2302, %v1297
  %vm2367 = vcmp.eq.s32.totalorder %v2303, %v1297
  %vm2368 = vcmp.eq.s32.totalorder %v2304, %v1297
  %vm2369 = vcmp.eq.s32.totalorder %v2305, %v1297
  %vm2370 = vcmp.eq.s32.totalorder %v2306, %v1297
  %vm2371 = vcmp.eq.s32.totalorder %v2307, %v1297
  %vm2372 = vcmp.eq.s32.totalorder %v2308, %v1297
  %vm2373 = vcmp.eq.s32.totalorder %v2309, %v1297
  %vm2374 = vcmp.eq.s32.totalorder %v2310, %v1297
  %vm2375 = vcmp.eq.s32.totalorder %v2311, %v1297
  %vm2376 = vcmp.eq.s32.totalorder %v2312, %v1297
  %vm2377 = vcmp.eq.s32.totalorder %v2313, %v1297
  %vm2378 = vcmp.eq.s32.totalorder %v2314, %v1297
  %vm2379 = vcmp.eq.s32.totalorder %v2315, %v1297
  %vm2380 = vcmp.eq.s32.totalorder %v2316, %v1297
  %vm2381 = vcmp.eq.s32.totalorder %v2317, %v1297
  %vm2382 = vcmp.eq.s32.totalorder %v2318, %v1297
  %vm2383 = vcmp.eq.s32.totalorder %v2319, %v1297
  %vm2384 = vcmp.eq.s32.totalorder %v2320, %v1297
  %vm2385 = vcmp.eq.s32.totalorder %v2321, %v1297
  %vm2386 = vcmp.eq.s32.totalorder %v2322, %v1297
  %vm2387 = vcmp.eq.s32.totalorder %v2323, %v1297
  %vm2388 = vcmp.eq.s32.totalorder %v2324, %v1297
  %vm2389 = vcmp.eq.s32.totalorder %v2325, %v1297
  %vm2390 = vcmp.eq.s32.totalorder %v2326, %v1297
  %vm2391 = vcmp.eq.s32.totalorder %v2327, %v1297
  %vm2392 = vcmp.eq.s32.totalorder %v2328, %v1297
  %vm2393 = vcmp.eq.s32.totalorder %v2329, %v1297
  %vm2394 = vcmp.eq.s32.totalorder %v2330, %v1297
  %vm2395 = vcmp.eq.s32.totalorder %v2331, %v1297
  %vm2396 = vcmp.eq.s32.totalorder %v2332, %v1297
  %vm2397 = vcmp.eq.s32.totalorder %v2333, %v1297
  %vm2398 = vcmp.eq.s32.totalorder %v2334, %v1297
  %vm2399 = vcmp.eq.s32.totalorder %v2335, %v1297
  %vm2400 = vcmp.eq.s32.totalorder %v2336, %v1297
  %vm2401 = vcmp.eq.s32.totalorder %v2337, %v1297
  %vm2402 = vcmp.eq.s32.totalorder %v2338, %v1297
  %vm2403 = vcmp.eq.s32.totalorder %v2339, %v1297
  %v2404 = vsel %vm2340, 1.0, 0.0
  %v2405 = vsel %vm2341, 1.0, 0.0
  %v2406 = vsel %vm2342, 1.0, 0.0
  %v2407 = vsel %vm2343, 1.0, 0.0
  %v2408 = vsel %vm2344, 1.0, 0.0
  %v2409 = vsel %vm2345, 1.0, 0.0
  %v2410 = vsel %vm2346, 1.0, 0.0
  %v2411 = vsel %vm2347, 1.0, 0.0
  %v2412 = vsel %vm2348, 1.0, 0.0
  %v2413 = vsel %vm2349, 1.0, 0.0
  %v2414 = vsel %vm2350, 1.0, 0.0
  %v2415 = vsel %vm2351, 1.0, 0.0
  %v2416 = vsel %vm2352, 1.0, 0.0
  %v2417 = vsel %vm2353, 1.0, 0.0
  %v2418 = vsel %vm2354, 1.0, 0.0
  %v2419 = vsel %vm2355, 1.0, 0.0
  %v2420 = vsel %vm2356, 1.0, 0.0
  %v2421 = vsel %vm2357, 1.0, 0.0
  %v2422 = vsel %vm2358, 1.0, 0.0
  %v2423 = vsel %vm2359, 1.0, 0.0
  %v2424 = vsel %vm2360, 1.0, 0.0
  %v2425 = vsel %vm2361, 1.0, 0.0
  %v2426 = vsel %vm2362, 1.0, 0.0
  %v2427 = vsel %vm2363, 1.0, 0.0
  %v2428 = vsel %vm2364, 1.0, 0.0
  %v2429 = vsel %vm2365, 1.0, 0.0
  %v2430 = vsel %vm2366, 1.0, 0.0
  %v2431 = vsel %vm2367, 1.0, 0.0
  %v2432 = vsel %vm2368, 1.0, 0.0
  %v2433 = vsel %vm2369, 1.0, 0.0
  %v2434 = vsel %vm2370, 1.0, 0.0
  %v2435 = vsel %vm2371, 1.0, 0.0
  %v2436 = vsel %vm2372, 1.0, 0.0
  %v2437 = vsel %vm2373, 1.0, 0.0
  %v2438 = vsel %vm2374, 1.0, 0.0
  %v2439 = vsel %vm2375, 1.0, 0.0
  %v2440 = vsel %vm2376, 1.0, 0.0
  %v2441 = vsel %vm2377, 1.0, 0.0
  %v2442 = vsel %vm2378, 1.0, 0.0
  %v2443 = vsel %vm2379, 1.0, 0.0
  %v2444 = vsel %vm2380, 1.0, 0.0
  %v2445 = vsel %vm2381, 1.0, 0.0
  %v2446 = vsel %vm2382, 1.0, 0.0
  %v2447 = vsel %vm2383, 1.0, 0.0
  %v2448 = vsel %vm2384, 1.0, 0.0
  %v2449 = vsel %vm2385, 1.0, 0.0
  %v2450 = vsel %vm2386, 1.0, 0.0
  %v2451 = vsel %vm2387, 1.0, 0.0
  %v2452 = vsel %vm2388, 1.0, 0.0
  %v2453 = vsel %vm2389, 1.0, 0.0
  %v2454 = vsel %vm2390, 1.0, 0.0
  %v2455 = vsel %vm2391, 1.0, 0.0
  %v2456 = vsel %vm2392, 1.0, 0.0
  %v2457 = vsel %vm2393, 1.0, 0.0
  %v2458 = vsel %vm2394, 1.0, 0.0
  %v2459 = vsel %vm2395, 1.0, 0.0
  %v2460 = vsel %vm2396, 1.0, 0.0
  %v2461 = vsel %vm2397, 1.0, 0.0
  %v2462 = vsel %vm2398, 1.0, 0.0
  %v2463 = vsel %vm2399, 1.0, 0.0
  %v2464 = vsel %vm2400, 1.0, 0.0
  %v2465 = vsel %vm2401, 1.0, 0.0
  %v2466 = vsel %vm2402, 1.0, 0.0
  %v2467 = vsel %vm2403, 1.0, 0.0
  %v2468 = vmul.f32 %v2184, %v876
  %v2469 = vmul.f32 %v2185, %v878
  %v2470 = vmul.f32 %v2186, %v989
  %v2471 = vmul.f32 %v2187, %v991
  %v2472 = vmul.f32 %v2188, %v882
  %v2473 = vmul.f32 %v2189, %v884
  %v2474 = vmul.f32 %v2190, %v995
  %v2475 = vmul.f32 %v2191, %v997
  %v2476 = vmul.f32 %v2192, %v888
  %v2477 = vmul.f32 %v2193, %v890
  %v2478 = vmul.f32 %v2194, %v1001
  %v2479 = vmul.f32 %v2195, %v1003
  %v2480 = vmul.f32 %v2196, %v894
  %v2481 = vmul.f32 %v2197, %v896
  %v2482 = vmul.f32 %v2198, %v1007
  %v2483 = vmul.f32 %v2199, %v1009
  %v2484 = vmul.f32 %v2200, %v900
  %v2485 = vmul.f32 %v2201, %v902
  %v2486 = vmul.f32 %v2202, %v1013
  %v2487 = vmul.f32 %v2203, %v1015
  %v2488 = vmul.f32 %v2204, %v906
  %v2489 = vmul.f32 %v2205, %v908
  %v2490 = vmul.f32 %v2206, %v1019
  %v2491 = vmul.f32 %v2207, %v1021
  %v2492 = vmul.f32 %v2208, %v912
  %v2493 = vmul.f32 %v2209, %v914
  %v2494 = vmul.f32 %v2210, %v1025
  %v2495 = vmul.f32 %v2211, %v1027
  %v2496 = vmul.f32 %v2212, %v918
  %v2497 = vmul.f32 %v2213, %v920
  %v2498 = vmul.f32 %v2214, %v1031
  %v2499 = vmul.f32 %v2215, %v1033
  %v2500 = vlaneseq
  %v2501 = vshrl.u32 %v2500, 7
  %v2502 = vsub.s32 1, %v2501
  %v2503 = vrot.slane %v41, %v2502
  %v2504 = vmul.f32 %v2503, %v515
  %v2505 = vmul.f32 %v2503, %v516
  %v2506 = vmul.f32 %v2503, %v517
  %v2507 = vmul.f32 %v2503, %v518
  %v2508 = vmul.f32 %v2503, %v519
  %v2509 = vmul.f32 %v2503, %v520
  %v2510 = vmul.f32 %v2503, %v521
  %v2511 = vmul.f32 %v2503, %v522
  %2512 = vmatprep.subr.mxu0 0.0
  %2513 = vmatpush1.msra.mxu0 %v2404
  %2514 = vmatprep.subr.mxu0 0.0
  %2515 = vmatpush1.msra.mxu0 %v2405
  %2516 = vmatprep.subr.mxu0 0.0
  %2517 = vmatpush1.msra.mxu0 %v2406
  %2518 = vmatprep.subr.mxu0 0.0
  %2519 = vmatpush1.msra.mxu0 %v2407
  %2520 = vmatprep.subr.mxu0 0.0
  %2521 = vmatpush1.msra.mxu0 %v2408
  %2522 = vmatprep.subr.mxu0 0.0
  %2523 = vmatpush1.msra.mxu0 %v2409
  %2524 = vmatprep.subr.mxu0 0.0
  %2525 = vmatpush1.msra.mxu0 %v2410
  %2526 = vmatprep.subr.mxu0 0.0
  %2527 = vmatpush1.msra.mxu0 %v2411
  %2528 = vmatprep.subr.mxu0 0.0
  %2529 = vmatpush1.msra.mxu0 %v2412
  %2530 = vmatprep.subr.mxu0 0.0
  %2531 = vmatpush1.msra.mxu0 %v2413
  %2532 = vmatprep.subr.mxu0 0.0
  %2533 = vmatpush1.msra.mxu0 %v2414
  %2534 = vmatprep.subr.mxu0 0.0
  %2535 = vmatpush1.msra.mxu0 %v2415
  %2536 = vmatprep.subr.mxu0 0.0
  %2537 = vmatpush1.msra.mxu0 %v2416
  %2538 = vmatprep.subr.mxu0 0.0
  %2539 = vmatpush1.msra.mxu0 %v2417
  %2540 = vmatprep.subr.mxu0 0.0
  %2541 = vmatpush1.msra.mxu0 %v2418
  %2542 = vmatprep.subr.mxu0 0.0
  %2543 = vmatpush1.msra.mxu0 %v2419
  %2544 = vmatprep.subr.mxu0 0.0
  %2545 = vmatpush1.msra.mxu0 %v2420
  %2546 = vmatprep.subr.mxu0 0.0
  %2547 = vmatpush1.msra.mxu0 %v2421
  %2548 = vmatprep.subr.mxu0 0.0
  %2549 = vmatpush1.msra.mxu0 %v2422
  %2550 = vmatprep.subr.mxu0 0.0
  %2551 = vmatpush1.msra.mxu0 %v2423
  %2552 = vmatprep.subr.mxu0 0.0
  %2553 = vmatpush1.msra.mxu0 %v2424
  %2554 = vmatprep.subr.mxu0 0.0
  %2555 = vmatpush1.msra.mxu0 %v2425
  %2556 = vmatprep.subr.mxu0 0.0
  %2557 = vmatpush1.msra.mxu0 %v2426
  %2558 = vmatprep.subr.mxu0 0.0
  %2559 = vmatpush1.msra.mxu0 %v2427
  %2560 = vmatprep.subr.mxu0 0.0
  %2561 = vmatpush1.msra.mxu0 %v2428
  %2562 = vmatprep.subr.mxu0 0.0
  %2563 = vmatpush1.msra.mxu0 %v2429
  %2564 = vmatprep.subr.mxu0 0.0
  %2565 = vmatpush1.msra.mxu0 %v2430
  %2566 = vmatprep.subr.mxu0 0.0
  %2567 = vmatpush1.msra.mxu0 %v2431
  %2568 = vmatprep.subr.mxu0 0.0
  %2569 = vmatpush1.msra.mxu0 %v2432
  %2570 = vmatprep.subr.mxu0 0.0
  %2571 = vmatpush1.msra.mxu0 %v2433
  %2572 = vmatprep.subr.mxu0 0.0
  %2573 = vmatpush1.msra.mxu0 %v2434
  %2574 = vmatprep.subr.mxu0 0.0
  %2575 = vmatpush1.msra.mxu0 %v2435
  %2576 = vmatprep.mubr.f32.mxu0 %v2469
  %2577 = vmatmul.mubr.f32.gmra.mrb[0].mxu0 %v2468
  %v2578 = vpop.f32.mrb[0].mxu0
  %v2579 = vadd.f32 %v2504, %v2578
  %v2580 = vpop.f32.mrb[0].mxu0
  %2581 = vmatprep.mubr.f32.mxu0 %v2473
  %2582 = vmatmul.mubr.f32.gmra.mrb[0].mxu0 %v2472
  %v2583 = vpop.f32.mrb[0].mxu0
  %v2584 = vadd.f32 %v2505, %v2583
  %v2585 = vpop.f32.mrb[0].mxu0
  %2586 = vmatprep.mubr.f32.mxu0 %v2477
  %2587 = vmatmul.mubr.f32.gmra.mrb[0].mxu0 %v2476
  %v2588 = vpop.f32.mrb[0].mxu0
  %v2589 = vadd.f32 %v2506, %v2588
  %v2590 = vpop.f32.mrb[0].mxu0
  %2591 = vmatprep.mubr.f32.mxu0 %v2481
  %2592 = vmatmul.mubr.f32.gmra.mrb[0].mxu0 %v2480
  %v2593 = vpop.f32.mrb[0].mxu0
  %v2594 = vadd.f32 %v2507, %v2593
  %v2595 = vpop.f32.mrb[0].mxu0
  %2596 = vmatprep.mubr.f32.mxu0 %v2485
  %2597 = vmatmul.mubr.f32.gmra.mrb[0].mxu0 %v2484
  %v2598 = vpop.f32.mrb[0].mxu0
  %v2599 = vadd.f32 %v2508, %v2598
  %v2600 = vpop.f32.mrb[0].mxu0
  %2601 = vmatprep.mubr.f32.mxu0 %v2489
  %2602 = vmatmul.mubr.f32.gmra.mrb[0].mxu0 %v2488
  %v2603 = vpop.f32.mrb[0].mxu0
  %v2604 = vadd.f32 %v2509, %v2603
  %v2605 = vpop.f32.mrb[0].mxu0
  %2606 = vmatprep.mubr.f32.mxu0 %v2493
  %2607 = vmatmul.mubr.f32.gmra.mrb[0].mxu0 %v2492
  %v2608 = vpop.f32.mrb[0].mxu0
  %v2609 = vadd.f32 %v2510, %v2608
  %v2610 = vpop.f32.mrb[0].mxu0
  %2611 = vmatprep.mubr.f32.mxu0 %v2497
  %2612 = vmatmul.mubr.f32.gmra.mrb[0].mxu0 %v2496
  %v2613 = vpop.f32.mrb[0].mxu0
  %v2614 = vadd.f32 %v2511, %v2613
  %v2615 = vpop.f32.mrb[0].mxu0
  %2616 = vdwg.mxu0
  %2617 = vmatprep.subr.mxu0 0.0
  %2618 = vmatpush1.msra.mxu0 %v2436
  %2619 = vmatprep.subr.mxu0 0.0
  %2620 = vmatpush1.msra.mxu0 %v2437
  %2621 = vmatprep.subr.mxu0 0.0
  %2622 = vmatpush1.msra.mxu0 %v2438
  %2623 = vmatprep.subr.mxu0 0.0
  %2624 = vmatpush1.msra.mxu0 %v2439
  %2625 = vmatprep.subr.mxu0 0.0
  %2626 = vmatpush1.msra.mxu0 %v2440
  %2627 = vmatprep.subr.mxu0 0.0
  %2628 = vmatpush1.msra.mxu0 %v2441
  %2629 = vmatprep.subr.mxu0 0.0
  %2630 = vmatpush1.msra.mxu0 %v2442
  %2631 = vmatprep.subr.mxu0 0.0
  %2632 = vmatpush1.msra.mxu0 %v2443
  %2633 = vmatprep.subr.mxu0 0.0
  %2634 = vmatpush1.msra.mxu0 %v2444
  %2635 = vmatprep.subr.mxu0 0.0
  %2636 = vmatpush1.msra.mxu0 %v2445
  %2637 = vmatprep.subr.mxu0 0.0
  %2638 = vmatpush1.msra.mxu0 %v2446
  %2639 = vmatprep.subr.mxu0 0.0
  %2640 = vmatpush1.msra.mxu0 %v2447
  %2641 = vmatprep.subr.mxu0 0.0
  %2642 = vmatpush1.msra.mxu0 %v2448
  %2643 = vmatprep.subr.mxu0 0.0
  %2644 = vmatpush1.msra.mxu0 %v2449
  %2645 = vmatprep.subr.mxu0 0.0
  %2646 = vmatpush1.msra.mxu0 %v2450
  %2647 = vmatprep.subr.mxu0 0.0
  %2648 = vmatpush1.msra.mxu0 %v2451
  %2649 = vmatprep.subr.mxu0 0.0
  %2650 = vmatpush1.msra.mxu0 %v2452
  %2651 = vmatprep.subr.mxu0 0.0
  %2652 = vmatpush1.msra.mxu0 %v2453
  %2653 = vmatprep.subr.mxu0 0.0
  %2654 = vmatpush1.msra.mxu0 %v2454
  %2655 = vmatprep.subr.mxu0 0.0
  %2656 = vmatpush1.msra.mxu0 %v2455
  %2657 = vmatprep.subr.mxu0 0.0
  %2658 = vmatpush1.msra.mxu0 %v2456
  %2659 = vmatprep.subr.mxu0 0.0
  %2660 = vmatpush1.msra.mxu0 %v2457
  %2661 = vmatprep.subr.mxu0 0.0
  %2662 = vmatpush1.msra.mxu0 %v2458
  %2663 = vmatprep.subr.mxu0 0.0
  %2664 = vmatpush1.msra.mxu0 %v2459
  %2665 = vmatprep.subr.mxu0 0.0
  %2666 = vmatpush1.msra.mxu0 %v2460
  %2667 = vmatprep.subr.mxu0 0.0
  %2668 = vmatpush1.msra.mxu0 %v2461
  %2669 = vmatprep.subr.mxu0 0.0
  %2670 = vmatpush1.msra.mxu0 %v2462
  %2671 = vmatprep.subr.mxu0 0.0
  %2672 = vmatpush1.msra.mxu0 %v2463
  %2673 = vmatprep.subr.mxu0 0.0
  %2674 = vmatpush1.msra.mxu0 %v2464
  %2675 = vmatprep.subr.mxu0 0.0
  %2676 = vmatpush1.msra.mxu0 %v2465
  %2677 = vmatprep.subr.mxu0 0.0
  %2678 = vmatpush1.msra.mxu0 %v2466
  %2679 = vmatprep.subr.mxu0 0.0
  %2680 = vmatpush1.msra.mxu0 %v2467
  %2681 = vmatprep.mubr.f32.mxu0 %v2471
  %2682 = vmatmul.mubr.f32.gmra.mrb[0].mxu0 %v2470
  %v2683 = vpop.f32.mrb[0].mxu0
  %v2684 = vadd.f32 %v2579, %v2683
  %v2685 = vpop.f32.mrb[0].mxu0
  %2686 = vmatprep.mubr.f32.mxu0 %v2475
  %2687 = vmatmul.mubr.f32.gmra.mrb[0].mxu0 %v2474
  %v2688 = vpop.f32.mrb[0].mxu0
  %v2689 = vadd.f32 %v2584, %v2688
  %v2690 = vpop.f32.mrb[0].mxu0
  %2691 = vmatprep.mubr.f32.mxu0 %v2479
  %2692 = vmatmul.mubr.f32.gmra.mrb[0].mxu0 %v2478
  %v2693 = vpop.f32.mrb[0].mxu0
  %v2694 = vadd.f32 %v2589, %v2693
  %v2695 = vpop.f32.mrb[0].mxu0
  %2696 = vmatprep.mubr.f32.mxu0 %v2483
  %2697 = vmatmul.mubr.f32.gmra.mrb[0].mxu0 %v2482
  %v2698 = vpop.f32.mrb[0].mxu0
  %v2699 = vadd.f32 %v2594, %v2698
  %v2700 = vpop.f32.mrb[0].mxu0
  %2701 = vmatprep.mubr.f32.mxu0 %v2487
  %2702 = vmatmul.mubr.f32.gmra.mrb[0].mxu0 %v2486
  %v2703 = vpop.f32.mrb[0].mxu0
  %v2704 = vadd.f32 %v2599, %v2703
  %v2705 = vpop.f32.mrb[0].mxu0
  %2706 = vmatprep.mubr.f32.mxu0 %v2491
  %2707 = vmatmul.mubr.f32.gmra.mrb[0].mxu0 %v2490
  %v2708 = vpop.f32.mrb[0].mxu0
  %v2709 = vadd.f32 %v2604, %v2708
  %v2710 = vpop.f32.mrb[0].mxu0
  %2711 = vmatprep.mubr.f32.mxu0 %v2495
  %2712 = vmatmul.mubr.f32.gmra.mrb[0].mxu0 %v2494
  %v2713 = vpop.f32.mrb[0].mxu0
  %v2714 = vadd.f32 %v2609, %v2713
  %v2715 = vpop.f32.mrb[0].mxu0
  %2716 = vmatprep.mubr.f32.mxu0 %v2499
  %2717 = vmatmul.mubr.f32.gmra.mrb[0].mxu0 %v2498
  %v2718 = vpop.f32.mrb[0].mxu0
  %v2719 = vadd.f32 %v2614, %v2718
  %v2720 = vpop.f32.mrb[0].mxu0
  %2721 = vdwg.mxu0
  %v2722 = vxor.u32 %v343, 2147483648
  %v2723 = vxor.u32 %v348, 2147483648
  %v2724 = vxor.u32 %v353, 2147483648
  %v2725 = vxor.u32 %v358, 2147483648
  %v2726 = vxor.u32 %v363, 2147483648
  %v2727 = vxor.u32 %v368, 2147483648
  %v2728 = vxor.u32 %v373, 2147483648
  %v2729 = vxor.u32 %v378, 2147483648
  %v2730 = vmul.f32 %v2722, 1.442695
  %v2731 = vpow.pop %v2730
  %v2732 = vmul.f32 %v2723, 1.442695
  %v2733 = vpow.pop %v2732
  %v2734 = vmul.f32 %v2724, 1.442695
  %v2735 = vpow.pop %v2734
  %v2736 = vmul.f32 %v2725, 1.442695
  %v2737 = vpow.pop %v2736
  %v2738 = vmul.f32 %v2726, 1.442695
  %v2739 = vpow.pop %v2738
  %v2740 = vmul.f32 %v2727, 1.442695
  %v2741 = vpow.pop %v2740
  %v2742 = vmul.f32 %v2728, 1.442695
  %v2743 = vpow.pop %v2742
  %v2744 = vmul.f32 %v2729, 1.442695
  %v2745 = vpow.pop %v2744
  %v2746 = vadd.f32 %v2731, 1.0
  %v2747 = vadd.f32 %v2733, 1.0
  %v2748 = vadd.f32 %v2735, 1.0
  %v2749 = vadd.f32 %v2737, 1.0
  %v2750 = vadd.f32 %v2739, 1.0
  %v2751 = vadd.f32 %v2741, 1.0
  %v2752 = vadd.f32 %v2743, 1.0
  %v2753 = vadd.f32 %v2745, 1.0
  %v2754 = vrcp.pop %v2746
  %v2755 = vmul.f32 1.0, %v2754
  %v2756 = vrcp.pop %v2747
  %v2757 = vmul.f32 1.0, %v2756
  %v2758 = vrcp.pop %v2748
  %v2759 = vmul.f32 1.0, %v2758
  %v2760 = vrcp.pop %v2749
  %v2761 = vmul.f32 1.0, %v2760
  %v2762 = vrcp.pop %v2750
  %v2763 = vmul.f32 1.0, %v2762
  %v2764 = vrcp.pop %v2751
  %v2765 = vmul.f32 1.0, %v2764
  %v2766 = vrcp.pop %v2752
  %v2767 = vmul.f32 1.0, %v2766
  %v2768 = vrcp.pop %v2753
  %v2769 = vmul.f32 1.0, %v2768
  %v2770 = vmul.f32 %v343, %v2755
  %v2771 = vmul.f32 %v348, %v2757
  %v2772 = vmul.f32 %v353, %v2759
  %v2773 = vmul.f32 %v358, %v2761
  %v2774 = vmul.f32 %v363, %v2763
  %v2775 = vmul.f32 %v368, %v2765
  %v2776 = vmul.f32 %v373, %v2767
  %v2777 = vmul.f32 %v378, %v2769
  %2786 = vrot.lane.b32.xlu0 %v2770, 96
  %v2787 = vpop.permute.xlu0 %2786
  %2788 = vrot.lane.b32.xlu0 %v2771, 96
  %v2789 = vpop.permute.xlu0 %2788
  %2790 = vrot.lane.b32.xlu0 %v2772, 96
  %v2791 = vpop.permute.xlu0 %2790
  %2792 = vrot.lane.b32.xlu0 %v2773, 96
  %v2793 = vpop.permute.xlu0 %2792
  %2794 = vrot.lane.b32.xlu0 %v2774, 96
  %v2795 = vpop.permute.xlu0 %2794
  %2796 = vrot.lane.b32.xlu0 %v2775, 96
  %v2797 = vpop.permute.xlu0 %2796
  %2798 = vrot.lane.b32.xlu0 %v2776, 96
  %v2799 = vpop.permute.xlu0 %2798
  %2800 = vrot.lane.b32.xlu0 %v2777, 96
  %v2801 = vpop.permute.xlu0 %2800
  %v2810 = vmul.f32 %v2684, %v2787
  %v2811 = vmul.f32 %v2689, %v2789
  %v2812 = vmul.f32 %v2694, %v2791
  %v2813 = vmul.f32 %v2699, %v2793
  %v2814 = vmul.f32 %v2704, %v2795
  %v2815 = vmul.f32 %v2709, %v2797
  %v2816 = vmul.f32 %v2714, %v2799
  %v2817 = vmul.f32 %v2719, %v2801
  %v2818 = vld [vmem:[%s5] sm:$0xff]
  %v2819 = vld [vmem:[%s5 + $0x8] sm:$0xff]
  %v2820 = vld [vmem:[%s5 + $0x10] sm:$0xff]
  %v2821 = vld [vmem:[%s5 + $0x18] sm:$0xff]
  %v2823 = vsel %vm42, %v2810, 0
  %v2826 = vsel %vm42, %v2811, 0
  %v2829 = vsel %vm42, %v2812, 0
  %v2832 = vsel %vm42, %v2813, 0
  %v2835 = vsel %vm42, %v2814, 0
  %v2838 = vsel %vm42, %v2815, 0
  %v2841 = vsel %vm42, %v2816, 0
  %v2844 = vsel %vm42, %v2817, 0
  %2846 = vmatprep.subr.mxu0 0.0
  %2847 = vmatpush1.msra.mxu0 %v2818
  %2848 = vmatprep.subr.mxu0 0.0
  %2849 = vmatpush1.msra.mxu0 %v2819
  %2850 = vmatprep.subr.mxu0 0.0
  %2851 = vmatpush1.msra.mxu0 %v2820
  %2852 = vmatprep.subr.mxu0 0.0
  %2853 = vmatpush1.msra.mxu0 %v2821
  %2854 = vmatprep.subr.mxu0 0.0
  %2855 = vmatpush1.msra.mxu0 0.0
  %2856 = vmatprep.subr.mxu0 0.0
  %2857 = vmatpush1.msra.mxu0 0.0
  %2858 = vmatprep.subr.mxu0 0.0
  %2859 = vmatpush1.msra.mxu0 0.0
  %2860 = vmatprep.subr.mxu0 0.0
  %2861 = vmatpush1.msra.mxu0 0.0
  %2862 = vmatprep.subr.mxu0 0.0
  %2863 = vmatpush1.msra.mxu0 0.0
  %2864 = vmatprep.subr.mxu0 0.0
  %2865 = vmatpush1.msra.mxu0 0.0
  %2866 = vmatprep.subr.mxu0 0.0
  %2867 = vmatpush1.msra.mxu0 0.0
  %2868 = vmatprep.subr.mxu0 0.0
  %2869 = vmatpush1.msra.mxu0 0.0
  %2870 = vmatprep.subr.mxu0 0.0
  %2871 = vmatpush1.msra.mxu0 0.0
  %2872 = vmatprep.subr.mxu0 0.0
  %2873 = vmatpush1.msra.mxu0 0.0
  %2874 = vmatprep.subr.mxu0 0.0
  %2875 = vmatpush1.msra.mxu0 0.0
  %2876 = vmatprep.subr.mxu0 0.0
  %2877 = vmatpush1.msra.mxu0 0.0
  %2878 = vmatprep.subr.mxu0 0.0
  %2879 = vmatpush1.msra.mxu0 0.0
  %2880 = vmatprep.subr.mxu0 0.0
  %2881 = vmatpush1.msra.mxu0 0.0
  %2882 = vmatprep.subr.mxu0 0.0
  %2883 = vmatpush1.msra.mxu0 0.0
  %2884 = vmatprep.subr.mxu0 0.0
  %2885 = vmatpush1.msra.mxu0 0.0
  %2886 = vmatprep.subr.mxu0 0.0
  %2887 = vmatpush1.msra.mxu0 0.0
  %2888 = vmatprep.subr.mxu0 0.0
  %2889 = vmatpush1.msra.mxu0 0.0
  %2890 = vmatprep.subr.mxu0 0.0
  %2891 = vmatpush1.msra.mxu0 0.0
  %2892 = vmatprep.subr.mxu0 0.0
  %2893 = vmatpush1.msra.mxu0 0.0
  %2894 = vmatprep.subr.mxu0 0.0
  %2895 = vmatpush1.msra.mxu0 0.0
  %2896 = vmatprep.subr.mxu0 0.0
  %2897 = vmatpush1.msra.mxu0 0.0
  %2898 = vmatprep.subr.mxu0 0.0
  %2899 = vmatpush1.msra.mxu0 0.0
  %2900 = vmatprep.subr.mxu0 0.0
  %2901 = vmatpush1.msra.mxu0 0.0
  %2902 = vmatprep.subr.mxu0 0.0
  %2903 = vmatpush1.msra.mxu0 0.0
  %2904 = vmatprep.subr.mxu0 0.0
  %2905 = vmatpush1.msra.mxu0 0.0
  %2906 = vmatprep.subr.mxu0 0.0
  %2907 = vmatpush1.msra.mxu0 0.0
  %2908 = vmatprep.subr.mxu0 0.0
  %2909 = vmatpush1.msra.mxu0 0.0
  %2910 = vmatprep.mubr.f32.mxu0 0.0
  %2911 = vmatmul.mubr.f32.gmra.mrb[0].mxu0 %v2823
  %v2912 = vpop.f32.mrb[0].mxu0
  %v2913 = vadd.f32 0.0, %v2912
  %v2914 = vpop.f32.mrb[0].mxu0
  %2915 = vmatprep.mubr.f32.mxu0 0.0
  %2916 = vmatmul.mubr.f32.gmra.mrb[0].mxu0 %v2826
  %v2917 = vpop.f32.mrb[0].mxu0
  %v2918 = vadd.f32 0.0, %v2917
  %v2919 = vpop.f32.mrb[0].mxu0
  %2920 = vmatprep.mubr.f32.mxu0 0.0
  %2921 = vmatmul.mubr.f32.gmra.mrb[0].mxu0 %v2829
  %v2922 = vpop.f32.mrb[0].mxu0
  %v2923 = vadd.f32 0.0, %v2922
  %v2924 = vpop.f32.mrb[0].mxu0
  %2925 = vmatprep.mubr.f32.mxu0 0.0
  %2926 = vmatmul.mubr.f32.gmra.mrb[0].mxu0 %v2832
  %v2927 = vpop.f32.mrb[0].mxu0
  %v2928 = vadd.f32 0.0, %v2927
  %v2929 = vpop.f32.mrb[0].mxu0
  %2930 = vmatprep.mubr.f32.mxu0 0.0
  %2931 = vmatmul.mubr.f32.gmra.mrb[0].mxu0 %v2835
  %v2932 = vpop.f32.mrb[0].mxu0
  %v2933 = vadd.f32 0.0, %v2932
  %v2934 = vpop.f32.mrb[0].mxu0
  %2935 = vmatprep.mubr.f32.mxu0 0.0
  %2936 = vmatmul.mubr.f32.gmra.mrb[0].mxu0 %v2838
  %v2937 = vpop.f32.mrb[0].mxu0
  %v2938 = vadd.f32 0.0, %v2937
  %v2939 = vpop.f32.mrb[0].mxu0
  %2940 = vmatprep.mubr.f32.mxu0 0.0
  %2941 = vmatmul.mubr.f32.gmra.mrb[0].mxu0 %v2841
  %v2942 = vpop.f32.mrb[0].mxu0
  %v2943 = vadd.f32 0.0, %v2942
  %v2944 = vpop.f32.mrb[0].mxu0
  %2945 = vmatprep.mubr.f32.mxu0 0.0
  %2946 = vmatmul.mubr.f32.gmra.mrb[0].mxu0 %v2844
  %v2947 = vpop.f32.mrb[0].mxu0
  %v2948 = vadd.f32 0.0, %v2947
  %v2949 = vpop.f32.mrb[0].mxu0
  %2950 = vdwg.mxu0
  %v2951 = vadd.f32 %v32, %v2913
  %v2952 = vadd.f32 %v33, %v2918
  %v2953 = vadd.f32 %v34, %v2923
  %v2954 = vadd.f32 %v35, %v2928
  %v2955 = vadd.f32 %v36, %v2933
  %v2956 = vadd.f32 %v37, %v2938
  %v2957 = vadd.f32 %v38, %v2943
  %v2958 = vadd.f32 %v39, %v2948
  %v2959 = vadd.f32 %v2951, %v164
  %v2960 = vadd.f32 %v2952, %v165
  %v2961 = vadd.f32 %v2953, %v166
  %v2962 = vadd.f32 %v2954, %v167
  %v2963 = vadd.f32 %v2955, %v168
  %v2964 = vadd.f32 %v2956, %v169
  %v2965 = vadd.f32 %v2957, %v170
  %v2966 = vadd.f32 %v2958, %v171
  %v2967 = vsel %vm42, %v2959, 0.0
  %2968 = vadd.xlane.f32.xlu0 %v2967
  %v2969 = vpop.xlane.xlu0 %2968
  %v2970 = vsel %vm42, %v2960, 0.0
  %2971 = vadd.xlane.f32.xlu0 %v2970
  %v2972 = vpop.xlane.xlu0 %2971
  %v2973 = vsel %vm42, %v2961, 0.0
  %2974 = vadd.xlane.f32.xlu0 %v2973
  %v2975 = vpop.xlane.xlu0 %2974
  %v2976 = vsel %vm42, %v2962, 0.0
  %2977 = vadd.xlane.f32.xlu0 %v2976
  %v2978 = vpop.xlane.xlu0 %2977
  %v2979 = vsel %vm42, %v2963, 0.0
  %2980 = vadd.xlane.f32.xlu0 %v2979
  %v2981 = vpop.xlane.xlu0 %2980
  %v2982 = vsel %vm42, %v2964, 0.0
  %2983 = vadd.xlane.f32.xlu0 %v2982
  %v2984 = vpop.xlane.xlu0 %2983
  %v2985 = vsel %vm42, %v2965, 0.0
  %2986 = vadd.xlane.f32.xlu0 %v2985
  %v2987 = vpop.xlane.xlu0 %2986
  %v2988 = vsel %vm42, %v2966, 0.0
  %2989 = vadd.xlane.f32.xlu0 %v2988
  %v2990 = vpop.xlane.xlu0 %2989
  %v2991 = vmul.f32 %v2969, %v67
  %v2992 = vmul.f32 %v2972, %v67
  %v2993 = vmul.f32 %v2975, %v67
  %v2994 = vmul.f32 %v2978, %v67
  %v2995 = vmul.f32 %v2981, %v67
  %v2996 = vmul.f32 %v2984, %v67
  %v2997 = vmul.f32 %v2987, %v67
  %v2998 = vmul.f32 %v2990, %v67
  %v2999 = vsub.f32 %v2959, %v2991
  %v3000 = vsub.f32 %v2960, %v2992
  %v3001 = vsub.f32 %v2961, %v2993
  %v3002 = vsub.f32 %v2962, %v2994
  %v3003 = vsub.f32 %v2963, %v2995
  %v3004 = vsub.f32 %v2964, %v2996
  %v3005 = vsub.f32 %v2965, %v2997
  %v3006 = vsub.f32 %v2966, %v2998
  %v3007 = vmul.f32 %v2999, %v2999
  %v3008 = vmul.f32 %v3000, %v3000
  %v3009 = vmul.f32 %v3001, %v3001
  %v3010 = vmul.f32 %v3002, %v3002
  %v3011 = vmul.f32 %v3003, %v3003
  %v3012 = vmul.f32 %v3004, %v3004
  %v3013 = vmul.f32 %v3005, %v3005
  %v3014 = vmul.f32 %v3006, %v3006
  %v3015 = vsel %vm42, %v3007, 0.0
  %3016 = vadd.xlane.f32.xlu0 %v3015
  %v3017 = vpop.xlane.xlu0 %3016
  %v3018 = vsel %vm42, %v3008, 0.0
  %3019 = vadd.xlane.f32.xlu0 %v3018
  %v3020 = vpop.xlane.xlu0 %3019
  %v3021 = vsel %vm42, %v3009, 0.0
  %3022 = vadd.xlane.f32.xlu0 %v3021
  %v3023 = vpop.xlane.xlu0 %3022
  %v3024 = vsel %vm42, %v3010, 0.0
  %3025 = vadd.xlane.f32.xlu0 %v3024
  %v3026 = vpop.xlane.xlu0 %3025
  %v3027 = vsel %vm42, %v3011, 0.0
  %3028 = vadd.xlane.f32.xlu0 %v3027
  %v3029 = vpop.xlane.xlu0 %3028
  %v3030 = vsel %vm42, %v3012, 0.0
  %3031 = vadd.xlane.f32.xlu0 %v3030
  %v3032 = vpop.xlane.xlu0 %3031
  %v3033 = vsel %vm42, %v3013, 0.0
  %3034 = vadd.xlane.f32.xlu0 %v3033
  %v3035 = vpop.xlane.xlu0 %3034
  %v3036 = vsel %vm42, %v3014, 0.0
  %3037 = vadd.xlane.f32.xlu0 %v3036
  %v3038 = vpop.xlane.xlu0 %3037
  %v3039 = vmul.f32 %v3017, %v67
  %v3040 = vmul.f32 %v3020, %v67
  %v3041 = vmul.f32 %v3023, %v67
  %v3042 = vmul.f32 %v3026, %v67
  %v3043 = vmul.f32 %v3029, %v67
  %v3044 = vmul.f32 %v3032, %v67
  %v3045 = vmul.f32 %v3035, %v67
  %v3046 = vmul.f32 %v3038, %v67
  %v3047 = vadd.f32 %v3039, 1e-05
  %v3048 = vadd.f32 %v3040, 1e-05
  %v3049 = vadd.f32 %v3041, 1e-05
  %v3050 = vadd.f32 %v3042, 1e-05
  %v3051 = vadd.f32 %v3043, 1e-05
  %v3052 = vadd.f32 %v3044, 1e-05
  %v3053 = vadd.f32 %v3045, 1e-05
  %v3054 = vadd.f32 %v3046, 1e-05
  %v3055 = vrsqrt.pop %v3047
  %v3056 = vrsqrt.pop %v3048
  %v3057 = vrsqrt.pop %v3049
  %v3058 = vrsqrt.pop %v3050
  %v3059 = vrsqrt.pop %v3051
  %v3060 = vrsqrt.pop %v3052
  %v3061 = vrsqrt.pop %v3053
  %v3062 = vrsqrt.pop %v3054
  %v3063 = vmul.f32 %v2999, %v3055
  %v3064 = vmul.f32 %v3000, %v3056
  %v3065 = vmul.f32 %v3001, %v3057
  %v3066 = vmul.f32 %v3002, %v3058
  %v3067 = vmul.f32 %v3003, %v3059
  %v3068 = vmul.f32 %v3004, %v3060
  %v3069 = vmul.f32 %v3005, %v3061
  %v3070 = vmul.f32 %v3006, %v3062
  %v3071 = vlaneseq
  %v3072 = vshrl.u32 %v3071, 7
  %v3073 = vsub.s32 2, %v3072
  %v3074 = vrot.slane %v41, %v3073
  %v3075 = vmul.f32 %v3063, %v3074
  %v3076 = vmul.f32 %v3064, %v3074
  %v3077 = vmul.f32 %v3065, %v3074
  %v3078 = vmul.f32 %v3066, %v3074
  %v3079 = vmul.f32 %v3067, %v3074
  %v3080 = vmul.f32 %v3068, %v3074
  %v3081 = vmul.f32 %v3069, %v3074
  %v3082 = vmul.f32 %v3070, %v3074
  %v3083 = vlaneseq
  %v3084 = vshrl.u32 %v3083, 7
  %v3085 = vsub.s32 3, %v3084
  %v3086 = vrot.slane %v41, %v3085
  %v3087 = vadd.f32 %v3075, %v3086
  %v3088 = vadd.f32 %v3076, %v3086
  %v3089 = vadd.f32 %v3077, %v3086
  %v3090 = vadd.f32 %v3078, %v3086
  %v3091 = vadd.f32 %v3079, %v3086
  %v3092 = vadd.f32 %v3080, %v3086
  %v3093 = vadd.f32 %v3081, %v3086
  %v3094 = vadd.f32 %v3082, %v3086
  %v3095 = vld [vmem:[%s6] sm:$0xff]
  %v3096 = vld [vmem:[%s6 + $0x8] sm:$0xff]
  %v3097 = vld [vmem:[%s6 + $0x10] sm:$0xff]
  %v3098 = vld [vmem:[%s6 + $0x18] sm:$0xff]
  %v3099 = vld [vmem:[%s7] sm:$0x1]
  %v3101 = vlaneseq
  %v3102 = vshrl.u32 %v3101, 7
  %v3103 = vsub.s32 0, %v3102
  %v3104 = vrot.slane %v3099, %v3103
  %v3107 = vsel %vm42, %v3087, 0
  %v3110 = vsel %vm42, %v3088, 0
  %v3113 = vsel %vm42, %v3089, 0
  %v3116 = vsel %vm42, %v3090, 0
  %v3119 = vsel %vm42, %v3091, 0
  %v3122 = vsel %vm42, %v3092, 0
  %v3125 = vsel %vm42, %v3093, 0
  %v3128 = vsel %vm42, %v3094, 0
  %3130 = vmatprep.subr.mxu0 0.0
  %3131 = vmatpush1.msra.mxu0 %v3095
  %3132 = vmatprep.subr.mxu0 0.0
  %3133 = vmatpush1.msra.mxu0 %v3096
  %3134 = vmatprep.subr.mxu0 0.0
  %3135 = vmatpush1.msra.mxu0 %v3097
  %3136 = vmatprep.subr.mxu0 0.0
  %3137 = vmatpush1.msra.mxu0 %v3098
  %3138 = vmatprep.subr.mxu0 0.0
  %3139 = vmatpush1.msra.mxu0 0.0
  %3140 = vmatprep.subr.mxu0 0.0
  %3141 = vmatpush1.msra.mxu0 0.0
  %3142 = vmatprep.subr.mxu0 0.0
  %3143 = vmatpush1.msra.mxu0 0.0
  %3144 = vmatprep.subr.mxu0 0.0
  %3145 = vmatpush1.msra.mxu0 0.0
  %3146 = vmatprep.subr.mxu0 0.0
  %3147 = vmatpush1.msra.mxu0 0.0
  %3148 = vmatprep.subr.mxu0 0.0
  %3149 = vmatpush1.msra.mxu0 0.0
  %3150 = vmatprep.subr.mxu0 0.0
  %3151 = vmatpush1.msra.mxu0 0.0
  %3152 = vmatprep.subr.mxu0 0.0
  %3153 = vmatpush1.msra.mxu0 0.0
  %3154 = vmatprep.subr.mxu0 0.0
  %3155 = vmatpush1.msra.mxu0 0.0
  %3156 = vmatprep.subr.mxu0 0.0
  %3157 = vmatpush1.msra.mxu0 0.0
  %3158 = vmatprep.subr.mxu0 0.0
  %3159 = vmatpush1.msra.mxu0 0.0
  %3160 = vmatprep.subr.mxu0 0.0
  %3161 = vmatpush1.msra.mxu0 0.0
  %3162 = vmatprep.subr.mxu0 0.0
  %3163 = vmatpush1.msra.mxu0 0.0
  %3164 = vmatprep.subr.mxu0 0.0
  %3165 = vmatpush1.msra.mxu0 0.0
  %3166 = vmatprep.subr.mxu0 0.0
  %3167 = vmatpush1.msra.mxu0 0.0
  %3168 = vmatprep.subr.mxu0 0.0
  %3169 = vmatpush1.msra.mxu0 0.0
  %3170 = vmatprep.subr.mxu0 0.0
  %3171 = vmatpush1.msra.mxu0 0.0
  %3172 = vmatprep.subr.mxu0 0.0
  %3173 = vmatpush1.msra.mxu0 0.0
  %3174 = vmatprep.subr.mxu0 0.0
  %3175 = vmatpush1.msra.mxu0 0.0
  %3176 = vmatprep.subr.mxu0 0.0
  %3177 = vmatpush1.msra.mxu0 0.0
  %3178 = vmatprep.subr.mxu0 0.0
  %3179 = vmatpush1.msra.mxu0 0.0
  %3180 = vmatprep.subr.mxu0 0.0
  %3181 = vmatpush1.msra.mxu0 0.0
  %3182 = vmatprep.subr.mxu0 0.0
  %3183 = vmatpush1.msra.mxu0 0.0
  %3184 = vmatprep.subr.mxu0 0.0
  %3185 = vmatpush1.msra.mxu0 0.0
  %3186 = vmatprep.subr.mxu0 0.0
  %3187 = vmatpush1.msra.mxu0 0.0
  %3188 = vmatprep.subr.mxu0 0.0
  %3189 = vmatpush1.msra.mxu0 0.0
  %3190 = vmatprep.subr.mxu0 0.0
  %3191 = vmatpush1.msra.mxu0 0.0
  %3192 = vmatprep.subr.mxu0 0.0
  %3193 = vmatpush1.msra.mxu0 0.0
  %3194 = vmatprep.mubr.f32.mxu0 0.0
  %3195 = vmatmul.mubr.f32.gmra.mrb[0].mxu0 %v3107
  %v3196 = vpop.f32.mrb[0].mxu0
  %v3197 = vadd.f32 %v3104, %v3196
  %v3198 = vpop.f32.mrb[0].mxu0
  %3199 = vmatprep.mubr.f32.mxu0 0.0
  %3200 = vmatmul.mubr.f32.gmra.mrb[0].mxu0 %v3110
  %v3201 = vpop.f32.mrb[0].mxu0
  %v3202 = vadd.f32 %v3104, %v3201
  %v3203 = vpop.f32.mrb[0].mxu0
  %3204 = vmatprep.mubr.f32.mxu0 0.0
  %3205 = vmatmul.mubr.f32.gmra.mrb[0].mxu0 %v3113
  %v3206 = vpop.f32.mrb[0].mxu0
  %v3207 = vadd.f32 %v3104, %v3206
  %v3208 = vpop.f32.mrb[0].mxu0
  %3209 = vmatprep.mubr.f32.mxu0 0.0
  %3210 = vmatmul.mubr.f32.gmra.mrb[0].mxu0 %v3116
  %v3211 = vpop.f32.mrb[0].mxu0
  %v3212 = vadd.f32 %v3104, %v3211
  %v3213 = vpop.f32.mrb[0].mxu0
  %3214 = vmatprep.mubr.f32.mxu0 0.0
  %3215 = vmatmul.mubr.f32.gmra.mrb[0].mxu0 %v3119
  %v3216 = vpop.f32.mrb[0].mxu0
  %v3217 = vadd.f32 %v3104, %v3216
  %v3218 = vpop.f32.mrb[0].mxu0
  %3219 = vmatprep.mubr.f32.mxu0 0.0
  %3220 = vmatmul.mubr.f32.gmra.mrb[0].mxu0 %v3122
  %v3221 = vpop.f32.mrb[0].mxu0
  %v3222 = vadd.f32 %v3104, %v3221
  %v3223 = vpop.f32.mrb[0].mxu0
  %3224 = vmatprep.mubr.f32.mxu0 0.0
  %3225 = vmatmul.mubr.f32.gmra.mrb[0].mxu0 %v3125
  %v3226 = vpop.f32.mrb[0].mxu0
  %v3227 = vadd.f32 %v3104, %v3226
  %v3228 = vpop.f32.mrb[0].mxu0
  %3229 = vmatprep.mubr.f32.mxu0 0.0
  %3230 = vmatmul.mubr.f32.gmra.mrb[0].mxu0 %v3128
  %v3231 = vpop.f32.mrb[0].mxu0
  %v3232 = vadd.f32 %v3104, %v3231
  %v3233 = vpop.f32.mrb[0].mxu0
  %3234 = vdwg.mxu0
  %v3235 = vmax.f32 %v3197, 0.0
  %v3236 = vmax.f32 %v3202, 0.0
  %v3237 = vmax.f32 %v3207, 0.0
  %v3238 = vmax.f32 %v3212, 0.0
  %v3239 = vmax.f32 %v3217, 0.0
  %v3240 = vmax.f32 %v3222, 0.0
  %v3241 = vmax.f32 %v3227, 0.0
  %v3242 = vmax.f32 %v3232, 0.0
  %v3243 = vld [vmem:[%s8] sm:$0xff]
  %v3244 = vld [vmem:[%s8 + $0x8] sm:$0xff]
  %v3245 = vld [vmem:[%s8 + $0x10] sm:$0xff]
  %v3246 = vld [vmem:[%s8 + $0x18] sm:$0xff]
  %v3247 = vld [vmem:[%s8 + $0x20] sm:$0xff]
  %v3248 = vld [vmem:[%s8 + $0x28] sm:$0xff]
  %v3249 = vld [vmem:[%s8 + $0x30] sm:$0xff]
  %v3250 = vld [vmem:[%s8 + $0x38] sm:$0xff]
  %v3251 = vld [vmem:[%s8 + $0x40] sm:$0xff]
  %v3252 = vld [vmem:[%s8 + $0x48] sm:$0xff]
  %v3253 = vld [vmem:[%s8 + $0x50] sm:$0xff]
  %v3254 = vld [vmem:[%s8 + $0x58] sm:$0xff]
  %v3255 = vld [vmem:[%s8 + $0x60] sm:$0xff]
  %v3256 = vld [vmem:[%s8 + $0x68] sm:$0xff]
  %v3257 = vld [vmem:[%s8 + $0x70] sm:$0xff]
  %v3258 = vld [vmem:[%s8 + $0x78] sm:$0xff]
  %v3259 = vlaneseq
  %v3260 = vshrl.u32 %v3259, 7
  %v3261 = vsub.s32 4, %v3260
  %v3262 = vrot.slane %v41, %v3261
  %3263 = vmatprep.subr.mxu0 0.0
  %3264 = vmatpush1.msra.mxu0 %v3243
  %3265 = vmatprep.subr.mxu0 0.0
  %3266 = vmatpush1.msra.mxu0 %v3244
  %3267 = vmatprep.subr.mxu0 0.0
  %3268 = vmatpush1.msra.mxu0 %v3245
  %3269 = vmatprep.subr.mxu0 0.0
  %3270 = vmatpush1.msra.mxu0 %v3246
  %3271 = vmatprep.subr.mxu0 0.0
  %3272 = vmatpush1.msra.mxu0 %v3247
  %3273 = vmatprep.subr.mxu0 0.0
  %3274 = vmatpush1.msra.mxu0 %v3248
  %3275 = vmatprep.subr.mxu0 0.0
  %3276 = vmatpush1.msra.mxu0 %v3249
  %3277 = vmatprep.subr.mxu0 0.0
  %3278 = vmatpush1.msra.mxu0 %v3250
  %3279 = vmatprep.subr.mxu0 0.0
  %3280 = vmatpush1.msra.mxu0 %v3251
  %3281 = vmatprep.subr.mxu0 0.0
  %3282 = vmatpush1.msra.mxu0 %v3252
  %3283 = vmatprep.subr.mxu0 0.0
  %3284 = vmatpush1.msra.mxu0 %v3253
  %3285 = vmatprep.subr.mxu0 0.0
  %3286 = vmatpush1.msra.mxu0 %v3254
  %3287 = vmatprep.subr.mxu0 0.0
  %3288 = vmatpush1.msra.mxu0 %v3255
  %3289 = vmatprep.subr.mxu0 0.0
  %3290 = vmatpush1.msra.mxu0 %v3256
  %3291 = vmatprep.subr.mxu0 0.0
  %3292 = vmatpush1.msra.mxu0 %v3257
  %3293 = vmatprep.subr.mxu0 0.0
  %3294 = vmatpush1.msra.mxu0 %v3258
  %3295 = vmatprep.subr.mxu0 0.0
  %3296 = vmatpush1.msra.mxu0 0.0
  %3297 = vmatprep.subr.mxu0 0.0
  %3298 = vmatpush1.msra.mxu0 0.0
  %3299 = vmatprep.subr.mxu0 0.0
  %3300 = vmatpush1.msra.mxu0 0.0
  %3301 = vmatprep.subr.mxu0 0.0
  %3302 = vmatpush1.msra.mxu0 0.0
  %3303 = vmatprep.subr.mxu0 0.0
  %3304 = vmatpush1.msra.mxu0 0.0
  %3305 = vmatprep.subr.mxu0 0.0
  %3306 = vmatpush1.msra.mxu0 0.0
  %3307 = vmatprep.subr.mxu0 0.0
  %3308 = vmatpush1.msra.mxu0 0.0
  %3309 = vmatprep.subr.mxu0 0.0
  %3310 = vmatpush1.msra.mxu0 0.0
  %3311 = vmatprep.subr.mxu0 0.0
  %3312 = vmatpush1.msra.mxu0 0.0
  %3313 = vmatprep.subr.mxu0 0.0
  %3314 = vmatpush1.msra.mxu0 0.0
  %3315 = vmatprep.subr.mxu0 0.0
  %3316 = vmatpush1.msra.mxu0 0.0
  %3317 = vmatprep.subr.mxu0 0.0
  %3318 = vmatpush1.msra.mxu0 0.0
  %3319 = vmatprep.subr.mxu0 0.0
  %3320 = vmatpush1.msra.mxu0 0.0
  %3321 = vmatprep.subr.mxu0 0.0
  %3322 = vmatpush1.msra.mxu0 0.0
  %3323 = vmatprep.subr.mxu0 0.0
  %3324 = vmatpush1.msra.mxu0 0.0
  %3325 = vmatprep.subr.mxu0 0.0
  %3326 = vmatpush1.msra.mxu0 0.0
  %3327 = vmatprep.mubr.f32.mxu0 0.0
  %3328 = vmatmul.mubr.f32.gmra.mrb[0].mxu0 %v3235
  %v3329 = vpop.f32.mrb[0].mxu0
  %v3330 = vadd.f32 %v3262, %v3329
  %v3331 = vpop.f32.mrb[0].mxu0
  %3332 = vmatprep.mubr.f32.mxu0 0.0
  %3333 = vmatmul.mubr.f32.gmra.mrb[0].mxu0 %v3236
  %v3334 = vpop.f32.mrb[0].mxu0
  %v3335 = vadd.f32 %v3262, %v3334
  %v3336 = vpop.f32.mrb[0].mxu0
  %3337 = vmatprep.mubr.f32.mxu0 0.0
  %3338 = vmatmul.mubr.f32.gmra.mrb[0].mxu0 %v3237
  %v3339 = vpop.f32.mrb[0].mxu0
  %v3340 = vadd.f32 %v3262, %v3339
  %v3341 = vpop.f32.mrb[0].mxu0
  %3342 = vmatprep.mubr.f32.mxu0 0.0
  %3343 = vmatmul.mubr.f32.gmra.mrb[0].mxu0 %v3238
  %v3344 = vpop.f32.mrb[0].mxu0
  %v3345 = vadd.f32 %v3262, %v3344
  %v3346 = vpop.f32.mrb[0].mxu0
  %3347 = vmatprep.mubr.f32.mxu0 0.0
  %3348 = vmatmul.mubr.f32.gmra.mrb[0].mxu0 %v3239
  %v3349 = vpop.f32.mrb[0].mxu0
  %v3350 = vadd.f32 %v3262, %v3349
  %v3351 = vpop.f32.mrb[0].mxu0
  %3352 = vmatprep.mubr.f32.mxu0 0.0
  %3353 = vmatmul.mubr.f32.gmra.mrb[0].mxu0 %v3240
  %v3354 = vpop.f32.mrb[0].mxu0
  %v3355 = vadd.f32 %v3262, %v3354
  %v3356 = vpop.f32.mrb[0].mxu0
  %3357 = vmatprep.mubr.f32.mxu0 0.0
  %3358 = vmatmul.mubr.f32.gmra.mrb[0].mxu0 %v3241
  %v3359 = vpop.f32.mrb[0].mxu0
  %v3360 = vadd.f32 %v3262, %v3359
  %v3361 = vpop.f32.mrb[0].mxu0
  %3362 = vmatprep.mubr.f32.mxu0 0.0
  %3363 = vmatmul.mubr.f32.gmra.mrb[0].mxu0 %v3242
  %v3364 = vpop.f32.mrb[0].mxu0
  %v3365 = vadd.f32 %v3262, %v3364
  %v3366 = vpop.f32.mrb[0].mxu0
  %3367 = vdwg.mxu0
  %v3368 = vadd.f32 %v2959, %v3330
  %v3369 = vadd.f32 %v2960, %v3335
  %v3370 = vadd.f32 %v2961, %v3340
  %v3371 = vadd.f32 %v2962, %v3345
  %v3372 = vadd.f32 %v2963, %v3350
  %v3373 = vadd.f32 %v2964, %v3355
  %v3374 = vadd.f32 %v2965, %v3360
  %v3375 = vadd.f32 %v2966, %v3365
  %3376 = vst.msk [vmem:[%s9] sm:$0xff] %vm42, %v3368
  %3377 = vst.msk [vmem:[%s9 + $0x8] sm:$0xff] %vm42, %v3369
  %3378 = vst.msk [vmem:[%s9 + $0x10] sm:$0xff] %vm42, %v3370
  %3379 = vst.msk [vmem:[%s9 + $0x18] sm:$0xff] %vm42, %v3371
  %3380 = vst.msk [vmem:[%s9 + $0x20] sm:$0xff] %vm42, %v3372
  %3381 = vst.msk [vmem:[%s9 + $0x28] sm:$0xff] %vm42, %v3373
  %3382 = vst.msk [vmem:[%s9 + $0x30] sm:$0xff] %vm42, %v3374
  %3383 = vst.msk [vmem:[%s9 + $0x38] sm:$0xff] %vm42, %v3375
  // Predicated region
  $region38: #{block_forward.1} parent=0 // pred_check
    _
  $region39: #{block_forward.1} parent=0 // pred_check_branch
    %3385 = sbr.rel (0) target = $region41
  $region40: #{block_forward.1} parent=0 // pred_region
    _
  $region41: #{block_forward.1} parent=0 // pred_fallthru
    _
  // Predicated region
  $region42: #{block_forward.1} parent=0 // pred_check
    _
  $region43: #{block_forward.1} parent=0 // pred_check_branch
    %3387 = sbr.rel (0) target = $region45
  $region44: #{block_forward.1} parent=0 // pred_region
    _
  $region45: #{block_forward.1} parent=0 // pred_fallthru
    _

</llo_original>
